<compile_context>
chip_gen: v5e
topology: v5e:2x2
jax: 0.10.0
libtpu: 0.0.40
codegen_flags: <defaults>
</compile_context>

<pallas_src>
import numpy as np
import jax
import jax.numpy as jnp
from jax import lax
from jax.experimental import pallas as pl
from jax.experimental.pallas import tpu as pltpu

BN_EPS = 1e-5
KSZ = 4  # every conv in the module uses kernel_size=4


def _out_size(n, k, s, p):
    return (n + 2 * p - k) // s + 1


def _gather_mats(h_in, w_in, k, s, p):
    """Constant 0/1 'im2col' gather matrices, one per conv tap.

    g[t, m_in, m_out] == 1 iff input spatial position m_in (row-major) is the
    tap-t=(kh,kw) source of output position m_out.  Columns whose tap falls in
    the zero padding stay all-zero, so spatial padding is handled for free.
    """
    h_out = _out_size(h_in, k, s, p)
    w_out = _out_size(w_in, k, s, p)
    g = np.zeros((k * k, h_in * w_in, h_out * w_out), np.float32)
    for kh in range(k):
        for kw in range(k):
            t = kh * k + kw
            for ho in range(h_out):
                hi = ho * s + kh - p
                if not (0 <= hi < h_in):
                    continue
                for wo in range(w_out):
                    wi = wo * s + kw - p
                    if not (0 <= wi < w_in):
                        continue
                    g[t, hi * w_in + wi, ho * w_out + wo] = 1.0
    return g, h_out, w_out


def _make_encoder_kernel(num_tail_layers):
    """Whole-encoder kernel.  Activations are carried transposed as
    (channels, spatial) matrices and never leave VMEM between layers."""

    def kernel(*refs):
        p0_ref, w0_ref, off0_ref = refs[0], refs[1], refs[2]
        out_ref = refs[-1]
        tail = refs[3:-1]

        # ---- layer 0: pre-im2col'ed input patches -> one dense matmul -------
        a = jnp.dot(w0_ref[...], p0_ref[0], preferred_element_type=jnp.float32)
        a = jnp.maximum(a + off0_ref[...], 0.0)

        # ---- layers 1..L-1: per-tap gather matmul + weight matmul -----------
        #   out = sum_t  W_t (Cout,Cin) @ ( A (Cin,Min) @ G_t (Min,Mout) )
        for li in range(num_tail_layers):
            g_ref = tail[3 * li]
            w_ref = tail[3 * li + 1]
            off_ref = tail[3 * li + 2]
            acc = None
            for t in range(w_ref.shape[0]):
                p_t = jnp.dot(a, g_ref[t], preferred_element_type=jnp.float32)
                c_t = jnp.dot(w_ref[t], p_t, preferred_element_type=jnp.float32)
                acc = c_t if acc is None else acc + c_t
            a = acc + off_ref[...]
            if li < num_tail_layers - 1:        # no ReLU after the final conv
                a = jnp.maximum(a, 0.0)

        out_ref[0] = a.astype(out_ref.dtype)

    return kernel


def encoder_forward_pallas(x_nchw, params):
    convs, bns, cfg = params["convs"], params["bns"], params["cfg"]
    n_layers = len(convs)
    N, C_in, H, W = x_nchw.shape

    # ---- trace time: fold each following BatchNorm (eval mode) + conv bias into
    # the conv weights / a per-channel offset (kernel epilogue = +offset, ReLU).
    folded_w, folded_off = [], []
    for i, (w, b) in enumerate(convs):
        if i < n_layers - 1:
            gamma, beta, mean, var = bns[i]
            s = gamma * lax.rsqrt(var + BN_EPS)
            folded_w.append(w * s[:, None, None, None])
            folded_off.append(b * s + beta - mean * s)
        else:
            folded_w.append(w)
            folded_off.append(b)

    # ---- layer 0 patches, built once in XLA on the tiny network input --------
    s0, p0_pad = cfg[0]
    c0 = convs[0][0].shape[0]
    ho0, wo0 = _out_size(H, KSZ, s0, p0_pad), _out_size(W, KSZ, s0, p0_pad)
    xh = jnp.transpose(x_nchw, (0, 2, 3, 1)).astype(jnp.float32)        # NHWC
    xp = jnp.pad(xh, ((0, 0), (p0_pad, p0_pad), (p0_pad, p0_pad), (0, 0)))
    taps = []
    for kh in range(KSZ):
        for kw in range(KSZ):
            taps.append(xp[:, kh:kh + s0 * ho0:s0, kw:kw + s0 * wo0:s0, :])
    p0 = jnp.stack(taps, axis=1)                    # (N, 16, Ho0, Wo0, Cin)
    p0 = jnp.transpose(p0, (0, 1, 4, 2, 3))         # (N, 16, Cin, Ho0, Wo0)
    k0 = KSZ * KSZ * C_in
    m0 = ho0 * wo0
    p0 = p0.reshape(N, k0, m0)                      # (N, K0, M0)

    w0 = jnp.transpose(folded_w[0], (0, 2, 3, 1)).reshape(c0, k0)       # (C0, K0)
    off0 = folded_off[0].reshape(c0, 1)

    inputs = [p0, w0.astype(jnp.float32), off0.astype(jnp.float32)]
    in_specs = [
        pl.BlockSpec((1, k0, m0), lambda n: (n, 0, 0)),
        pl.BlockSpec((c0, k0), lambda n: (0, 0)),
        pl.BlockSpec((c0, 1), lambda n: (0, 0)),
    ]

    # ---- layers 1..L-1: constant gather matrices + per-tap folded weights ----
    h_cur, w_cur, c_prev = ho0, wo0, c0
    for i in range(1, n_layers):
        stride, pad = cfg[i]
        w_i = folded_w[i]                                    # (Cout, Cin, 4, 4)
        c_out = w_i.shape[0]
        g_np, h_out, w_out = _gather_mats(h_cur, w_cur, KSZ, stride, pad)
        g = jnp.asarray(g_np)                                # (16, Min, Mout)
        w_taps = jnp.transpose(w_i, (2, 3, 0, 1)).reshape(KSZ * KSZ, c_out, c_prev)
        off = folded_off[i].reshape(c_out, 1)
        inputs += [g, w_taps.astype(jnp.float32), off.astype(jnp.float32)]
        in_specs += [
            pl.BlockSpec(g.shape, lambda n: (0, 0, 0)),
            pl.BlockSpec(w_taps.shape, lambda n: (0, 0, 0)),
            pl.BlockSpec(off.shape, lambda n: (0, 0)),
        ]
        h_cur, w_cur, c_prev = h_out, w_out, c_out

    m_last = h_cur * w_cur
    out = pl.pallas_call(
        _make_encoder_kernel(n_layers - 1),
        out_shape=jax.ShapeDtypeStruct((N, c_prev, m_last), jnp.float32),
        grid=(N,),
        in_specs=in_specs,
        out_specs=pl.BlockSpec((1, c_prev, m_last), lambda n: (n, 0, 0)),
        compiler_params=pltpu.CompilerParams(dimension_semantics=("parallel",)),
    )(*inputs)
    return out.reshape(N, c_prev, h_cur, w_cur)               # NCHW


# ---------------------------------------------------------------------------
# Deterministic parameter initialization (same shapes as the nn.Module).
# ---------------------------------------------------------------------------
def init_encoder_params(key, in_channels, out_channels, num_feat, num_layers=4):
    def conv_init(k, cout, cin, ksz):
        kw, kb = jax.random.split(k)
        fan_in = cin * ksz * ksz
        w = jax.random.normal(kw, (cout, cin, ksz, ksz), jnp.float32) / jnp.sqrt(fan_in)
        b = 0.05 * jax.random.normal(kb, (cout,), jnp.float32)
        return (w, b)

    def bn_init(k, c):
        k1, k2, k3, k4 = jax.random.split(k, 4)
        gamma = 1.0 + 0.1 * jax.random.normal(k1, (c,), jnp.float32)
        beta = 0.1 * jax.random.normal(k2, (c,), jnp.float32)
        mean = 0.1 * jax.random.normal(k3, (c,), jnp.float32)
        var = jax.random.uniform(k4, (c,), jnp.float32, minval=0.5, maxval=1.5)
        return (gamma, beta, mean, var)

    convs, bns, cfg = [], [], []
    feat = num_feat
    key, sub = jax.random.split(key)
    convs.append(conv_init(sub, feat, in_channels, 4)); cfg.append((2, 1))
    for _ in range(num_layers - 2):
        key, kb, kc = jax.random.split(key, 3)
        bns.append(bn_init(kb, feat))
        convs.append(conv_init(kc, feat * 2, feat, 4)); cfg.append((2, 1))
        feat *= 2
    key, kb, kc = jax.random.split(key, 3)
    bns.append(bn_init(kb, feat))
    convs.append(conv_init(kc, out_channels, feat, 4)); cfg.append((1, 0))
    return {"convs": convs, "bns": bns, "cfg": tuple(cfg)}


# Pure-JAX reference mirroring the PyTorch forward (NCHW, f32, eval-mode BN).
def encoder_forward_ref(x_nchw, params):
    convs, bns, cfg = params["convs"], params["bns"], params["cfg"]
    x = x_nchw.astype(jnp.float32)
    for i, ((w, b), (stride, pad)) in enumerate(zip(convs, cfg)):
        if i > 0:
            gamma, beta, mean, var = bns[i - 1]
            x = (x - mean[None, :, None, None]) * (
                gamma[None, :, None, None]
                / jnp.sqrt(var[None, :, None, None] + BN_EPS)) + beta[None, :, None, None]
            x = jnp.maximum(x, 0.0)
        x = lax.conv_general_dilated(
            x, w, (stride, stride), [(pad, pad), (pad, pad)],
            dimension_numbers=("NCHW", "OIHW", "NCHW"),
            precision=lax.Precision.HIGHEST)
        x = x + b[None, :, None, None]
    return x


if __name__ == "__main__":
    key = jax.random.PRNGKey(0)
    k_params, k_x = jax.random.split(key)

    in_channels, out_channels, num_feat, num_layers = 4, 16, 8, 4
    params = init_encoder_params(k_params, in_channels, out_channels, num_feat,
                                 num_layers)

    # Input resolution = 2^(num_layers+1) = 32, as documented by the module.
    x = jax.random.normal(k_x, (2, in_channels, 32, 32), jnp.float32)

    fwd = jax.jit(lambda xx: encoder_forward_pallas(xx, params))
    out = jax.block_until_ready(fwd(x))
    ref = jax.block_until_ready(encoder_forward_ref(x, params))

    assert out.shape == (2, out_channels, 1, 1), out.shape
    err = float(jnp.max(jnp.abs(out - ref)))
    scale = max(1.0, float(jnp.max(jnp.abs(ref))))
    if err > 3e-2 * scale:
        raise AssertionError(f"Pallas output mismatch vs reference: max abs err {err}")
    print("KERNEL_OK")
</pallas_src>

<mosaic_0001>
module attributes {stable_mosaic.version = 11 : i64} {
  func.func @kernel(%arg0: i32, %arg1: memref<1x64x256xf32, #tpu.memory_space<vmem>>, %arg2: memref<8x64xf32, #tpu.memory_space<vmem>>, %arg3: memref<8x1xf32, #tpu.memory_space<vmem>>, %arg4: memref<16x256x64xf32, #tpu.memory_space<vmem>>, %arg5: memref<16x16x8xf32, #tpu.memory_space<vmem>>, %arg6: memref<16x1xf32, #tpu.memory_space<vmem>>, %arg7: memref<16x64x16xf32, #tpu.memory_space<vmem>>, %arg8: memref<16x32x16xf32, #tpu.memory_space<vmem>>, %arg9: memref<32x1xf32, #tpu.memory_space<vmem>>, %arg10: memref<16x16x1xf32, #tpu.memory_space<vmem>>, %arg11: memref<16x16x32xf32, #tpu.memory_space<vmem>>, %arg12: memref<16x1xf32, #tpu.memory_space<vmem>>, %arg13: memref<1x16x1xf32, #tpu.memory_space<vmem>>) attributes {dimension_semantics = [#tpu.dimension_semantics<parallel>], iteration_bounds = array<i64: 2>, scalar_prefetch = 0 : i64, scratch_operands = 0 : i64, tpu.core_type = #tpu.core_type<tc>, window_params = [{transform_indices = @transform_0, window_bounds = array<i64: 1, 64, 256>}, {pipeline_mode = #tpu.pipeline_mode<synchronous>, transform_indices = @transform_1, window_bounds = array<i64: 8, 64>}, {pipeline_mode = #tpu.pipeline_mode<synchronous>, transform_indices = @transform_2, window_bounds = array<i64: 8, 1>}, {pipeline_mode = #tpu.pipeline_mode<synchronous>, transform_indices = @transform_3, window_bounds = array<i64: 16, 256, 64>}, {pipeline_mode = #tpu.pipeline_mode<synchronous>, transform_indices = @transform_4, window_bounds = array<i64: 16, 16, 8>}, {pipeline_mode = #tpu.pipeline_mode<synchronous>, transform_indices = @transform_5, window_bounds = array<i64: 16, 1>}, {pipeline_mode = #tpu.pipeline_mode<synchronous>, transform_indices = @transform_6, window_bounds = array<i64: 16, 64, 16>}, {pipeline_mode = #tpu.pipeline_mode<synchronous>, transform_indices = @transform_7, window_bounds = array<i64: 16, 32, 16>}, {pipeline_mode = #tpu.pipeline_mode<synchronous>, transform_indices = @transform_8, window_bounds = array<i64: 32, 1>}, {pipeline_mode = #tpu.pipeline_mode<synchronous>, transform_indices = @transform_9, window_bounds = array<i64: 16, 16, 1>}, {pipeline_mode = #tpu.pipeline_mode<synchronous>, transform_indices = @transform_10, window_bounds = array<i64: 16, 16, 32>}, {pipeline_mode = #tpu.pipeline_mode<synchronous>, transform_indices = @transform_11, window_bounds = array<i64: 16, 1>}, {transform_indices = @transform_12, window_bounds = array<i64: 1, 16, 1>}]} {
    %c0 = arith.constant 0 : index
    %c0_0 = arith.constant 0 : index
    %0 = vector.load %arg2[%c0, %c0_0] : memref<8x64xf32, #tpu.memory_space<vmem>>, vector<8x64xf32>
    %c0_1 = arith.constant 0 : index
    %c0_2 = arith.constant 0 : index
    %c0_3 = arith.constant 0 : index
    %1 = vector.load %arg1[%c0_1, %c0_2, %c0_3] : memref<1x64x256xf32, #tpu.memory_space<vmem>>, vector<1x64x256xf32>
    %2 = vector.shape_cast %1 : vector<1x64x256xf32> to vector<64x256xf32>
    %cst = arith.constant dense<0.000000e+00> : vector<8x256xf32>
    %3 = tpu.matmul %0, %2, %cst {dimension_numbers = #tpu.dot_dimension_numbers<[1], [0], [0], [1], [0, 0, 1, 1], [], []>} : vector<8x64xf32>, vector<64x256xf32>, vector<8x256xf32> -> vector<8x256xf32>
    %c0_4 = arith.constant 0 : index
    %c0_5 = arith.constant 0 : index
    %4 = vector.load %arg3[%c0_4, %c0_5] : memref<8x1xf32, #tpu.memory_space<vmem>>, vector<8x1xf32>
    %5 = vector.broadcast %4 : vector<8x1xf32> to vector<8x256xf32>
    %6 = arith.addf %3, %5 : vector<8x256xf32>
    %cst_6 = arith.constant 0.000000e+00 : f32
    %7 = vector.broadcast %cst_6 : f32 to vector<8x256xf32>
    %8 = arith.maximumf %6, %7 : vector<8x256xf32>
    %c0_7 = arith.constant 0 : index
    %c0_8 = arith.constant 0 : index
    %c0_9 = arith.constant 0 : index
    %9 = vector.load %arg4[%c0_7, %c0_8, %c0_9] : memref<16x256x64xf32, #tpu.memory_space<vmem>>, vector<1x256x64xf32>
    %10 = vector.shape_cast %9 : vector<1x256x64xf32> to vector<256x64xf32>
    %cst_10 = arith.constant dense<0.000000e+00> : vector<8x64xf32>
    %11 = tpu.matmul %8, %10, %cst_10 {dimension_numbers = #tpu.dot_dimension_numbers<[1], [0], [0], [1], [0, 0, 1, 1], [], []>} : vector<8x256xf32>, vector<256x64xf32>, vector<8x64xf32> -> vector<8x64xf32>
    %c0_11 = arith.constant 0 : index
    %c0_12 = arith.constant 0 : index
    %c0_13 = arith.constant 0 : index
    %12 = vector.load %arg5[%c0_11, %c0_12, %c0_13] : memref<16x16x8xf32, #tpu.memory_space<vmem>>, vector<1x16x8xf32>
    %13 = vector.shape_cast %12 : vector<1x16x8xf32> to vector<16x8xf32>
    %cst_14 = arith.constant dense<0.000000e+00> : vector<16x64xf32>
    %14 = tpu.matmul %13, %11, %cst_14 {dimension_numbers = #tpu.dot_dimension_numbers<[1], [0], [0], [1], [0, 0, 1, 1], [], []>} : vector<16x8xf32>, vector<8x64xf32>, vector<16x64xf32> -> vector<16x64xf32>
    %c1 = arith.constant 1 : index
    %c0_15 = arith.constant 0 : index
    %c0_16 = arith.constant 0 : index
    %15 = vector.load %arg4[%c1, %c0_15, %c0_16] : memref<16x256x64xf32, #tpu.memory_space<vmem>>, vector<1x256x64xf32>
    %16 = vector.shape_cast %15 : vector<1x256x64xf32> to vector<256x64xf32>
    %cst_17 = arith.constant dense<0.000000e+00> : vector<8x64xf32>
    %17 = tpu.matmul %8, %16, %cst_17 {dimension_numbers = #tpu.dot_dimension_numbers<[1], [0], [0], [1], [0, 0, 1, 1], [], []>} : vector<8x256xf32>, vector<256x64xf32>, vector<8x64xf32> -> vector<8x64xf32>
    %c1_18 = arith.constant 1 : index
    %c0_19 = arith.constant 0 : index
    %c0_20 = arith.constant 0 : index
    %18 = vector.load %arg5[%c1_18, %c0_19, %c0_20] : memref<16x16x8xf32, #tpu.memory_space<vmem>>, vector<1x16x8xf32>
    %19 = vector.shape_cast %18 : vector<1x16x8xf32> to vector<16x8xf32>
    %cst_21 = arith.constant dense<0.000000e+00> : vector<16x64xf32>
    %20 = tpu.matmul %19, %17, %cst_21 {dimension_numbers = #tpu.dot_dimension_numbers<[1], [0], [0], [1], [0, 0, 1, 1], [], []>} : vector<16x8xf32>, vector<8x64xf32>, vector<16x64xf32> -> vector<16x64xf32>
    %21 = arith.addf %14, %20 : vector<16x64xf32>
    %c2 = arith.constant 2 : index
    %c0_22 = arith.constant 0 : index
    %c0_23 = arith.constant 0 : index
    %22 = vector.load %arg4[%c2, %c0_22, %c0_23] : memref<16x256x64xf32, #tpu.memory_space<vmem>>, vector<1x256x64xf32>
    %23 = vector.shape_cast %22 : vector<1x256x64xf32> to vector<256x64xf32>
    %cst_24 = arith.constant dense<0.000000e+00> : vector<8x64xf32>
    %24 = tpu.matmul %8, %23, %cst_24 {dimension_numbers = #tpu.dot_dimension_numbers<[1], [0], [0], [1], [0, 0, 1, 1], [], []>} : vector<8x256xf32>, vector<256x64xf32>, vector<8x64xf32> -> vector<8x64xf32>
    %c2_25 = arith.constant 2 : index
    %c0_26 = arith.constant 0 : index
    %c0_27 = arith.constant 0 : index
    %25 = vector.load %arg5[%c2_25, %c0_26, %c0_27] : memref<16x16x8xf32, #tpu.memory_space<vmem>>, vector<1x16x8xf32>
    %26 = vector.shape_cast %25 : vector<1x16x8xf32> to vector<16x8xf32>
    %cst_28 = arith.constant dense<0.000000e+00> : vector<16x64xf32>
    %27 = tpu.matmul %26, %24, %cst_28 {dimension_numbers = #tpu.dot_dimension_numbers<[1], [0], [0], [1], [0, 0, 1, 1], [], []>} : vector<16x8xf32>, vector<8x64xf32>, vector<16x64xf32> -> vector<16x64xf32>
    %28 = arith.addf %21, %27 : vector<16x64xf32>
    %c3 = arith.constant 3 : index
    %c0_29 = arith.constant 0 : index
    %c0_30 = arith.constant 0 : index
    %29 = vector.load %arg4[%c3, %c0_29, %c0_30] : memref<16x256x64xf32, #tpu.memory_space<vmem>>, vector<1x256x64xf32>
    %30 = vector.shape_cast %29 : vector<1x256x64xf32> to vector<256x64xf32>
    %cst_31 = arith.constant dense<0.000000e+00> : vector<8x64xf32>
    %31 = tpu.matmul %8, %30, %cst_31 {dimension_numbers = #tpu.dot_dimension_numbers<[1], [0], [0], [1], [0, 0, 1, 1], [], []>} : vector<8x256xf32>, vector<256x64xf32>, vector<8x64xf32> -> vector<8x64xf32>
    %c3_32 = arith.constant 3 : index
    %c0_33 = arith.constant 0 : index
    %c0_34 = arith.constant 0 : index
    %32 = vector.load %arg5[%c3_32, %c0_33, %c0_34] : memref<16x16x8xf32, #tpu.memory_space<vmem>>, vector<1x16x8xf32>
    %33 = vector.shape_cast %32 : vector<1x16x8xf32> to vector<16x8xf32>
    %cst_35 = arith.constant dense<0.000000e+00> : vector<16x64xf32>
    %34 = tpu.matmul %33, %31, %cst_35 {dimension_numbers = #tpu.dot_dimension_numbers<[1], [0], [0], [1], [0, 0, 1, 1], [], []>} : vector<16x8xf32>, vector<8x64xf32>, vector<16x64xf32> -> vector<16x64xf32>
    %35 = arith.addf %28, %34 : vector<16x64xf32>
    %c4 = arith.constant 4 : index
    %c0_36 = arith.constant 0 : index
    %c0_37 = arith.constant 0 : index
    %36 = vector.load %arg4[%c4, %c0_36, %c0_37] : memref<16x256x64xf32, #tpu.memory_space<vmem>>, vector<1x256x64xf32>
    %37 = vector.shape_cast %36 : vector<1x256x64xf32> to vector<256x64xf32>
    %cst_38 = arith.constant dense<0.000000e+00> : vector<8x64xf32>
    %38 = tpu.matmul %8, %37, %cst_38 {dimension_numbers = #tpu.dot_dimension_numbers<[1], [0], [0], [1], [0, 0, 1, 1], [], []>} : vector<8x256xf32>, vector<256x64xf32>, vector<8x64xf32> -> vector<8x64xf32>
    %c4_39 = arith.constant 4 : index
    %c0_40 = arith.constant 0 : index
    %c0_41 = arith.constant 0 : index
    %39 = vector.load %arg5[%c4_39, %c0_40, %c0_41] : memref<16x16x8xf32, #tpu.memory_space<vmem>>, vector<1x16x8xf32>
    %40 = vector.shape_cast %39 : vector<1x16x8xf32> to vector<16x8xf32>
    %cst_42 = arith.constant dense<0.000000e+00> : vector<16x64xf32>
    %41 = tpu.matmul %40, %38, %cst_42 {dimension_numbers = #tpu.dot_dimension_numbers<[1], [0], [0], [1], [0, 0, 1, 1], [], []>} : vector<16x8xf32>, vector<8x64xf32>, vector<16x64xf32> -> vector<16x64xf32>
    %42 = arith.addf %35, %41 : vector<16x64xf32>
    %c5 = arith.constant 5 : index
    %c0_43 = arith.constant 0 : index
    %c0_44 = arith.constant 0 : index
    %43 = vector.load %arg4[%c5, %c0_43, %c0_44] : memref<16x256x64xf32, #tpu.memory_space<vmem>>, vector<1x256x64xf32>
    %44 = vector.shape_cast %43 : vector<1x256x64xf32> to vector<256x64xf32>
    %cst_45 = arith.constant dense<0.000000e+00> : vector<8x64xf32>
    %45 = tpu.matmul %8, %44, %cst_45 {dimension_numbers = #tpu.dot_dimension_numbers<[1], [0], [0], [1], [0, 0, 1, 1], [], []>} : vector<8x256xf32>, vector<256x64xf32>, vector<8x64xf32> -> vector<8x64xf32>
    %c5_46 = arith.constant 5 : index
    %c0_47 = arith.constant 0 : index
    %c0_48 = arith.constant 0 : index
    %46 = vector.load %arg5[%c5_46, %c0_47, %c0_48] : memref<16x16x8xf32, #tpu.memory_space<vmem>>, vector<1x16x8xf32>
    %47 = vector.shape_cast %46 : vector<1x16x8xf32> to vector<16x8xf32>
    %cst_49 = arith.constant dense<0.000000e+00> : vector<16x64xf32>
    %48 = tpu.matmul %47, %45, %cst_49 {dimension_numbers = #tpu.dot_dimension_numbers<[1], [0], [0], [1], [0, 0, 1, 1], [], []>} : vector<16x8xf32>, vector<8x64xf32>, vector<16x64xf32> -> vector<16x64xf32>
    %49 = arith.addf %42, %48 : vector<16x64xf32>
    %c6 = arith.constant 6 : index
    %c0_50 = arith.constant 0 : index
    %c0_51 = arith.constant 0 : index
    %50 = vector.load %arg4[%c6, %c0_50, %c0_51] : memref<16x256x64xf32, #tpu.memory_space<vmem>>, vector<1x256x64xf32>
    %51 = vector.shape_cast %50 : vector<1x256x64xf32> to vector<256x64xf32>
    %cst_52 = arith.constant dense<0.000000e+00> : vector<8x64xf32>
    %52 = tpu.matmul %8, %51, %cst_52 {dimension_numbers = #tpu.dot_dimension_numbers<[1], [0], [0], [1], [0, 0, 1, 1], [], []>} : vector<8x256xf32>, vector<256x64xf32>, vector<8x64xf32> -> vector<8x64xf32>
    %c6_53 = arith.constant 6 : index
    %c0_54 = arith.constant 0 : index
    %c0_55 = arith.constant 0 : index
    %53 = vector.load %arg5[%c6_53, %c0_54, %c0_55] : memref<16x16x8xf32, #tpu.memory_space<vmem>>, vector<1x16x8xf32>
    %54 = vector.shape_cast %53 : vector<1x16x8xf32> to vector<16x8xf32>
    %cst_56 = arith.constant dense<0.000000e+00> : vector<16x64xf32>
    %55 = tpu.matmul %54, %52, %cst_56 {dimension_numbers = #tpu.dot_dimension_numbers<[1], [0], [0], [1], [0, 0, 1, 1], [], []>} : vector<16x8xf32>, vector<8x64xf32>, vector<16x64xf32> -> vector<16x64xf32>
    %56 = arith.addf %49, %55 : vector<16x64xf32>
    %c7 = arith.constant 7 : index
    %c0_57 = arith.constant 0 : index
    %c0_58 = arith.constant 0 : index
    %57 = vector.load %arg4[%c7, %c0_57, %c0_58] : memref<16x256x64xf32, #tpu.memory_space<vmem>>, vector<1x256x64xf32>
    %58 = vector.shape_cast %57 : vector<1x256x64xf32> to vector<256x64xf32>
    %cst_59 = arith.constant dense<0.000000e+00> : vector<8x64xf32>
    %59 = tpu.matmul %8, %58, %cst_59 {dimension_numbers = #tpu.dot_dimension_numbers<[1], [0], [0], [1], [0, 0, 1, 1], [], []>} : vector<8x256xf32>, vector<256x64xf32>, vector<8x64xf32> -> vector<8x64xf32>
    %c7_60 = arith.constant 7 : index
    %c0_61 = arith.constant 0 : index
    %c0_62 = arith.constant 0 : index
    %60 = vector.load %arg5[%c7_60, %c0_61, %c0_62] : memref<16x16x8xf32, #tpu.memory_space<vmem>>, vector<1x16x8xf32>
    %61 = vector.shape_cast %60 : vector<1x16x8xf32> to vector<16x8xf32>
    %cst_63 = arith.constant dense<0.000000e+00> : vector<16x64xf32>
    %62 = tpu.matmul %61, %59, %cst_63 {dimension_numbers = #tpu.dot_dimension_numbers<[1], [0], [0], [1], [0, 0, 1, 1], [], []>} : vector<16x8xf32>, vector<8x64xf32>, vector<16x64xf32> -> vector<16x64xf32>
    %63 = arith.addf %56, %62 : vector<16x64xf32>
    %c8 = arith.constant 8 : index
    %c0_64 = arith.constant 0 : index
    %c0_65 = arith.constant 0 : index
    %64 = vector.load %arg4[%c8, %c0_64, %c0_65] : memref<16x256x64xf32, #tpu.memory_space<vmem>>, vector<1x256x64xf32>
    %65 = vector.shape_cast %64 : vector<1x256x64xf32> to vector<256x64xf32>
    %cst_66 = arith.constant dense<0.000000e+00> : vector<8x64xf32>
    %66 = tpu.matmul %8, %65, %cst_66 {dimension_numbers = #tpu.dot_dimension_numbers<[1], [0], [0], [1], [0, 0, 1, 1], [], []>} : vector<8x256xf32>, vector<256x64xf32>, vector<8x64xf32> -> vector<8x64xf32>
    %c8_67 = arith.constant 8 : index
    %c0_68 = arith.constant 0 : index
    %c0_69 = arith.constant 0 : index
    %67 = vector.load %arg5[%c8_67, %c0_68, %c0_69] : memref<16x16x8xf32, #tpu.memory_space<vmem>>, vector<1x16x8xf32>
    %68 = vector.shape_cast %67 : vector<1x16x8xf32> to vector<16x8xf32>
    %cst_70 = arith.constant dense<0.000000e+00> : vector<16x64xf32>
    %69 = tpu.matmul %68, %66, %cst_70 {dimension_numbers = #tpu.dot_dimension_numbers<[1], [0], [0], [1], [0, 0, 1, 1], [], []>} : vector<16x8xf32>, vector<8x64xf32>, vector<16x64xf32> -> vector<16x64xf32>
    %70 = arith.addf %63, %69 : vector<16x64xf32>
    %c9 = arith.constant 9 : index
    %c0_71 = arith.constant 0 : index
    %c0_72 = arith.constant 0 : index
    %71 = vector.load %arg4[%c9, %c0_71, %c0_72] : memref<16x256x64xf32, #tpu.memory_space<vmem>>, vector<1x256x64xf32>
    %72 = vector.shape_cast %71 : vector<1x256x64xf32> to vector<256x64xf32>
    %cst_73 = arith.constant dense<0.000000e+00> : vector<8x64xf32>
    %73 = tpu.matmul %8, %72, %cst_73 {dimension_numbers = #tpu.dot_dimension_numbers<[1], [0], [0], [1], [0, 0, 1, 1], [], []>} : vector<8x256xf32>, vector<256x64xf32>, vector<8x64xf32> -> vector<8x64xf32>
    %c9_74 = arith.constant 9 : index
    %c0_75 = arith.constant 0 : index
    %c0_76 = arith.constant 0 : index
    %74 = vector.load %arg5[%c9_74, %c0_75, %c0_76] : memref<16x16x8xf32, #tpu.memory_space<vmem>>, vector<1x16x8xf32>
    %75 = vector.shape_cast %74 : vector<1x16x8xf32> to vector<16x8xf32>
    %cst_77 = arith.constant dense<0.000000e+00> : vector<16x64xf32>
    %76 = tpu.matmul %75, %73, %cst_77 {dimension_numbers = #tpu.dot_dimension_numbers<[1], [0], [0], [1], [0, 0, 1, 1], [], []>} : vector<16x8xf32>, vector<8x64xf32>, vector<16x64xf32> -> vector<16x64xf32>
    %77 = arith.addf %70, %76 : vector<16x64xf32>
    %c10 = arith.constant 10 : index
    %c0_78 = arith.constant 0 : index
    %c0_79 = arith.constant 0 : index
    %78 = vector.load %arg4[%c10, %c0_78, %c0_79] : memref<16x256x64xf32, #tpu.memory_space<vmem>>, vector<1x256x64xf32>
    %79 = vector.shape_cast %78 : vector<1x256x64xf32> to vector<256x64xf32>
    %cst_80 = arith.constant dense<0.000000e+00> : vector<8x64xf32>
    %80 = tpu.matmul %8, %79, %cst_80 {dimension_numbers = #tpu.dot_dimension_numbers<[1], [0], [0], [1], [0, 0, 1, 1], [], []>} : vector<8x256xf32>, vector<256x64xf32>, vector<8x64xf32> -> vector<8x64xf32>
    %c10_81 = arith.constant 10 : index
    %c0_82 = arith.constant 0 : index
    %c0_83 = arith.constant 0 : index
    %81 = vector.load %arg5[%c10_81, %c0_82, %c0_83] : memref<16x16x8xf32, #tpu.memory_space<vmem>>, vector<1x16x8xf32>
    %82 = vector.shape_cast %81 : vector<1x16x8xf32> to vector<16x8xf32>
    %cst_84 = arith.constant dense<0.000000e+00> : vector<16x64xf32>
    %83 = tpu.matmul %82, %80, %cst_84 {dimension_numbers = #tpu.dot_dimension_numbers<[1], [0], [0], [1], [0, 0, 1, 1], [], []>} : vector<16x8xf32>, vector<8x64xf32>, vector<16x64xf32> -> vector<16x64xf32>
    %84 = arith.addf %77, %83 : vector<16x64xf32>
    %c11 = arith.constant 11 : index
    %c0_85 = arith.constant 0 : index
    %c0_86 = arith.constant 0 : index
    %85 = vector.load %arg4[%c11, %c0_85, %c0_86] : memref<16x256x64xf32, #tpu.memory_space<vmem>>, vector<1x256x64xf32>
    %86 = vector.shape_cast %85 : vector<1x256x64xf32> to vector<256x64xf32>
    %cst_87 = arith.constant dense<0.000000e+00> : vector<8x64xf32>
    %87 = tpu.matmul %8, %86, %cst_87 {dimension_numbers = #tpu.dot_dimension_numbers<[1], [0], [0], [1], [0, 0, 1, 1], [], []>} : vector<8x256xf32>, vector<256x64xf32>, vector<8x64xf32> -> vector<8x64xf32>
    %c11_88 = arith.constant 11 : index
    %c0_89 = arith.constant 0 : index
    %c0_90 = arith.constant 0 : index
    %88 = vector.load %arg5[%c11_88, %c0_89, %c0_90] : memref<16x16x8xf32, #tpu.memory_space<vmem>>, vector<1x16x8xf32>
    %89 = vector.shape_cast %88 : vector<1x16x8xf32> to vector<16x8xf32>
    %cst_91 = arith.constant dense<0.000000e+00> : vector<16x64xf32>
    %90 = tpu.matmul %89, %87, %cst_91 {dimension_numbers = #tpu.dot_dimension_numbers<[1], [0], [0], [1], [0, 0, 1, 1], [], []>} : vector<16x8xf32>, vector<8x64xf32>, vector<16x64xf32> -> vector<16x64xf32>
    %91 = arith.addf %84, %90 : vector<16x64xf32>
    %c12 = arith.constant 12 : index
    %c0_92 = arith.constant 0 : index
    %c0_93 = arith.constant 0 : index
    %92 = vector.load %arg4[%c12, %c0_92, %c0_93] : memref<16x256x64xf32, #tpu.memory_space<vmem>>, vector<1x256x64xf32>
    %93 = vector.shape_cast %92 : vector<1x256x64xf32> to vector<256x64xf32>
    %cst_94 = arith.constant dense<0.000000e+00> : vector<8x64xf32>
    %94 = tpu.matmul %8, %93, %cst_94 {dimension_numbers = #tpu.dot_dimension_numbers<[1], [0], [0], [1], [0, 0, 1, 1], [], []>} : vector<8x256xf32>, vector<256x64xf32>, vector<8x64xf32> -> vector<8x64xf32>
    %c12_95 = arith.constant 12 : index
    %c0_96 = arith.constant 0 : index
    %c0_97 = arith.constant 0 : index
    %95 = vector.load %arg5[%c12_95, %c0_96, %c0_97] : memref<16x16x8xf32, #tpu.memory_space<vmem>>, vector<1x16x8xf32>
    %96 = vector.shape_cast %95 : vector<1x16x8xf32> to vector<16x8xf32>
    %cst_98 = arith.constant dense<0.000000e+00> : vector<16x64xf32>
    %97 = tpu.matmul %96, %94, %cst_98 {dimension_numbers = #tpu.dot_dimension_numbers<[1], [0], [0], [1], [0, 0, 1, 1], [], []>} : vector<16x8xf32>, vector<8x64xf32>, vector<16x64xf32> -> vector<16x64xf32>
    %98 = arith.addf %91, %97 : vector<16x64xf32>
    %c13 = arith.constant 13 : index
    %c0_99 = arith.constant 0 : index
    %c0_100 = arith.constant 0 : index
    %99 = vector.load %arg4[%c13, %c0_99, %c0_100] : memref<16x256x64xf32, #tpu.memory_space<vmem>>, vector<1x256x64xf32>
    %100 = vector.shape_cast %99 : vector<1x256x64xf32> to vector<256x64xf32>
    %cst_101 = arith.constant dense<0.000000e+00> : vector<8x64xf32>
    %101 = tpu.matmul %8, %100, %cst_101 {dimension_numbers = #tpu.dot_dimension_numbers<[1], [0], [0], [1], [0, 0, 1, 1], [], []>} : vector<8x256xf32>, vector<256x64xf32>, vector<8x64xf32> -> vector<8x64xf32>
    %c13_102 = arith.constant 13 : index
    %c0_103 = arith.constant 0 : index
    %c0_104 = arith.constant 0 : index
    %102 = vector.load %arg5[%c13_102, %c0_103, %c0_104] : memref<16x16x8xf32, #tpu.memory_space<vmem>>, vector<1x16x8xf32>
    %103 = vector.shape_cast %102 : vector<1x16x8xf32> to vector<16x8xf32>
    %cst_105 = arith.constant dense<0.000000e+00> : vector<16x64xf32>
    %104 = tpu.matmul %103, %101, %cst_105 {dimension_numbers = #tpu.dot_dimension_numbers<[1], [0], [0], [1], [0, 0, 1, 1], [], []>} : vector<16x8xf32>, vector<8x64xf32>, vector<16x64xf32> -> vector<16x64xf32>
    %105 = arith.addf %98, %104 : vector<16x64xf32>
    %c14 = arith.constant 14 : index
    %c0_106 = arith.constant 0 : index
    %c0_107 = arith.constant 0 : index
    %106 = vector.load %arg4[%c14, %c0_106, %c0_107] : memref<16x256x64xf32, #tpu.memory_space<vmem>>, vector<1x256x64xf32>
    %107 = vector.shape_cast %106 : vector<1x256x64xf32> to vector<256x64xf32>
    %cst_108 = arith.constant dense<0.000000e+00> : vector<8x64xf32>
    %108 = tpu.matmul %8, %107, %cst_108 {dimension_numbers = #tpu.dot_dimension_numbers<[1], [0], [0], [1], [0, 0, 1, 1], [], []>} : vector<8x256xf32>, vector<256x64xf32>, vector<8x64xf32> -> vector<8x64xf32>
    %c14_109 = arith.constant 14 : index
    %c0_110 = arith.constant 0 : index
    %c0_111 = arith.constant 0 : index
    %109 = vector.load %arg5[%c14_109, %c0_110, %c0_111] : memref<16x16x8xf32, #tpu.memory_space<vmem>>, vector<1x16x8xf32>
    %110 = vector.shape_cast %109 : vector<1x16x8xf32> to vector<16x8xf32>
    %cst_112 = arith.constant dense<0.000000e+00> : vector<16x64xf32>
    %111 = tpu.matmul %110, %108, %cst_112 {dimension_numbers = #tpu.dot_dimension_numbers<[1], [0], [0], [1], [0, 0, 1, 1], [], []>} : vector<16x8xf32>, vector<8x64xf32>, vector<16x64xf32> -> vector<16x64xf32>
    %112 = arith.addf %105, %111 : vector<16x64xf32>
    %c15 = arith.constant 15 : index
    %c0_113 = arith.constant 0 : index
    %c0_114 = arith.constant 0 : index
    %113 = vector.load %arg4[%c15, %c0_113, %c0_114] : memref<16x256x64xf32, #tpu.memory_space<vmem>>, vector<1x256x64xf32>
    %114 = vector.shape_cast %113 : vector<1x256x64xf32> to vector<256x64xf32>
    %cst_115 = arith.constant dense<0.000000e+00> : vector<8x64xf32>
    %115 = tpu.matmul %8, %114, %cst_115 {dimension_numbers = #tpu.dot_dimension_numbers<[1], [0], [0], [1], [0, 0, 1, 1], [], []>} : vector<8x256xf32>, vector<256x64xf32>, vector<8x64xf32> -> vector<8x64xf32>
    %c15_116 = arith.constant 15 : index
    %c0_117 = arith.constant 0 : index
    %c0_118 = arith.constant 0 : index
    %116 = vector.load %arg5[%c15_116, %c0_117, %c0_118] : memref<16x16x8xf32, #tpu.memory_space<vmem>>, vector<1x16x8xf32>
    %117 = vector.shape_cast %116 : vector<1x16x8xf32> to vector<16x8xf32>
    %cst_119 = arith.constant dense<0.000000e+00> : vector<16x64xf32>
    %118 = tpu.matmul %117, %115, %cst_119 {dimension_numbers = #tpu.dot_dimension_numbers<[1], [0], [0], [1], [0, 0, 1, 1], [], []>} : vector<16x8xf32>, vector<8x64xf32>, vector<16x64xf32> -> vector<16x64xf32>
    %119 = arith.addf %112, %118 : vector<16x64xf32>
    %c0_120 = arith.constant 0 : index
    %c0_121 = arith.constant 0 : index
    %120 = vector.load %arg6[%c0_120, %c0_121] : memref<16x1xf32, #tpu.memory_space<vmem>>, vector<16x1xf32>
    %121 = vector.broadcast %120 : vector<16x1xf32> to vector<16x64xf32>
    %122 = arith.addf %119, %121 : vector<16x64xf32>
    %cst_122 = arith.constant 0.000000e+00 : f32
    %123 = vector.broadcast %cst_122 : f32 to vector<16x64xf32>
    %124 = arith.maximumf %122, %123 : vector<16x64xf32>
    %c0_123 = arith.constant 0 : index
    %c0_124 = arith.constant 0 : index
    %c0_125 = arith.constant 0 : index
    %125 = vector.load %arg7[%c0_123, %c0_124, %c0_125] : memref<16x64x16xf32, #tpu.memory_space<vmem>>, vector<1x64x16xf32>
    %126 = vector.shape_cast %125 : vector<1x64x16xf32> to vector<64x16xf32>
    %cst_126 = arith.constant dense<0.000000e+00> : vector<16x16xf32>
    %127 = tpu.matmul %124, %126, %cst_126 {dimension_numbers = #tpu.dot_dimension_numbers<[1], [0], [0], [1], [0, 0, 1, 1], [], []>} : vector<16x64xf32>, vector<64x16xf32>, vector<16x16xf32> -> vector<16x16xf32>
    %c0_127 = arith.constant 0 : index
    %c0_128 = arith.constant 0 : index
    %c0_129 = arith.constant 0 : index
    %128 = vector.load %arg8[%c0_127, %c0_128, %c0_129] : memref<16x32x16xf32, #tpu.memory_space<vmem>>, vector<1x32x16xf32>
    %129 = vector.shape_cast %128 : vector<1x32x16xf32> to vector<32x16xf32>
    %cst_130 = arith.constant dense<0.000000e+00> : vector<32x16xf32>
    %130 = tpu.matmul %129, %127, %cst_130 {dimension_numbers = #tpu.dot_dimension_numbers<[1], [0], [0], [1], [0, 0, 1, 1], [], []>} : vector<32x16xf32>, vector<16x16xf32>, vector<32x16xf32> -> vector<32x16xf32>
    %c1_131 = arith.constant 1 : index
    %c0_132 = arith.constant 0 : index
    %c0_133 = arith.constant 0 : index
    %131 = vector.load %arg7[%c1_131, %c0_132, %c0_133] : memref<16x64x16xf32, #tpu.memory_space<vmem>>, vector<1x64x16xf32>
    %132 = vector.shape_cast %131 : vector<1x64x16xf32> to vector<64x16xf32>
    %cst_134 = arith.constant dense<0.000000e+00> : vector<16x16xf32>
    %133 = tpu.matmul %124, %132, %cst_134 {dimension_numbers = #tpu.dot_dimension_numbers<[1], [0], [0], [1], [0, 0, 1, 1], [], []>} : vector<16x64xf32>, vector<64x16xf32>, vector<16x16xf32> -> vector<16x16xf32>
    %c1_135 = arith.constant 1 : index
    %c0_136 = arith.constant 0 : index
    %c0_137 = arith.constant 0 : index
    %134 = vector.load %arg8[%c1_135, %c0_136, %c0_137] : memref<16x32x16xf32, #tpu.memory_space<vmem>>, vector<1x32x16xf32>
    %135 = vector.shape_cast %134 : vector<1x32x16xf32> to vector<32x16xf32>
    %cst_138 = arith.constant dense<0.000000e+00> : vector<32x16xf32>
    %136 = tpu.matmul %135, %133, %cst_138 {dimension_numbers = #tpu.dot_dimension_numbers<[1], [0], [0], [1], [0, 0, 1, 1], [], []>} : vector<32x16xf32>, vector<16x16xf32>, vector<32x16xf32> -> vector<32x16xf32>
    %137 = arith.addf %130, %136 : vector<32x16xf32>
    %c2_139 = arith.constant 2 : index
    %c0_140 = arith.constant 0 : index
    %c0_141 = arith.constant 0 : index
    %138 = vector.load %arg7[%c2_139, %c0_140, %c0_141] : memref<16x64x16xf32, #tpu.memory_space<vmem>>, vector<1x64x16xf32>
    %139 = vector.shape_cast %138 : vector<1x64x16xf32> to vector<64x16xf32>
    %cst_142 = arith.constant dense<0.000000e+00> : vector<16x16xf32>
    %140 = tpu.matmul %124, %139, %cst_142 {dimension_numbers = #tpu.dot_dimension_numbers<[1], [0], [0], [1], [0, 0, 1, 1], [], []>} : vector<16x64xf32>, vector<64x16xf32>, vector<16x16xf32> -> vector<16x16xf32>
    %c2_143 = arith.constant 2 : index
    %c0_144 = arith.constant 0 : index
    %c0_145 = arith.constant 0 : index
    %141 = vector.load %arg8[%c2_143, %c0_144, %c0_145] : memref<16x32x16xf32, #tpu.memory_space<vmem>>, vector<1x32x16xf32>
    %142 = vector.shape_cast %141 : vector<1x32x16xf32> to vector<32x16xf32>
    %cst_146 = arith.constant dense<0.000000e+00> : vector<32x16xf32>
    %143 = tpu.matmul %142, %140, %cst_146 {dimension_numbers = #tpu.dot_dimension_numbers<[1], [0], [0], [1], [0, 0, 1, 1], [], []>} : vector<32x16xf32>, vector<16x16xf32>, vector<32x16xf32> -> vector<32x16xf32>
    %144 = arith.addf %137, %143 : vector<32x16xf32>
    %c3_147 = arith.constant 3 : index
    %c0_148 = arith.constant 0 : index
    %c0_149 = arith.constant 0 : index
    %145 = vector.load %arg7[%c3_147, %c0_148, %c0_149] : memref<16x64x16xf32, #tpu.memory_space<vmem>>, vector<1x64x16xf32>
    %146 = vector.shape_cast %145 : vector<1x64x16xf32> to vector<64x16xf32>
    %cst_150 = arith.constant dense<0.000000e+00> : vector<16x16xf32>
    %147 = tpu.matmul %124, %146, %cst_150 {dimension_numbers = #tpu.dot_dimension_numbers<[1], [0], [0], [1], [0, 0, 1, 1], [], []>} : vector<16x64xf32>, vector<64x16xf32>, vector<16x16xf32> -> vector<16x16xf32>
    %c3_151 = arith.constant 3 : index
    %c0_152 = arith.constant 0 : index
    %c0_153 = arith.constant 0 : index
    %148 = vector.load %arg8[%c3_151, %c0_152, %c0_153] : memref<16x32x16xf32, #tpu.memory_space<vmem>>, vector<1x32x16xf32>
    %149 = vector.shape_cast %148 : vector<1x32x16xf32> to vector<32x16xf32>
    %cst_154 = arith.constant dense<0.000000e+00> : vector<32x16xf32>
    %150 = tpu.matmul %149, %147, %cst_154 {dimension_numbers = #tpu.dot_dimension_numbers<[1], [0], [0], [1], [0, 0, 1, 1], [], []>} : vector<32x16xf32>, vector<16x16xf32>, vector<32x16xf32> -> vector<32x16xf32>
    %151 = arith.addf %144, %150 : vector<32x16xf32>
    %c4_155 = arith.constant 4 : index
    %c0_156 = arith.constant 0 : index
    %c0_157 = arith.constant 0 : index
    %152 = vector.load %arg7[%c4_155, %c0_156, %c0_157] : memref<16x64x16xf32, #tpu.memory_space<vmem>>, vector<1x64x16xf32>
    %153 = vector.shape_cast %152 : vector<1x64x16xf32> to vector<64x16xf32>
    %cst_158 = arith.constant dense<0.000000e+00> : vector<16x16xf32>
    %154 = tpu.matmul %124, %153, %cst_158 {dimension_numbers = #tpu.dot_dimension_numbers<[1], [0], [0], [1], [0, 0, 1, 1], [], []>} : vector<16x64xf32>, vector<64x16xf32>, vector<16x16xf32> -> vector<16x16xf32>
    %c4_159 = arith.constant 4 : index
    %c0_160 = arith.constant 0 : index
    %c0_161 = arith.constant 0 : index
    %155 = vector.load %arg8[%c4_159, %c0_160, %c0_161] : memref<16x32x16xf32, #tpu.memory_space<vmem>>, vector<1x32x16xf32>
    %156 = vector.shape_cast %155 : vector<1x32x16xf32> to vector<32x16xf32>
    %cst_162 = arith.constant dense<0.000000e+00> : vector<32x16xf32>
    %157 = tpu.matmul %156, %154, %cst_162 {dimension_numbers = #tpu.dot_dimension_numbers<[1], [0], [0], [1], [0, 0, 1, 1], [], []>} : vector<32x16xf32>, vector<16x16xf32>, vector<32x16xf32> -> vector<32x16xf32>
    %158 = arith.addf %151, %157 : vector<32x16xf32>
    %c5_163 = arith.constant 5 : index
    %c0_164 = arith.constant 0 : index
    %c0_165 = arith.constant 0 : index
    %159 = vector.load %arg7[%c5_163, %c0_164, %c0_165] : memref<16x64x16xf32, #tpu.memory_space<vmem>>, vector<1x64x16xf32>
    %160 = vector.shape_cast %159 : vector<1x64x16xf32> to vector<64x16xf32>
    %cst_166 = arith.constant dense<0.000000e+00> : vector<16x16xf32>
    %161 = tpu.matmul %124, %160, %cst_166 {dimension_numbers = #tpu.dot_dimension_numbers<[1], [0], [0], [1], [0, 0, 1, 1], [], []>} : vector<16x64xf32>, vector<64x16xf32>, vector<16x16xf32> -> vector<16x16xf32>
    %c5_167 = arith.constant 5 : index
    %c0_168 = arith.constant 0 : index
    %c0_169 = arith.constant 0 : index
    %162 = vector.load %arg8[%c5_167, %c0_168, %c0_169] : memref<16x32x16xf32, #tpu.memory_space<vmem>>, vector<1x32x16xf32>
    %163 = vector.shape_cast %162 : vector<1x32x16xf32> to vector<32x16xf32>
    %cst_170 = arith.constant dense<0.000000e+00> : vector<32x16xf32>
    %164 = tpu.matmul %163, %161, %cst_170 {dimension_numbers = #tpu.dot_dimension_numbers<[1], [0], [0], [1], [0, 0, 1, 1], [], []>} : vector<32x16xf32>, vector<16x16xf32>, vector<32x16xf32> -> vector<32x16xf32>
    %165 = arith.addf %158, %164 : vector<32x16xf32>
    %c6_171 = arith.constant 6 : index
    %c0_172 = arith.constant 0 : index
    %c0_173 = arith.constant 0 : index
    %166 = vector.load %arg7[%c6_171, %c0_172, %c0_173] : memref<16x64x16xf32, #tpu.memory_space<vmem>>, vector<1x64x16xf32>
    %167 = vector.shape_cast %166 : vector<1x64x16xf32> to vector<64x16xf32>
    %cst_174 = arith.constant dense<0.000000e+00> : vector<16x16xf32>
    %168 = tpu.matmul %124, %167, %cst_174 {dimension_numbers = #tpu.dot_dimension_numbers<[1], [0], [0], [1], [0, 0, 1, 1], [], []>} : vector<16x64xf32>, vector<64x16xf32>, vector<16x16xf32> -> vector<16x16xf32>
    %c6_175 = arith.constant 6 : index
    %c0_176 = arith.constant 0 : index
    %c0_177 = arith.constant 0 : index
    %169 = vector.load %arg8[%c6_175, %c0_176, %c0_177] : memref<16x32x16xf32, #tpu.memory_space<vmem>>, vector<1x32x16xf32>
    %170 = vector.shape_cast %169 : vector<1x32x16xf32> to vector<32x16xf32>
    %cst_178 = arith.constant dense<0.000000e+00> : vector<32x16xf32>
    %171 = tpu.matmul %170, %168, %cst_178 {dimension_numbers = #tpu.dot_dimension_numbers<[1], [0], [0], [1], [0, 0, 1, 1], [], []>} : vector<32x16xf32>, vector<16x16xf32>, vector<32x16xf32> -> vector<32x16xf32>
    %172 = arith.addf %165, %171 : vector<32x16xf32>
    %c7_179 = arith.constant 7 : index
    %c0_180 = arith.constant 0 : index
    %c0_181 = arith.constant 0 : index
    %173 = vector.load %arg7[%c7_179, %c0_180, %c0_181] : memref<16x64x16xf32, #tpu.memory_space<vmem>>, vector<1x64x16xf32>
    %174 = vector.shape_cast %173 : vector<1x64x16xf32> to vector<64x16xf32>
    %cst_182 = arith.constant dense<0.000000e+00> : vector<16x16xf32>
    %175 = tpu.matmul %124, %174, %cst_182 {dimension_numbers = #tpu.dot_dimension_numbers<[1], [0], [0], [1], [0, 0, 1, 1], [], []>} : vector<16x64xf32>, vector<64x16xf32>, vector<16x16xf32> -> vector<16x16xf32>
    %c7_183 = arith.constant 7 : index
    %c0_184 = arith.constant 0 : index
    %c0_185 = arith.constant 0 : index
    %176 = vector.load %arg8[%c7_183, %c0_184, %c0_185] : memref<16x32x16xf32, #tpu.memory_space<vmem>>, vector<1x32x16xf32>
    %177 = vector.shape_cast %176 : vector<1x32x16xf32> to vector<32x16xf32>
    %cst_186 = arith.constant dense<0.000000e+00> : vector<32x16xf32>
    %178 = tpu.matmul %177, %175, %cst_186 {dimension_numbers = #tpu.dot_dimension_numbers<[1], [0], [0], [1], [0, 0, 1, 1], [], []>} : vector<32x16xf32>, vector<16x16xf32>, vector<32x16xf32> -> vector<32x16xf32>
    %179 = arith.addf %172, %178 : vector<32x16xf32>
    %c8_187 = arith.constant 8 : index
    %c0_188 = arith.constant 0 : index
    %c0_189 = arith.constant 0 : index
    %180 = vector.load %arg7[%c8_187, %c0_188, %c0_189] : memref<16x64x16xf32, #tpu.memory_space<vmem>>, vector<1x64x16xf32>
    %181 = vector.shape_cast %180 : vector<1x64x16xf32> to vector<64x16xf32>
    %cst_190 = arith.constant dense<0.000000e+00> : vector<16x16xf32>
    %182 = tpu.matmul %124, %181, %cst_190 {dimension_numbers = #tpu.dot_dimension_numbers<[1], [0], [0], [1], [0, 0, 1, 1], [], []>} : vector<16x64xf32>, vector<64x16xf32>, vector<16x16xf32> -> vector<16x16xf32>
    %c8_191 = arith.constant 8 : index
    %c0_192 = arith.constant 0 : index
    %c0_193 = arith.constant 0 : index
    %183 = vector.load %arg8[%c8_191, %c0_192, %c0_193] : memref<16x32x16xf32, #tpu.memory_space<vmem>>, vector<1x32x16xf32>
    %184 = vector.shape_cast %183 : vector<1x32x16xf32> to vector<32x16xf32>
    %cst_194 = arith.constant dense<0.000000e+00> : vector<32x16xf32>
    %185 = tpu.matmul %184, %182, %cst_194 {dimension_numbers = #tpu.dot_dimension_numbers<[1], [0], [0], [1], [0, 0, 1, 1], [], []>} : vector<32x16xf32>, vector<16x16xf32>, vector<32x16xf32> -> vector<32x16xf32>
    %186 = arith.addf %179, %185 : vector<32x16xf32>
    %c9_195 = arith.constant 9 : index
    %c0_196 = arith.constant 0 : index
    %c0_197 = arith.constant 0 : index
    %187 = vector.load %arg7[%c9_195, %c0_196, %c0_197] : memref<16x64x16xf32, #tpu.memory_space<vmem>>, vector<1x64x16xf32>
    %188 = vector.shape_cast %187 : vector<1x64x16xf32> to vector<64x16xf32>
    %cst_198 = arith.constant dense<0.000000e+00> : vector<16x16xf32>
    %189 = tpu.matmul %124, %188, %cst_198 {dimension_numbers = #tpu.dot_dimension_numbers<[1], [0], [0], [1], [0, 0, 1, 1], [], []>} : vector<16x64xf32>, vector<64x16xf32>, vector<16x16xf32> -> vector<16x16xf32>
    %c9_199 = arith.constant 9 : index
    %c0_200 = arith.constant 0 : index
    %c0_201 = arith.constant 0 : index
    %190 = vector.load %arg8[%c9_199, %c0_200, %c0_201] : memref<16x32x16xf32, #tpu.memory_space<vmem>>, vector<1x32x16xf32>
    %191 = vector.shape_cast %190 : vector<1x32x16xf32> to vector<32x16xf32>
    %cst_202 = arith.constant dense<0.000000e+00> : vector<32x16xf32>
    %192 = tpu.matmul %191, %189, %cst_202 {dimension_numbers = #tpu.dot_dimension_numbers<[1], [0], [0], [1], [0, 0, 1, 1], [], []>} : vector<32x16xf32>, vector<16x16xf32>, vector<32x16xf32> -> vector<32x16xf32>
    %193 = arith.addf %186, %192 : vector<32x16xf32>
    %c10_203 = arith.constant 10 : index
    %c0_204 = arith.constant 0 : index
    %c0_205 = arith.constant 0 : index
    %194 = vector.load %arg7[%c10_203, %c0_204, %c0_205] : memref<16x64x16xf32, #tpu.memory_space<vmem>>, vector<1x64x16xf32>
    %195 = vector.shape_cast %194 : vector<1x64x16xf32> to vector<64x16xf32>
    %cst_206 = arith.constant dense<0.000000e+00> : vector<16x16xf32>
    %196 = tpu.matmul %124, %195, %cst_206 {dimension_numbers = #tpu.dot_dimension_numbers<[1], [0], [0], [1], [0, 0, 1, 1], [], []>} : vector<16x64xf32>, vector<64x16xf32>, vector<16x16xf32> -> vector<16x16xf32>
    %c10_207 = arith.constant 10 : index
    %c0_208 = arith.constant 0 : index
    %c0_209 = arith.constant 0 : index
    %197 = vector.load %arg8[%c10_207, %c0_208, %c0_209] : memref<16x32x16xf32, #tpu.memory_space<vmem>>, vector<1x32x16xf32>
    %198 = vector.shape_cast %197 : vector<1x32x16xf32> to vector<32x16xf32>
    %cst_210 = arith.constant dense<0.000000e+00> : vector<32x16xf32>
    %199 = tpu.matmul %198, %196, %cst_210 {dimension_numbers = #tpu.dot_dimension_numbers<[1], [0], [0], [1], [0, 0, 1, 1], [], []>} : vector<32x16xf32>, vector<16x16xf32>, vector<32x16xf32> -> vector<32x16xf32>
    %200 = arith.addf %193, %199 : vector<32x16xf32>
    %c11_211 = arith.constant 11 : index
    %c0_212 = arith.constant 0 : index
    %c0_213 = arith.constant 0 : index
    %201 = vector.load %arg7[%c11_211, %c0_212, %c0_213] : memref<16x64x16xf32, #tpu.memory_space<vmem>>, vector<1x64x16xf32>
    %202 = vector.shape_cast %201 : vector<1x64x16xf32> to vector<64x16xf32>
    %cst_214 = arith.constant dense<0.000000e+00> : vector<16x16xf32>
    %203 = tpu.matmul %124, %202, %cst_214 {dimension_numbers = #tpu.dot_dimension_numbers<[1], [0], [0], [1], [0, 0, 1, 1], [], []>} : vector<16x64xf32>, vector<64x16xf32>, vector<16x16xf32> -> vector<16x16xf32>
    %c11_215 = arith.constant 11 : index
    %c0_216 = arith.constant 0 : index
    %c0_217 = arith.constant 0 : index
    %204 = vector.load %arg8[%c11_215, %c0_216, %c0_217] : memref<16x32x16xf32, #tpu.memory_space<vmem>>, vector<1x32x16xf32>
    %205 = vector.shape_cast %204 : vector<1x32x16xf32> to vector<32x16xf32>
    %cst_218 = arith.constant dense<0.000000e+00> : vector<32x16xf32>
    %206 = tpu.matmul %205, %203, %cst_218 {dimension_numbers = #tpu.dot_dimension_numbers<[1], [0], [0], [1], [0, 0, 1, 1], [], []>} : vector<32x16xf32>, vector<16x16xf32>, vector<32x16xf32> -> vector<32x16xf32>
    %207 = arith.addf %200, %206 : vector<32x16xf32>
    %c12_219 = arith.constant 12 : index
    %c0_220 = arith.constant 0 : index
    %c0_221 = arith.constant 0 : index
    %208 = vector.load %arg7[%c12_219, %c0_220, %c0_221] : memref<16x64x16xf32, #tpu.memory_space<vmem>>, vector<1x64x16xf32>
    %209 = vector.shape_cast %208 : vector<1x64x16xf32> to vector<64x16xf32>
    %cst_222 = arith.constant dense<0.000000e+00> : vector<16x16xf32>
    %210 = tpu.matmul %124, %209, %cst_222 {dimension_numbers = #tpu.dot_dimension_numbers<[1], [0], [0], [1], [0, 0, 1, 1], [], []>} : vector<16x64xf32>, vector<64x16xf32>, vector<16x16xf32> -> vector<16x16xf32>
    %c12_223 = arith.constant 12 : index
    %c0_224 = arith.constant 0 : index
    %c0_225 = arith.constant 0 : index
    %211 = vector.load %arg8[%c12_223, %c0_224, %c0_225] : memref<16x32x16xf32, #tpu.memory_space<vmem>>, vector<1x32x16xf32>
    %212 = vector.shape_cast %211 : vector<1x32x16xf32> to vector<32x16xf32>
    %cst_226 = arith.constant dense<0.000000e+00> : vector<32x16xf32>
    %213 = tpu.matmul %212, %210, %cst_226 {dimension_numbers = #tpu.dot_dimension_numbers<[1], [0], [0], [1], [0, 0, 1, 1], [], []>} : vector<32x16xf32>, vector<16x16xf32>, vector<32x16xf32> -> vector<32x16xf32>
    %214 = arith.addf %207, %213 : vector<32x16xf32>
    %c13_227 = arith.constant 13 : index
    %c0_228 = arith.constant 0 : index
    %c0_229 = arith.constant 0 : index
    %215 = vector.load %arg7[%c13_227, %c0_228, %c0_229] : memref<16x64x16xf32, #tpu.memory_space<vmem>>, vector<1x64x16xf32>
    %216 = vector.shape_cast %215 : vector<1x64x16xf32> to vector<64x16xf32>
    %cst_230 = arith.constant dense<0.000000e+00> : vector<16x16xf32>
    %217 = tpu.matmul %124, %216, %cst_230 {dimension_numbers = #tpu.dot_dimension_numbers<[1], [0], [0], [1], [0, 0, 1, 1], [], []>} : vector<16x64xf32>, vector<64x16xf32>, vector<16x16xf32> -> vector<16x16xf32>
    %c13_231 = arith.constant 13 : index
    %c0_232 = arith.constant 0 : index
    %c0_233 = arith.constant 0 : index
    %218 = vector.load %arg8[%c13_231, %c0_232, %c0_233] : memref<16x32x16xf32, #tpu.memory_space<vmem>>, vector<1x32x16xf32>
    %219 = vector.shape_cast %218 : vector<1x32x16xf32> to vector<32x16xf32>
    %cst_234 = arith.constant dense<0.000000e+00> : vector<32x16xf32>
    %220 = tpu.matmul %219, %217, %cst_234 {dimension_numbers = #tpu.dot_dimension_numbers<[1], [0], [0], [1], [0, 0, 1, 1], [], []>} : vector<32x16xf32>, vector<16x16xf32>, vector<32x16xf32> -> vector<32x16xf32>
    %221 = arith.addf %214, %220 : vector<32x16xf32>
    %c14_235 = arith.constant 14 : index
    %c0_236 = arith.constant 0 : index
    %c0_237 = arith.constant 0 : index
    %222 = vector.load %arg7[%c14_235, %c0_236, %c0_237] : memref<16x64x16xf32, #tpu.memory_space<vmem>>, vector<1x64x16xf32>
    %223 = vector.shape_cast %222 : vector<1x64x16xf32> to vector<64x16xf32>
    %cst_238 = arith.constant dense<0.000000e+00> : vector<16x16xf32>
    %224 = tpu.matmul %124, %223, %cst_238 {dimension_numbers = #tpu.dot_dimension_numbers<[1], [0], [0], [1], [0, 0, 1, 1], [], []>} : vector<16x64xf32>, vector<64x16xf32>, vector<16x16xf32> -> vector<16x16xf32>
    %c14_239 = arith.constant 14 : index
    %c0_240 = arith.constant 0 : index
    %c0_241 = arith.constant 0 : index
    %225 = vector.load %arg8[%c14_239, %c0_240, %c0_241] : memref<16x32x16xf32, #tpu.memory_space<vmem>>, vector<1x32x16xf32>
    %226 = vector.shape_cast %225 : vector<1x32x16xf32> to vector<32x16xf32>
    %cst_242 = arith.constant dense<0.000000e+00> : vector<32x16xf32>
    %227 = tpu.matmul %226, %224, %cst_242 {dimension_numbers = #tpu.dot_dimension_numbers<[1], [0], [0], [1], [0, 0, 1, 1], [], []>} : vector<32x16xf32>, vector<16x16xf32>, vector<32x16xf32> -> vector<32x16xf32>
    %228 = arith.addf %221, %227 : vector<32x16xf32>
    %c15_243 = arith.constant 15 : index
    %c0_244 = arith.constant 0 : index
    %c0_245 = arith.constant 0 : index
    %229 = vector.load %arg7[%c15_243, %c0_244, %c0_245] : memref<16x64x16xf32, #tpu.memory_space<vmem>>, vector<1x64x16xf32>
    %230 = vector.shape_cast %229 : vector<1x64x16xf32> to vector<64x16xf32>
    %cst_246 = arith.constant dense<0.000000e+00> : vector<16x16xf32>
    %231 = tpu.matmul %124, %230, %cst_246 {dimension_numbers = #tpu.dot_dimension_numbers<[1], [0], [0], [1], [0, 0, 1, 1], [], []>} : vector<16x64xf32>, vector<64x16xf32>, vector<16x16xf32> -> vector<16x16xf32>
    %c15_247 = arith.constant 15 : index
    %c0_248 = arith.constant 0 : index
    %c0_249 = arith.constant 0 : index
    %232 = vector.load %arg8[%c15_247, %c0_248, %c0_249] : memref<16x32x16xf32, #tpu.memory_space<vmem>>, vector<1x32x16xf32>
    %233 = vector.shape_cast %232 : vector<1x32x16xf32> to vector<32x16xf32>
    %cst_250 = arith.constant dense<0.000000e+00> : vector<32x16xf32>
    %234 = tpu.matmul %233, %231, %cst_250 {dimension_numbers = #tpu.dot_dimension_numbers<[1], [0], [0], [1], [0, 0, 1, 1], [], []>} : vector<32x16xf32>, vector<16x16xf32>, vector<32x16xf32> -> vector<32x16xf32>
    %235 = arith.addf %228, %234 : vector<32x16xf32>
    %c0_251 = arith.constant 0 : index
    %c0_252 = arith.constant 0 : index
    %236 = vector.load %arg9[%c0_251, %c0_252] : memref<32x1xf32, #tpu.memory_space<vmem>>, vector<32x1xf32>
    %237 = vector.broadcast %236 : vector<32x1xf32> to vector<32x16xf32>
    %238 = arith.addf %235, %237 : vector<32x16xf32>
    %cst_253 = arith.constant 0.000000e+00 : f32
    %239 = vector.broadcast %cst_253 : f32 to vector<32x16xf32>
    %240 = arith.maximumf %238, %239 : vector<32x16xf32>
    %c0_254 = arith.constant 0 : index
    %c0_255 = arith.constant 0 : index
    %c0_256 = arith.constant 0 : index
    %241 = vector.load %arg10[%c0_254, %c0_255, %c0_256] : memref<16x16x1xf32, #tpu.memory_space<vmem>>, vector<1x16x1xf32>
    %242 = vector.shape_cast %241 : vector<1x16x1xf32> to vector<16x1xf32>
    %cst_257 = arith.constant dense<0.000000e+00> : vector<32x1xf32>
    %243 = tpu.matmul %240, %242, %cst_257 {dimension_numbers = #tpu.dot_dimension_numbers<[1], [0], [0], [1], [0, 0, 1, 1], [], []>} : vector<32x16xf32>, vector<16x1xf32>, vector<32x1xf32> -> vector<32x1xf32>
    %c0_258 = arith.constant 0 : index
    %c0_259 = arith.constant 0 : index
    %c0_260 = arith.constant 0 : index
    %244 = vector.load %arg11[%c0_258, %c0_259, %c0_260] : memref<16x16x32xf32, #tpu.memory_space<vmem>>, vector<1x16x32xf32>
    %245 = vector.shape_cast %244 : vector<1x16x32xf32> to vector<16x32xf32>
    %cst_261 = arith.constant dense<0.000000e+00> : vector<16x1xf32>
    %246 = tpu.matmul %245, %243, %cst_261 {dimension_numbers = #tpu.dot_dimension_numbers<[1], [0], [0], [1], [0, 0, 1, 1], [], []>} : vector<16x32xf32>, vector<32x1xf32>, vector<16x1xf32> -> vector<16x1xf32>
    %c1_262 = arith.constant 1 : index
    %c0_263 = arith.constant 0 : index
    %c0_264 = arith.constant 0 : index
    %247 = vector.load %arg10[%c1_262, %c0_263, %c0_264] : memref<16x16x1xf32, #tpu.memory_space<vmem>>, vector<1x16x1xf32>
    %248 = vector.shape_cast %247 : vector<1x16x1xf32> to vector<16x1xf32>
    %cst_265 = arith.constant dense<0.000000e+00> : vector<32x1xf32>
    %249 = tpu.matmul %240, %248, %cst_265 {dimension_numbers = #tpu.dot_dimension_numbers<[1], [0], [0], [1], [0, 0, 1, 1], [], []>} : vector<32x16xf32>, vector<16x1xf32>, vector<32x1xf32> -> vector<32x1xf32>
    %c1_266 = arith.constant 1 : index
    %c0_267 = arith.constant 0 : index
    %c0_268 = arith.constant 0 : index
    %250 = vector.load %arg11[%c1_266, %c0_267, %c0_268] : memref<16x16x32xf32, #tpu.memory_space<vmem>>, vector<1x16x32xf32>
    %251 = vector.shape_cast %250 : vector<1x16x32xf32> to vector<16x32xf32>
    %cst_269 = arith.constant dense<0.000000e+00> : vector<16x1xf32>
    %252 = tpu.matmul %251, %249, %cst_269 {dimension_numbers = #tpu.dot_dimension_numbers<[1], [0], [0], [1], [0, 0, 1, 1], [], []>} : vector<16x32xf32>, vector<32x1xf32>, vector<16x1xf32> -> vector<16x1xf32>
    %253 = arith.addf %246, %252 : vector<16x1xf32>
    %c2_270 = arith.constant 2 : index
    %c0_271 = arith.constant 0 : index
    %c0_272 = arith.constant 0 : index
    %254 = vector.load %arg10[%c2_270, %c0_271, %c0_272] : memref<16x16x1xf32, #tpu.memory_space<vmem>>, vector<1x16x1xf32>
    %255 = vector.shape_cast %254 : vector<1x16x1xf32> to vector<16x1xf32>
    %cst_273 = arith.constant dense<0.000000e+00> : vector<32x1xf32>
    %256 = tpu.matmul %240, %255, %cst_273 {dimension_numbers = #tpu.dot_dimension_numbers<[1], [0], [0], [1], [0, 0, 1, 1], [], []>} : vector<32x16xf32>, vector<16x1xf32>, vector<32x1xf32> -> vector<32x1xf32>
    %c2_274 = arith.constant 2 : index
    %c0_275 = arith.constant 0 : index
    %c0_276 = arith.constant 0 : index
    %257 = vector.load %arg11[%c2_274, %c0_275, %c0_276] : memref<16x16x32xf32, #tpu.memory_space<vmem>>, vector<1x16x32xf32>
    %258 = vector.shape_cast %257 : vector<1x16x32xf32> to vector<16x32xf32>
    %cst_277 = arith.constant dense<0.000000e+00> : vector<16x1xf32>
    %259 = tpu.matmul %258, %256, %cst_277 {dimension_numbers = #tpu.dot_dimension_numbers<[1], [0], [0], [1], [0, 0, 1, 1], [], []>} : vector<16x32xf32>, vector<32x1xf32>, vector<16x1xf32> -> vector<16x1xf32>
    %260 = arith.addf %253, %259 : vector<16x1xf32>
    %c3_278 = arith.constant 3 : index
    %c0_279 = arith.constant 0 : index
    %c0_280 = arith.constant 0 : index
    %261 = vector.load %arg10[%c3_278, %c0_279, %c0_280] : memref<16x16x1xf32, #tpu.memory_space<vmem>>, vector<1x16x1xf32>
    %262 = vector.shape_cast %261 : vector<1x16x1xf32> to vector<16x1xf32>
    %cst_281 = arith.constant dense<0.000000e+00> : vector<32x1xf32>
    %263 = tpu.matmul %240, %262, %cst_281 {dimension_numbers = #tpu.dot_dimension_numbers<[1], [0], [0], [1], [0, 0, 1, 1], [], []>} : vector<32x16xf32>, vector<16x1xf32>, vector<32x1xf32> -> vector<32x1xf32>
    %c3_282 = arith.constant 3 : index
    %c0_283 = arith.constant 0 : index
    %c0_284 = arith.constant 0 : index
    %264 = vector.load %arg11[%c3_282, %c0_283, %c0_284] : memref<16x16x32xf32, #tpu.memory_space<vmem>>, vector<1x16x32xf32>
    %265 = vector.shape_cast %264 : vector<1x16x32xf32> to vector<16x32xf32>
    %cst_285 = arith.constant dense<0.000000e+00> : vector<16x1xf32>
    %266 = tpu.matmul %265, %263, %cst_285 {dimension_numbers = #tpu.dot_dimension_numbers<[1], [0], [0], [1], [0, 0, 1, 1], [], []>} : vector<16x32xf32>, vector<32x1xf32>, vector<16x1xf32> -> vector<16x1xf32>
    %267 = arith.addf %260, %266 : vector<16x1xf32>
    %c4_286 = arith.constant 4 : index
    %c0_287 = arith.constant 0 : index
    %c0_288 = arith.constant 0 : index
    %268 = vector.load %arg10[%c4_286, %c0_287, %c0_288] : memref<16x16x1xf32, #tpu.memory_space<vmem>>, vector<1x16x1xf32>
    %269 = vector.shape_cast %268 : vector<1x16x1xf32> to vector<16x1xf32>
    %cst_289 = arith.constant dense<0.000000e+00> : vector<32x1xf32>
    %270 = tpu.matmul %240, %269, %cst_289 {dimension_numbers = #tpu.dot_dimension_numbers<[1], [0], [0], [1], [0, 0, 1, 1], [], []>} : vector<32x16xf32>, vector<16x1xf32>, vector<32x1xf32> -> vector<32x1xf32>
    %c4_290 = arith.constant 4 : index
    %c0_291 = arith.constant 0 : index
    %c0_292 = arith.constant 0 : index
    %271 = vector.load %arg11[%c4_290, %c0_291, %c0_292] : memref<16x16x32xf32, #tpu.memory_space<vmem>>, vector<1x16x32xf32>
    %272 = vector.shape_cast %271 : vector<1x16x32xf32> to vector<16x32xf32>
    %cst_293 = arith.constant dense<0.000000e+00> : vector<16x1xf32>
    %273 = tpu.matmul %272, %270, %cst_293 {dimension_numbers = #tpu.dot_dimension_numbers<[1], [0], [0], [1], [0, 0, 1, 1], [], []>} : vector<16x32xf32>, vector<32x1xf32>, vector<16x1xf32> -> vector<16x1xf32>
    %274 = arith.addf %267, %273 : vector<16x1xf32>
    %c5_294 = arith.constant 5 : index
    %c0_295 = arith.constant 0 : index
    %c0_296 = arith.constant 0 : index
    %275 = vector.load %arg10[%c5_294, %c0_295, %c0_296] : memref<16x16x1xf32, #tpu.memory_space<vmem>>, vector<1x16x1xf32>
    %276 = vector.shape_cast %275 : vector<1x16x1xf32> to vector<16x1xf32>
    %cst_297 = arith.constant dense<0.000000e+00> : vector<32x1xf32>
    %277 = tpu.matmul %240, %276, %cst_297 {dimension_numbers = #tpu.dot_dimension_numbers<[1], [0], [0], [1], [0, 0, 1, 1], [], []>} : vector<32x16xf32>, vector<16x1xf32>, vector<32x1xf32> -> vector<32x1xf32>
    %c5_298 = arith.constant 5 : index
    %c0_299 = arith.constant 0 : index
    %c0_300 = arith.constant 0 : index
    %278 = vector.load %arg11[%c5_298, %c0_299, %c0_300] : memref<16x16x32xf32, #tpu.memory_space<vmem>>, vector<1x16x32xf32>
    %279 = vector.shape_cast %278 : vector<1x16x32xf32> to vector<16x32xf32>
    %cst_301 = arith.constant dense<0.000000e+00> : vector<16x1xf32>
    %280 = tpu.matmul %279, %277, %cst_301 {dimension_numbers = #tpu.dot_dimension_numbers<[1], [0], [0], [1], [0, 0, 1, 1], [], []>} : vector<16x32xf32>, vector<32x1xf32>, vector<16x1xf32> -> vector<16x1xf32>
    %281 = arith.addf %274, %280 : vector<16x1xf32>
    %c6_302 = arith.constant 6 : index
    %c0_303 = arith.constant 0 : index
    %c0_304 = arith.constant 0 : index
    %282 = vector.load %arg10[%c6_302, %c0_303, %c0_304] : memref<16x16x1xf32, #tpu.memory_space<vmem>>, vector<1x16x1xf32>
    %283 = vector.shape_cast %282 : vector<1x16x1xf32> to vector<16x1xf32>
    %cst_305 = arith.constant dense<0.000000e+00> : vector<32x1xf32>
    %284 = tpu.matmul %240, %283, %cst_305 {dimension_numbers = #tpu.dot_dimension_numbers<[1], [0], [0], [1], [0, 0, 1, 1], [], []>} : vector<32x16xf32>, vector<16x1xf32>, vector<32x1xf32> -> vector<32x1xf32>
    %c6_306 = arith.constant 6 : index
    %c0_307 = arith.constant 0 : index
    %c0_308 = arith.constant 0 : index
    %285 = vector.load %arg11[%c6_306, %c0_307, %c0_308] : memref<16x16x32xf32, #tpu.memory_space<vmem>>, vector<1x16x32xf32>
    %286 = vector.shape_cast %285 : vector<1x16x32xf32> to vector<16x32xf32>
    %cst_309 = arith.constant dense<0.000000e+00> : vector<16x1xf32>
    %287 = tpu.matmul %286, %284, %cst_309 {dimension_numbers = #tpu.dot_dimension_numbers<[1], [0], [0], [1], [0, 0, 1, 1], [], []>} : vector<16x32xf32>, vector<32x1xf32>, vector<16x1xf32> -> vector<16x1xf32>
    %288 = arith.addf %281, %287 : vector<16x1xf32>
    %c7_310 = arith.constant 7 : index
    %c0_311 = arith.constant 0 : index
    %c0_312 = arith.constant 0 : index
    %289 = vector.load %arg10[%c7_310, %c0_311, %c0_312] : memref<16x16x1xf32, #tpu.memory_space<vmem>>, vector<1x16x1xf32>
    %290 = vector.shape_cast %289 : vector<1x16x1xf32> to vector<16x1xf32>
    %cst_313 = arith.constant dense<0.000000e+00> : vector<32x1xf32>
    %291 = tpu.matmul %240, %290, %cst_313 {dimension_numbers = #tpu.dot_dimension_numbers<[1], [0], [0], [1], [0, 0, 1, 1], [], []>} : vector<32x16xf32>, vector<16x1xf32>, vector<32x1xf32> -> vector<32x1xf32>
    %c7_314 = arith.constant 7 : index
    %c0_315 = arith.constant 0 : index
    %c0_316 = arith.constant 0 : index
    %292 = vector.load %arg11[%c7_314, %c0_315, %c0_316] : memref<16x16x32xf32, #tpu.memory_space<vmem>>, vector<1x16x32xf32>
    %293 = vector.shape_cast %292 : vector<1x16x32xf32> to vector<16x32xf32>
    %cst_317 = arith.constant dense<0.000000e+00> : vector<16x1xf32>
    %294 = tpu.matmul %293, %291, %cst_317 {dimension_numbers = #tpu.dot_dimension_numbers<[1], [0], [0], [1], [0, 0, 1, 1], [], []>} : vector<16x32xf32>, vector<32x1xf32>, vector<16x1xf32> -> vector<16x1xf32>
    %295 = arith.addf %288, %294 : vector<16x1xf32>
    %c8_318 = arith.constant 8 : index
    %c0_319 = arith.constant 0 : index
    %c0_320 = arith.constant 0 : index
    %296 = vector.load %arg10[%c8_318, %c0_319, %c0_320] : memref<16x16x1xf32, #tpu.memory_space<vmem>>, vector<1x16x1xf32>
    %297 = vector.shape_cast %296 : vector<1x16x1xf32> to vector<16x1xf32>
    %cst_321 = arith.constant dense<0.000000e+00> : vector<32x1xf32>
    %298 = tpu.matmul %240, %297, %cst_321 {dimension_numbers = #tpu.dot_dimension_numbers<[1], [0], [0], [1], [0, 0, 1, 1], [], []>} : vector<32x16xf32>, vector<16x1xf32>, vector<32x1xf32> -> vector<32x1xf32>
    %c8_322 = arith.constant 8 : index
    %c0_323 = arith.constant 0 : index
    %c0_324 = arith.constant 0 : index
    %299 = vector.load %arg11[%c8_322, %c0_323, %c0_324] : memref<16x16x32xf32, #tpu.memory_space<vmem>>, vector<1x16x32xf32>
    %300 = vector.shape_cast %299 : vector<1x16x32xf32> to vector<16x32xf32>
    %cst_325 = arith.constant dense<0.000000e+00> : vector<16x1xf32>
    %301 = tpu.matmul %300, %298, %cst_325 {dimension_numbers = #tpu.dot_dimension_numbers<[1], [0], [0], [1], [0, 0, 1, 1], [], []>} : vector<16x32xf32>, vector<32x1xf32>, vector<16x1xf32> -> vector<16x1xf32>
    %302 = arith.addf %295, %301 : vector<16x1xf32>
    %c9_326 = arith.constant 9 : index
    %c0_327 = arith.constant 0 : index
    %c0_328 = arith.constant 0 : index
    %303 = vector.load %arg10[%c9_326, %c0_327, %c0_328] : memref<16x16x1xf32, #tpu.memory_space<vmem>>, vector<1x16x1xf32>
    %304 = vector.shape_cast %303 : vector<1x16x1xf32> to vector<16x1xf32>
    %cst_329 = arith.constant dense<0.000000e+00> : vector<32x1xf32>
    %305 = tpu.matmul %240, %304, %cst_329 {dimension_numbers = #tpu.dot_dimension_numbers<[1], [0], [0], [1], [0, 0, 1, 1], [], []>} : vector<32x16xf32>, vector<16x1xf32>, vector<32x1xf32> -> vector<32x1xf32>
    %c9_330 = arith.constant 9 : index
    %c0_331 = arith.constant 0 : index
    %c0_332 = arith.constant 0 : index
    %306 = vector.load %arg11[%c9_330, %c0_331, %c0_332] : memref<16x16x32xf32, #tpu.memory_space<vmem>>, vector<1x16x32xf32>
    %307 = vector.shape_cast %306 : vector<1x16x32xf32> to vector<16x32xf32>
    %cst_333 = arith.constant dense<0.000000e+00> : vector<16x1xf32>
    %308 = tpu.matmul %307, %305, %cst_333 {dimension_numbers = #tpu.dot_dimension_numbers<[1], [0], [0], [1], [0, 0, 1, 1], [], []>} : vector<16x32xf32>, vector<32x1xf32>, vector<16x1xf32> -> vector<16x1xf32>
    %309 = arith.addf %302, %308 : vector<16x1xf32>
    %c10_334 = arith.constant 10 : index
    %c0_335 = arith.constant 0 : index
    %c0_336 = arith.constant 0 : index
    %310 = vector.load %arg10[%c10_334, %c0_335, %c0_336] : memref<16x16x1xf32, #tpu.memory_space<vmem>>, vector<1x16x1xf32>
    %311 = vector.shape_cast %310 : vector<1x16x1xf32> to vector<16x1xf32>
    %cst_337 = arith.constant dense<0.000000e+00> : vector<32x1xf32>
    %312 = tpu.matmul %240, %311, %cst_337 {dimension_numbers = #tpu.dot_dimension_numbers<[1], [0], [0], [1], [0, 0, 1, 1], [], []>} : vector<32x16xf32>, vector<16x1xf32>, vector<32x1xf32> -> vector<32x1xf32>
    %c10_338 = arith.constant 10 : index
    %c0_339 = arith.constant 0 : index
    %c0_340 = arith.constant 0 : index
    %313 = vector.load %arg11[%c10_338, %c0_339, %c0_340] : memref<16x16x32xf32, #tpu.memory_space<vmem>>, vector<1x16x32xf32>
    %314 = vector.shape_cast %313 : vector<1x16x32xf32> to vector<16x32xf32>
    %cst_341 = arith.constant dense<0.000000e+00> : vector<16x1xf32>
    %315 = tpu.matmul %314, %312, %cst_341 {dimension_numbers = #tpu.dot_dimension_numbers<[1], [0], [0], [1], [0, 0, 1, 1], [], []>} : vector<16x32xf32>, vector<32x1xf32>, vector<16x1xf32> -> vector<16x1xf32>
    %316 = arith.addf %309, %315 : vector<16x1xf32>
    %c11_342 = arith.constant 11 : index
    %c0_343 = arith.constant 0 : index
    %c0_344 = arith.constant 0 : index
    %317 = vector.load %arg10[%c11_342, %c0_343, %c0_344] : memref<16x16x1xf32, #tpu.memory_space<vmem>>, vector<1x16x1xf32>
    %318 = vector.shape_cast %317 : vector<1x16x1xf32> to vector<16x1xf32>
    %cst_345 = arith.constant dense<0.000000e+00> : vector<32x1xf32>
    %319 = tpu.matmul %240, %318, %cst_345 {dimension_numbers = #tpu.dot_dimension_numbers<[1], [0], [0], [1], [0, 0, 1, 1], [], []>} : vector<32x16xf32>, vector<16x1xf32>, vector<32x1xf32> -> vector<32x1xf32>
    %c11_346 = arith.constant 11 : index
    %c0_347 = arith.constant 0 : index
    %c0_348 = arith.constant 0 : index
    %320 = vector.load %arg11[%c11_346, %c0_347, %c0_348] : memref<16x16x32xf32, #tpu.memory_space<vmem>>, vector<1x16x32xf32>
    %321 = vector.shape_cast %320 : vector<1x16x32xf32> to vector<16x32xf32>
    %cst_349 = arith.constant dense<0.000000e+00> : vector<16x1xf32>
    %322 = tpu.matmul %321, %319, %cst_349 {dimension_numbers = #tpu.dot_dimension_numbers<[1], [0], [0], [1], [0, 0, 1, 1], [], []>} : vector<16x32xf32>, vector<32x1xf32>, vector<16x1xf32> -> vector<16x1xf32>
    %323 = arith.addf %316, %322 : vector<16x1xf32>
    %c12_350 = arith.constant 12 : index
    %c0_351 = arith.constant 0 : index
    %c0_352 = arith.constant 0 : index
    %324 = vector.load %arg10[%c12_350, %c0_351, %c0_352] : memref<16x16x1xf32, #tpu.memory_space<vmem>>, vector<1x16x1xf32>
    %325 = vector.shape_cast %324 : vector<1x16x1xf32> to vector<16x1xf32>
    %cst_353 = arith.constant dense<0.000000e+00> : vector<32x1xf32>
    %326 = tpu.matmul %240, %325, %cst_353 {dimension_numbers = #tpu.dot_dimension_numbers<[1], [0], [0], [1], [0, 0, 1, 1], [], []>} : vector<32x16xf32>, vector<16x1xf32>, vector<32x1xf32> -> vector<32x1xf32>
    %c12_354 = arith.constant 12 : index
    %c0_355 = arith.constant 0 : index
    %c0_356 = arith.constant 0 : index
    %327 = vector.load %arg11[%c12_354, %c0_355, %c0_356] : memref<16x16x32xf32, #tpu.memory_space<vmem>>, vector<1x16x32xf32>
    %328 = vector.shape_cast %327 : vector<1x16x32xf32> to vector<16x32xf32>
    %cst_357 = arith.constant dense<0.000000e+00> : vector<16x1xf32>
    %329 = tpu.matmul %328, %326, %cst_357 {dimension_numbers = #tpu.dot_dimension_numbers<[1], [0], [0], [1], [0, 0, 1, 1], [], []>} : vector<16x32xf32>, vector<32x1xf32>, vector<16x1xf32> -> vector<16x1xf32>
    %330 = arith.addf %323, %329 : vector<16x1xf32>
    %c13_358 = arith.constant 13 : index
    %c0_359 = arith.constant 0 : index
    %c0_360 = arith.constant 0 : index
    %331 = vector.load %arg10[%c13_358, %c0_359, %c0_360] : memref<16x16x1xf32, #tpu.memory_space<vmem>>, vector<1x16x1xf32>
    %332 = vector.shape_cast %331 : vector<1x16x1xf32> to vector<16x1xf32>
    %cst_361 = arith.constant dense<0.000000e+00> : vector<32x1xf32>
    %333 = tpu.matmul %240, %332, %cst_361 {dimension_numbers = #tpu.dot_dimension_numbers<[1], [0], [0], [1], [0, 0, 1, 1], [], []>} : vector<32x16xf32>, vector<16x1xf32>, vector<32x1xf32> -> vector<32x1xf32>
    %c13_362 = arith.constant 13 : index
    %c0_363 = arith.constant 0 : index
    %c0_364 = arith.constant 0 : index
    %334 = vector.load %arg11[%c13_362, %c0_363, %c0_364] : memref<16x16x32xf32, #tpu.memory_space<vmem>>, vector<1x16x32xf32>
    %335 = vector.shape_cast %334 : vector<1x16x32xf32> to vector<16x32xf32>
    %cst_365 = arith.constant dense<0.000000e+00> : vector<16x1xf32>
    %336 = tpu.matmul %335, %333, %cst_365 {dimension_numbers = #tpu.dot_dimension_numbers<[1], [0], [0], [1], [0, 0, 1, 1], [], []>} : vector<16x32xf32>, vector<32x1xf32>, vector<16x1xf32> -> vector<16x1xf32>
    %337 = arith.addf %330, %336 : vector<16x1xf32>
    %c14_366 = arith.constant 14 : index
    %c0_367 = arith.constant 0 : index
    %c0_368 = arith.constant 0 : index
    %338 = vector.load %arg10[%c14_366, %c0_367, %c0_368] : memref<16x16x1xf32, #tpu.memory_space<vmem>>, vector<1x16x1xf32>
    %339 = vector.shape_cast %338 : vector<1x16x1xf32> to vector<16x1xf32>
    %cst_369 = arith.constant dense<0.000000e+00> : vector<32x1xf32>
    %340 = tpu.matmul %240, %339, %cst_369 {dimension_numbers = #tpu.dot_dimension_numbers<[1], [0], [0], [1], [0, 0, 1, 1], [], []>} : vector<32x16xf32>, vector<16x1xf32>, vector<32x1xf32> -> vector<32x1xf32>
    %c14_370 = arith.constant 14 : index
    %c0_371 = arith.constant 0 : index
    %c0_372 = arith.constant 0 : index
    %341 = vector.load %arg11[%c14_370, %c0_371, %c0_372] : memref<16x16x32xf32, #tpu.memory_space<vmem>>, vector<1x16x32xf32>
    %342 = vector.shape_cast %341 : vector<1x16x32xf32> to vector<16x32xf32>
    %cst_373 = arith.constant dense<0.000000e+00> : vector<16x1xf32>
    %343 = tpu.matmul %342, %340, %cst_373 {dimension_numbers = #tpu.dot_dimension_numbers<[1], [0], [0], [1], [0, 0, 1, 1], [], []>} : vector<16x32xf32>, vector<32x1xf32>, vector<16x1xf32> -> vector<16x1xf32>
    %344 = arith.addf %337, %343 : vector<16x1xf32>
    %c15_374 = arith.constant 15 : index
    %c0_375 = arith.constant 0 : index
    %c0_376 = arith.constant 0 : index
    %345 = vector.load %arg10[%c15_374, %c0_375, %c0_376] : memref<16x16x1xf32, #tpu.memory_space<vmem>>, vector<1x16x1xf32>
    %346 = vector.shape_cast %345 : vector<1x16x1xf32> to vector<16x1xf32>
    %cst_377 = arith.constant dense<0.000000e+00> : vector<32x1xf32>
    %347 = tpu.matmul %240, %346, %cst_377 {dimension_numbers = #tpu.dot_dimension_numbers<[1], [0], [0], [1], [0, 0, 1, 1], [], []>} : vector<32x16xf32>, vector<16x1xf32>, vector<32x1xf32> -> vector<32x1xf32>
    %c15_378 = arith.constant 15 : index
    %c0_379 = arith.constant 0 : index
    %c0_380 = arith.constant 0 : index
    %348 = vector.load %arg11[%c15_378, %c0_379, %c0_380] : memref<16x16x32xf32, #tpu.memory_space<vmem>>, vector<1x16x32xf32>
    %349 = vector.shape_cast %348 : vector<1x16x32xf32> to vector<16x32xf32>
    %cst_381 = arith.constant dense<0.000000e+00> : vector<16x1xf32>
    %350 = tpu.matmul %349, %347, %cst_381 {dimension_numbers = #tpu.dot_dimension_numbers<[1], [0], [0], [1], [0, 0, 1, 1], [], []>} : vector<16x32xf32>, vector<32x1xf32>, vector<16x1xf32> -> vector<16x1xf32>
    %351 = arith.addf %344, %350 : vector<16x1xf32>
    %c0_382 = arith.constant 0 : index
    %c0_383 = arith.constant 0 : index
    %352 = vector.load %arg12[%c0_382, %c0_383] : memref<16x1xf32, #tpu.memory_space<vmem>>, vector<16x1xf32>
    %353 = arith.addf %351, %352 : vector<16x1xf32>
    %c0_384 = arith.constant 0 : index
    %c0_385 = arith.constant 0 : index
    %c0_386 = arith.constant 0 : index
    %354 = vector.load %arg13[%c0_384, %c0_385, %c0_386] : memref<1x16x1xf32, #tpu.memory_space<vmem>>, vector<1x16x1xf32>
    %355 = vector.shape_cast %354 : vector<1x16x1xf32> to vector<16x1xf32>
    %356 = vector.shape_cast %353 : vector<16x1xf32> to vector<1x16x1xf32>
    tpu.vector_store %arg13[%c0_384, %c0_385, %c0_386], %356 {strides = array<i32>} : memref<1x16x1xf32, #tpu.memory_space<vmem>>, vector<1x16x1xf32>,
    return
  }
  func.func @transform_0(%arg0: i32) -> (i32, i32, i32) {
    %c0_i32 = arith.constant 0 : i32
    %c0_i32_0 = arith.constant 0 : i32
    %c0_i32_1 = arith.constant 0 : i32
    return %arg0, %c0_i32, %c0_i32_0 : i32, i32, i32
  }
  func.func @transform_1(%arg0: i32) -> (i32, i32) {
    %c0_i32 = arith.constant 0 : i32
    %c0_i32_0 = arith.constant 0 : i32
    %c0_i32_1 = arith.constant 0 : i32
    return %c0_i32, %c0_i32_0 : i32, i32
  }
  func.func @transform_2(%arg0: i32) -> (i32, i32) {
    %c0_i32 = arith.constant 0 : i32
    %c0_i32_0 = arith.constant 0 : i32
    %c0_i32_1 = arith.constant 0 : i32
    return %c0_i32, %c0_i32_0 : i32, i32
  }
  func.func @transform_3(%arg0: i32) -> (i32, i32, i32) {
    %c0_i32 = arith.constant 0 : i32
    %c0_i32_0 = arith.constant 0 : i32
    %c0_i32_1 = arith.constant 0 : i32
    %c0_i32_2 = arith.constant 0 : i32
    return %c0_i32, %c0_i32_0, %c0_i32_1 : i32, i32, i32
  }
  func.func @transform_4(%arg0: i32) -> (i32, i32, i32) {
    %c0_i32 = arith.constant 0 : i32
    %c0_i32_0 = arith.constant 0 : i32
    %c0_i32_1 = arith.constant 0 : i32
    %c0_i32_2 = arith.constant 0 : i32
    return %c0_i32, %c0_i32_0, %c0_i32_1 : i32, i32, i32
  }
  func.func @transform_5(%arg0: i32) -> (i32, i32) {
    %c0_i32 = arith.constant 0 : i32
    %c0_i32_0 = arith.constant 0 : i32
    %c0_i32_1 = arith.constant 0 : i32
    return %c0_i32, %c0_i32_0 : i32, i32
  }
  func.func @transform_6(%arg0: i32) -> (i32, i32, i32) {
    %c0_i32 = arith.constant 0 : i32
    %c0_i32_0 = arith.constant 0 : i32
    %c0_i32_1 = arith.constant 0 : i32
    %c0_i32_2 = arith.constant 0 : i32
    return %c0_i32, %c0_i32_0, %c0_i32_1 : i32, i32, i32
  }
  func.func @transform_7(%arg0: i32) -> (i32, i32, i32) {
    %c0_i32 = arith.constant 0 : i32
    %c0_i32_0 = arith.constant 0 : i32
    %c0_i32_1 = arith.constant 0 : i32
    %c0_i32_2 = arith.constant 0 : i32
    return %c0_i32, %c0_i32_0, %c0_i32_1 : i32, i32, i32
  }
  func.func @transform_8(%arg0: i32) -> (i32, i32) {
    %c0_i32 = arith.constant 0 : i32
    %c0_i32_0 = arith.constant 0 : i32
    %c0_i32_1 = arith.constant 0 : i32
    return %c0_i32, %c0_i32_0 : i32, i32
  }
  func.func @transform_9(%arg0: i32) -> (i32, i32, i32) {
    %c0_i32 = arith.constant 0 : i32
    %c0_i32_0 = arith.constant 0 : i32
    %c0_i32_1 = arith.constant 0 : i32
    %c0_i32_2 = arith.constant 0 : i32
    return %c0_i32, %c0_i32_0, %c0_i32_1 : i32, i32, i32
  }
  func.func @transform_10(%arg0: i32) -> (i32, i32, i32) {
    %c0_i32 = arith.constant 0 : i32
    %c0_i32_0 = arith.constant 0 : i32
    %c0_i32_1 = arith.constant 0 : i32
    %c0_i32_2 = arith.constant 0 : i32
    return %c0_i32, %c0_i32_0, %c0_i32_1 : i32, i32, i32
  }
  func.func @transform_11(%arg0: i32) -> (i32, i32) {
    %c0_i32 = arith.constant 0 : i32
    %c0_i32_0 = arith.constant 0 : i32
    %c0_i32_1 = arith.constant 0 : i32
    return %c0_i32, %c0_i32_0 : i32, i32
  }
  func.func @transform_12(%arg0: i32) -> (i32, i32, i32) {
    %c0_i32 = arith.constant 0 : i32
    %c0_i32_0 = arith.constant 0 : i32
    %c0_i32_1 = arith.constant 0 : i32
    return %arg0, %c0_i32, %c0_i32_0 : i32, i32, i32
  }
}

</mosaic_0001>

<llo_original>
// kernel: _lambda_.1
$region0: #{_lambda_.1}
  #allocation0 [shape = 'u32[]', space=smem, size = 0x4, offset = 0x4, fixed_abs, tag = 'smem constant byte address 0x4 - core index']
  #allocation1 [shape = 'u32[72,128]{1,0:T(1,128)}', space=vmem, size = 0x9000, scoped, tag = 'internal scratch']
  %s0 = inlined_call_operand.vmem [shape: f32[2,64,256], index: 0, kind: input, shape index: {}]
  %s1 = inlined_call_operand.vmem [shape: f32[8,64], index: 1, kind: input, shape index: {}]
  %s2 = inlined_call_operand.vmem [shape: f32[8,1], index: 2, kind: input, shape index: {}]
  %s3 = inlined_call_operand.vmem [shape: f32[16,256,64], index: 3, kind: input, shape index: {}]
  %s4 = inlined_call_operand.vmem [shape: f32[16,16,8], index: 4, kind: input, shape index: {}]
  %s5 = inlined_call_operand.vmem [shape: f32[16,1], index: 5, kind: input, shape index: {}]
  %s6 = inlined_call_operand.vmem [shape: f32[16,64,16], index: 6, kind: input, shape index: {}]
  %s7 = inlined_call_operand.vmem [shape: f32[16,32,16], index: 7, kind: input, shape index: {}]
  %s8 = inlined_call_operand.vmem [shape: f32[32,1], index: 8, kind: input, shape index: {}]
  %s9 = inlined_call_operand.vmem [shape: f32[16,16,1], index: 9, kind: input, shape index: {}]
  %s10 = inlined_call_operand.vmem [shape: f32[16,16,32], index: 10, kind: input, shape index: {}]
  %s11 = inlined_call_operand.vmem [shape: f32[16,1], index: 11, kind: input, shape index: {}]
  %s12 = inlined_call_operand.vmem [shape: f32[2,16,1], index: 12, kind: output, shape index: {}]
  %s13 = sld [smem:[#allocation0]]
  $region81: #{_lambda_.1} parent=0
    _
  %s15 = ssub.s32 1, %s13
  %s16 = scalar_select 0, %s15, %s13
  loop: start=0, step=1, limit=4
  $region2: #{_lambda_.1} parent=0 // loop_pre_header
    _
  $region3: #{_lambda_.1} parent=0 // loop_header
    %s18 = sphi 0, %s22
    %p19 = scmp.ge.s32.totalorder %s18, 4
    %s28 = sphi 0, %s30
    %s31 = sphi 0, %s28
    %s32 = sphi 0, %s31
    %s48 = sphi 0, %s32
    %s52 = sphi 0, %s52
    %s54 = sphi 0, %s52
    %s55 = sphi 0, %s54
    %s69 = sphi 0, %s55
    %s73 = sphi 0, %s73
    %s75 = sphi 0, %s73
    %s76 = sphi 0, %s75
    %s90 = sphi 0, %s76
    %s94 = sphi 0, %s94
    %s96 = sphi 0, %s94
    %s97 = sphi 0, %s96
    %s111 = sphi 0, %s97
    %s115 = sphi 0, %s115
    %s117 = sphi 0, %s115
    %s118 = sphi 0, %s117
    %s132 = sphi 0, %s118
    %s136 = sphi 0, %s136
    %s138 = sphi 0, %s136
    %s139 = sphi 0, %s138
    %s153 = sphi 0, %s139
    %s157 = sphi 0, %s157
    %s159 = sphi 0, %s157
    %s160 = sphi 0, %s159
    %s174 = sphi 0, %s160
    %s178 = sphi 0, %s178
    %s180 = sphi 0, %s178
    %s181 = sphi 0, %s180
    %s195 = sphi 0, %s181
    %s199 = sphi 0, %s199
    %s201 = sphi 0, %s199
    %s202 = sphi 0, %s201
    %s216 = sphi 0, %s202
    %s220 = sphi 0, %s220
    %s222 = sphi 0, %s220
    %s223 = sphi 0, %s222
    %s237 = sphi 0, %s223
    %s241 = sphi 0, %s241
    %s243 = sphi 0, %s241
    %s244 = sphi 0, %s243
    %s258 = sphi 0, %s244
    %s262 = sphi 0, %s262
    %s264 = sphi 0, %s262
    %s265 = sphi 0, %s264
    %s279 = sphi 0, %s265
    %s285 = sphi 0, %s287
    %s288 = sphi 0, %s285
    %s289 = sphi 0, %s288
    %s305 = sphi 0, %s289
  $region4: #{_lambda_.1} parent=0 // loop_header_branch
    %21 = sbr.rel (%p19) target = $region8
  $region5: #{_lambda_.1} parent=0 // loop_body
    %s23 = ssub.s32 %s18, 1
    %s24 = ssub.s32 %s18, 2
    %s25 = sadd.s32 %s18, 1
    %s26 = ssub.s32 %s18, %s25
    %p27 = scmp.eq.s32.totalorder %s26, 0
    %s29 = sadd.s32 %s28, 1
    %s30 = scalar_select %p27, %s28, %s29
    %p33 = pneg %p27
    %p34 = scmp.eq.s32.totalorder %s18, 1
    %p35 = por %p33, %p34
    %p36 = scmp.ne.s32.totalorder %s28, %s31
    %p37 = scmp.eq.s32.totalorder %s18, 0
    %p38 = por %p36, %p37
    %p39 = scmp.ne.s32.totalorder %s28, %s31
    %p40 = scmp.eq.s32.totalorder %s23, 1
    %p41 = por %p39, %p40
    %p42 = scmp.ne.s32.totalorder %s31, %s32
    %p43 = scmp.eq.s32.totalorder %s23, 0
    %p44 = por %p42, %p43
    %p45 = scmp.ne.s32.totalorder %s31, %s32
    %p46 = scmp.eq.s32.totalorder %s24, 1
    %p47 = por %p45, %p46
    %p49 = scmp.ne.s32.totalorder %s32, %s48
    %p50 = scmp.eq.s32.totalorder %s24, 0
    %p51 = por %p49, %p50
    %s53 = sadd.s32 %s52, 1
    %p56 = scmp.eq.s32.totalorder %s18, 1
    %p57 = scmp.ne.s32.totalorder %s52, %s54
    %p58 = scmp.eq.s32.totalorder %s18, 0
    %p59 = por %p57, %p58
    %p60 = scmp.ne.s32.totalorder %s52, %s54
    %p61 = scmp.eq.s32.totalorder %s23, 1
    %p62 = por %p60, %p61
    %p63 = scmp.ne.s32.totalorder %s54, %s55
    %p64 = scmp.eq.s32.totalorder %s23, 0
    %p65 = por %p63, %p64
    %p66 = scmp.ne.s32.totalorder %s54, %s55
    %p67 = scmp.eq.s32.totalorder %s24, 1
    %p68 = por %p66, %p67
    %p70 = scmp.ne.s32.totalorder %s55, %s69
    %p71 = scmp.eq.s32.totalorder %s24, 0
    %p72 = por %p70, %p71
    %s74 = sadd.s32 %s73, 1
    %p77 = scmp.eq.s32.totalorder %s18, 1
    %p78 = scmp.ne.s32.totalorder %s73, %s75
    %p79 = scmp.eq.s32.totalorder %s18, 0
    %p80 = por %p78, %p79
    %p81 = scmp.ne.s32.totalorder %s73, %s75
    %p82 = scmp.eq.s32.totalorder %s23, 1
    %p83 = por %p81, %p82
    %p84 = scmp.ne.s32.totalorder %s75, %s76
    %p85 = scmp.eq.s32.totalorder %s23, 0
    %p86 = por %p84, %p85
    %p87 = scmp.ne.s32.totalorder %s75, %s76
    %p88 = scmp.eq.s32.totalorder %s24, 1
    %p89 = por %p87, %p88
    %p91 = scmp.ne.s32.totalorder %s76, %s90
    %p92 = scmp.eq.s32.totalorder %s24, 0
    %p93 = por %p91, %p92
    %s95 = sadd.s32 %s94, 1
    %p98 = scmp.eq.s32.totalorder %s18, 1
    %p99 = scmp.ne.s32.totalorder %s94, %s96
    %p100 = scmp.eq.s32.totalorder %s18, 0
    %p101 = por %p99, %p100
    %p102 = scmp.ne.s32.totalorder %s94, %s96
    %p103 = scmp.eq.s32.totalorder %s23, 1
    %p104 = por %p102, %p103
    %p105 = scmp.ne.s32.totalorder %s96, %s97
    %p106 = scmp.eq.s32.totalorder %s23, 0
    %p107 = por %p105, %p106
    %p108 = scmp.ne.s32.totalorder %s96, %s97
    %p109 = scmp.eq.s32.totalorder %s24, 1
    %p110 = por %p108, %p109
    %p112 = scmp.ne.s32.totalorder %s97, %s111
    %p113 = scmp.eq.s32.totalorder %s24, 0
    %p114 = por %p112, %p113
    %s116 = sadd.s32 %s115, 1
    %p119 = scmp.eq.s32.totalorder %s18, 1
    %p120 = scmp.ne.s32.totalorder %s115, %s117
    %p121 = scmp.eq.s32.totalorder %s18, 0
    %p122 = por %p120, %p121
    %p123 = scmp.ne.s32.totalorder %s115, %s117
    %p124 = scmp.eq.s32.totalorder %s23, 1
    %p125 = por %p123, %p124
    %p126 = scmp.ne.s32.totalorder %s117, %s118
    %p127 = scmp.eq.s32.totalorder %s23, 0
    %p128 = por %p126, %p127
    %p129 = scmp.ne.s32.totalorder %s117, %s118
    %p130 = scmp.eq.s32.totalorder %s24, 1
    %p131 = por %p129, %p130
    %p133 = scmp.ne.s32.totalorder %s118, %s132
    %p134 = scmp.eq.s32.totalorder %s24, 0
    %p135 = por %p133, %p134
    %s137 = sadd.s32 %s136, 1
    %p140 = scmp.eq.s32.totalorder %s18, 1
    %p141 = scmp.ne.s32.totalorder %s136, %s138
    %p142 = scmp.eq.s32.totalorder %s18, 0
    %p143 = por %p141, %p142
    %p144 = scmp.ne.s32.totalorder %s136, %s138
    %p145 = scmp.eq.s32.totalorder %s23, 1
    %p146 = por %p144, %p145
    %p147 = scmp.ne.s32.totalorder %s138, %s139
    %p148 = scmp.eq.s32.totalorder %s23, 0
    %p149 = por %p147, %p148
    %p150 = scmp.ne.s32.totalorder %s138, %s139
    %p151 = scmp.eq.s32.totalorder %s24, 1
    %p152 = por %p150, %p151
    %p154 = scmp.ne.s32.totalorder %s139, %s153
    %p155 = scmp.eq.s32.totalorder %s24, 0
    %p156 = por %p154, %p155
    %s158 = sadd.s32 %s157, 1
    %p161 = scmp.eq.s32.totalorder %s18, 1
    %p162 = scmp.ne.s32.totalorder %s157, %s159
    %p163 = scmp.eq.s32.totalorder %s18, 0
    %p164 = por %p162, %p163
    %p165 = scmp.ne.s32.totalorder %s157, %s159
    %p166 = scmp.eq.s32.totalorder %s23, 1
    %p167 = por %p165, %p166
    %p168 = scmp.ne.s32.totalorder %s159, %s160
    %p169 = scmp.eq.s32.totalorder %s23, 0
    %p170 = por %p168, %p169
    %p171 = scmp.ne.s32.totalorder %s159, %s160
    %p172 = scmp.eq.s32.totalorder %s24, 1
    %p173 = por %p171, %p172
    %p175 = scmp.ne.s32.totalorder %s160, %s174
    %p176 = scmp.eq.s32.totalorder %s24, 0
    %p177 = por %p175, %p176
    %s179 = sadd.s32 %s178, 1
    %p182 = scmp.eq.s32.totalorder %s18, 1
    %p183 = scmp.ne.s32.totalorder %s178, %s180
    %p184 = scmp.eq.s32.totalorder %s18, 0
    %p185 = por %p183, %p184
    %p186 = scmp.ne.s32.totalorder %s178, %s180
    %p187 = scmp.eq.s32.totalorder %s23, 1
    %p188 = por %p186, %p187
    %p189 = scmp.ne.s32.totalorder %s180, %s181
    %p190 = scmp.eq.s32.totalorder %s23, 0
    %p191 = por %p189, %p190
    %p192 = scmp.ne.s32.totalorder %s180, %s181
    %p193 = scmp.eq.s32.totalorder %s24, 1
    %p194 = por %p192, %p193
    %p196 = scmp.ne.s32.totalorder %s181, %s195
    %p197 = scmp.eq.s32.totalorder %s24, 0
    %p198 = por %p196, %p197
    %s200 = sadd.s32 %s199, 1
    %p203 = scmp.eq.s32.totalorder %s18, 1
    %p204 = scmp.ne.s32.totalorder %s199, %s201
    %p205 = scmp.eq.s32.totalorder %s18, 0
    %p206 = por %p204, %p205
    %p207 = scmp.ne.s32.totalorder %s199, %s201
    %p208 = scmp.eq.s32.totalorder %s23, 1
    %p209 = por %p207, %p208
    %p210 = scmp.ne.s32.totalorder %s201, %s202
    %p211 = scmp.eq.s32.totalorder %s23, 0
    %p212 = por %p210, %p211
    %p213 = scmp.ne.s32.totalorder %s201, %s202
    %p214 = scmp.eq.s32.totalorder %s24, 1
    %p215 = por %p213, %p214
    %p217 = scmp.ne.s32.totalorder %s202, %s216
    %p218 = scmp.eq.s32.totalorder %s24, 0
    %p219 = por %p217, %p218
    %s221 = sadd.s32 %s220, 1
    %p224 = scmp.eq.s32.totalorder %s18, 1
    %p225 = scmp.ne.s32.totalorder %s220, %s222
    %p226 = scmp.eq.s32.totalorder %s18, 0
    %p227 = por %p225, %p226
    %p228 = scmp.ne.s32.totalorder %s220, %s222
    %p229 = scmp.eq.s32.totalorder %s23, 1
    %p230 = por %p228, %p229
    %p231 = scmp.ne.s32.totalorder %s222, %s223
    %p232 = scmp.eq.s32.totalorder %s23, 0
    %p233 = por %p231, %p232
    %p234 = scmp.ne.s32.totalorder %s222, %s223
    %p235 = scmp.eq.s32.totalorder %s24, 1
    %p236 = por %p234, %p235
    %p238 = scmp.ne.s32.totalorder %s223, %s237
    %p239 = scmp.eq.s32.totalorder %s24, 0
    %p240 = por %p238, %p239
    %s242 = sadd.s32 %s241, 1
    %p245 = scmp.eq.s32.totalorder %s18, 1
    %p246 = scmp.ne.s32.totalorder %s241, %s243
    %p247 = scmp.eq.s32.totalorder %s18, 0
    %p248 = por %p246, %p247
    %p249 = scmp.ne.s32.totalorder %s241, %s243
    %p250 = scmp.eq.s32.totalorder %s23, 1
    %p251 = por %p249, %p250
    %p252 = scmp.ne.s32.totalorder %s243, %s244
    %p253 = scmp.eq.s32.totalorder %s23, 0
    %p254 = por %p252, %p253
    %p255 = scmp.ne.s32.totalorder %s243, %s244
    %p256 = scmp.eq.s32.totalorder %s24, 1
    %p257 = por %p255, %p256
    %p259 = scmp.ne.s32.totalorder %s244, %s258
    %p260 = scmp.eq.s32.totalorder %s24, 0
    %p261 = por %p259, %p260
    %s263 = sadd.s32 %s262, 1
    %p266 = scmp.eq.s32.totalorder %s18, 1
    %p267 = scmp.ne.s32.totalorder %s262, %s264
    %p268 = scmp.eq.s32.totalorder %s18, 0
    %p269 = por %p267, %p268
    %p270 = scmp.ne.s32.totalorder %s262, %s264
    %p271 = scmp.eq.s32.totalorder %s23, 1
    %p272 = por %p270, %p271
    %p273 = scmp.ne.s32.totalorder %s264, %s265
    %p274 = scmp.eq.s32.totalorder %s23, 0
    %p275 = por %p273, %p274
    %p276 = scmp.ne.s32.totalorder %s264, %s265
    %p277 = scmp.eq.s32.totalorder %s24, 1
    %p278 = por %p276, %p277
    %p280 = scmp.ne.s32.totalorder %s265, %s279
    %p281 = scmp.eq.s32.totalorder %s24, 0
    %p282 = por %p280, %p281
    %s283 = ssub.s32 %s18, %s25
    %p284 = scmp.eq.s32.totalorder %s283, 0
    %s286 = sadd.s32 %s285, 1
    %s287 = scalar_select %p284, %s285, %s286
    %p290 = pneg %p284
    %p291 = scmp.eq.s32.totalorder %s18, 1
    %p292 = por %p290, %p291
    %p293 = scmp.ne.s32.totalorder %s285, %s288
    %p294 = scmp.eq.s32.totalorder %s18, 0
    %p295 = por %p293, %p294
    %p296 = scmp.ne.s32.totalorder %s285, %s288
    %p297 = scmp.eq.s32.totalorder %s23, 1
    %p298 = por %p296, %p297
    %p299 = scmp.ne.s32.totalorder %s288, %s289
    %p300 = scmp.eq.s32.totalorder %s23, 0
    %p301 = por %p299, %p300
    %p302 = scmp.ne.s32.totalorder %s288, %s289
    %p303 = scmp.eq.s32.totalorder %s24, 1
    %p304 = por %p302, %p303
    %p306 = scmp.ne.s32.totalorder %s289, %s305
    %p307 = scmp.eq.s32.totalorder %s24, 0
    %p308 = por %p306, %p307
    %p309 = scmp.le.s32.totalorder 1, %s18
    %p310 = scmp.lt.s32.totalorder %s18, 3
    %p311 = pnand %p309, %p310
    %p312 = pneg %p311
    // Predicated region
    $region9: #{_lambda_.1} parent=5 // pred_check
      _
    $region10: #{_lambda_.1} parent=5 // pred_check_branch
      %314 = sbr.rel (%p311) target = $region12
    $region11: #{_lambda_.1} parent=5 // pred_region
      %s315 = ssub.s32 %s18, 1
      // Predicated region
      $region13: #{_lambda_.1} parent=11 // pred_check
        %p316 = pneg %p65
      $region14: #{_lambda_.1} parent=11 // pred_check_branch
        %318 = sbr.rel (%p316) target = $region16
      $region15: #{_lambda_.1} parent=11 // pred_region
        _
      $region16: #{_lambda_.1} parent=11 // pred_fallthru
        _
      // Predicated region
      $region17: #{_lambda_.1} parent=11 // pred_check
        %p319 = pneg %p86
      $region18: #{_lambda_.1} parent=11 // pred_check_branch
        %321 = sbr.rel (%p319) target = $region20
      $region19: #{_lambda_.1} parent=11 // pred_region
        _
      $region20: #{_lambda_.1} parent=11 // pred_fallthru
        _
      // Predicated region
      $region21: #{_lambda_.1} parent=11 // pred_check
        %p322 = pneg %p107
      $region22: #{_lambda_.1} parent=11 // pred_check_branch
        %324 = sbr.rel (%p322) target = $region24
      $region23: #{_lambda_.1} parent=11 // pred_region
        _
      $region24: #{_lambda_.1} parent=11 // pred_fallthru
        _
      // Predicated region
      $region25: #{_lambda_.1} parent=11 // pred_check
        %p325 = pneg %p128
      $region26: #{_lambda_.1} parent=11 // pred_check_branch
        %327 = sbr.rel (%p325) target = $region28
      $region27: #{_lambda_.1} parent=11 // pred_region
        _
      $region28: #{_lambda_.1} parent=11 // pred_fallthru
        _
      // Predicated region
      $region29: #{_lambda_.1} parent=11 // pred_check
        %p328 = pneg %p149
      $region30: #{_lambda_.1} parent=11 // pred_check_branch
        %330 = sbr.rel (%p328) target = $region32
      $region31: #{_lambda_.1} parent=11 // pred_region
        _
      $region32: #{_lambda_.1} parent=11 // pred_fallthru
        _
      // Predicated region
      $region33: #{_lambda_.1} parent=11 // pred_check
        %p331 = pneg %p170
      $region34: #{_lambda_.1} parent=11 // pred_check_branch
        %333 = sbr.rel (%p331) target = $region36
      $region35: #{_lambda_.1} parent=11 // pred_region
        _
      $region36: #{_lambda_.1} parent=11 // pred_fallthru
        _
      // Predicated region
      $region37: #{_lambda_.1} parent=11 // pred_check
        %p334 = pneg %p191
      $region38: #{_lambda_.1} parent=11 // pred_check_branch
        %336 = sbr.rel (%p334) target = $region40
      $region39: #{_lambda_.1} parent=11 // pred_region
        _
      $region40: #{_lambda_.1} parent=11 // pred_fallthru
        _
      // Predicated region
      $region41: #{_lambda_.1} parent=11 // pred_check
        %p337 = pneg %p212
      $region42: #{_lambda_.1} parent=11 // pred_check_branch
        %339 = sbr.rel (%p337) target = $region44
      $region43: #{_lambda_.1} parent=11 // pred_region
        _
      $region44: #{_lambda_.1} parent=11 // pred_fallthru
        _
      // Predicated region
      $region45: #{_lambda_.1} parent=11 // pred_check
        %p340 = pneg %p233
      $region46: #{_lambda_.1} parent=11 // pred_check_branch
        %342 = sbr.rel (%p340) target = $region48
      $region47: #{_lambda_.1} parent=11 // pred_region
        _
      $region48: #{_lambda_.1} parent=11 // pred_fallthru
        _
      // Predicated region
      $region49: #{_lambda_.1} parent=11 // pred_check
        %p343 = pneg %p254
      $region50: #{_lambda_.1} parent=11 // pred_check_branch
        %345 = sbr.rel (%p343) target = $region52
      $region51: #{_lambda_.1} parent=11 // pred_region
        _
      $region52: #{_lambda_.1} parent=11 // pred_fallthru
        _
      // Predicated region
      $region53: #{_lambda_.1} parent=11 // pred_check
        %p346 = pneg %p275
      $region54: #{_lambda_.1} parent=11 // pred_check_branch
        %348 = sbr.rel (%p346) target = $region56
      $region55: #{_lambda_.1} parent=11 // pred_region
        _
      $region56: #{_lambda_.1} parent=11 // pred_fallthru
        _
    $region12: #{_lambda_.1} parent=5 // pred_fallthru
      _
    %p349 = scmp.lt.s32.totalorder %s18, 2
    // Predicated region
    $region57: #{_lambda_.1} parent=5 // pred_check
      %p350 = pneg %p349
    $region58: #{_lambda_.1} parent=5 // pred_check_branch
      %352 = sbr.rel (%p350) target = $region60
    $region59: #{_lambda_.1} parent=5 // pred_region
      // Predicated region
      $region61: #{_lambda_.1} parent=59 // pred_check
        %p353 = pneg %p38
      $region62: #{_lambda_.1} parent=59 // pred_check_branch
        %355 = sbr.rel (%p353) target = $region64
      $region63: #{_lambda_.1} parent=59 // pred_region
        %p356 = scmp.lt.s32.totalorder %s18, 1
        %s357 = scalar_select %p356, %s18, 1
        %s358 = smul.addr %s357, 16
        %s359 = smul.addr %s358, 8
        %s360 = scalar_lea.vmem %s0, %s359
      $region64: #{_lambda_.1} parent=59 // pred_fallthru
        _
    $region60: #{_lambda_.1} parent=5 // pred_fallthru
      _
    %p361 = scmp.le.s32.totalorder 1, %s18
    %p362 = scmp.lt.s32.totalorder %s18, 3
    %p363 = pnand %p361, %p362
    %p364 = pneg %p363
    // Predicated region
    $region65: #{_lambda_.1} parent=5 // pred_check
      _
    $region66: #{_lambda_.1} parent=5 // pred_check_branch
      %366 = sbr.rel (%p363) target = $region68
    $region67: #{_lambda_.1} parent=5 // pred_region
      %s367 = ssub.s32 %s18, 1
      %p368 = scmp.lt.s32.totalorder %s23, 1
      %s369 = scalar_select %p368, %s23, 1
      %s370 = smul.addr %s369, 16
      %s371 = smul.addr %s370, 8
      %s372 = scalar_lea.vmem %s0, %s371
      %p373 = pneg %p44
      %p374 = pneg %p41
      %p375 = pneg %p65
      %p376 = pneg %p62
      %p377 = pneg %p86
      %p378 = pneg %p83
      %p379 = pneg %p107
      %p380 = pneg %p104
      %p381 = pneg %p128
      %p382 = pneg %p125
      %p383 = pneg %p149
      %p384 = pneg %p146
      %p385 = pneg %p170
      %p386 = pneg %p167
      %p387 = pneg %p191
      %p388 = pneg %p188
      %p389 = pneg %p212
      %p390 = pneg %p209
      %p391 = pneg %p233
      %p392 = pneg %p230
      %p393 = pneg %p254
      %p394 = pneg %p251
      %p395 = pneg %p275
      %p396 = pneg %p272
      %p397 = pneg %p301
      %p398 = pneg %p298
      %p399 = scmp.lt.s32.totalorder %s23, 1
      %s400 = scalar_select %p399, %s23, 1
      %s401 = smul.addr %s400, 2
      %s402 = smul.addr %s401, 8
      %s403 = scalar_lea.vmem %s12, %s402
      %p404 = scmp.lt.s32.totalorder %s23, 1
      %s405 = scalar_select %p404, %s23, 1
      %s406 = smul.addr %s405, 16
      %s407 = smul.addr %s406, 8
      %s408 = scalar_lea.vmem %s0, %s407
      %p409 = scmp.lt.s32.totalorder %s23, 1
      %s410 = scalar_select %p409, %s23, 1
      %s411 = smul.addr %s410, 2
      %s412 = smul.addr %s411, 8
      %s413 = scalar_lea.vmem %s12, %s412
      %v414 = vld [vmem:[%s1] sm:$0xff]
      %v415 = vld [vmem:[%s408] sm:$0xff]
      %v416 = vld [vmem:[%s408 + $0x8] sm:$0xff]
      %v417 = vld [vmem:[%s408 + $0x10] sm:$0xff]
      %v418 = vld [vmem:[%s408 + $0x18] sm:$0xff]
      %v419 = vld [vmem:[%s408 + $0x20] sm:$0xff]
      %v420 = vld [vmem:[%s408 + $0x28] sm:$0xff]
      %v421 = vld [vmem:[%s408 + $0x30] sm:$0xff]
      %v422 = vld [vmem:[%s408 + $0x38] sm:$0xff]
      %v423 = vld [vmem:[%s408 + $0x40] sm:$0xff]
      %v424 = vld [vmem:[%s408 + $0x48] sm:$0xff]
      %v425 = vld [vmem:[%s408 + $0x50] sm:$0xff]
      %v426 = vld [vmem:[%s408 + $0x58] sm:$0xff]
      %v427 = vld [vmem:[%s408 + $0x60] sm:$0xff]
      %v428 = vld [vmem:[%s408 + $0x68] sm:$0xff]
      %v429 = vld [vmem:[%s408 + $0x70] sm:$0xff]
      %v430 = vld [vmem:[%s408 + $0x78] sm:$0xff]
      %v431 = vld [vmem:[%s2] sm:$0xff]
      %433 = vset.pattern.permute.xlu0 0
      %434 = vperm.xlu0 %433, %v431
      %v435 = vpop.permute.xlu0 %434
      %vm437 = vcmask 523264
      %v439 = vsel %vm437, %v414, 0
      %441 = vmatpush.msra.mxu0 0.0
      %442 = vmatpush.msra.mxu0 0.0
      %443 = vmatpush.msra.mxu0 0.0
      %444 = vmatpush.msra.mxu0 0.0
      %445 = vmatpush.msra.mxu0 0.0
      %446 = vmatpush.msra.mxu0 0.0
      %447 = vmatpush.msra.mxu0 0.0
      %448 = vmatpush.msra.mxu0 0.0
      %449 = vmatpush.msra.mxu0 %v429
      %450 = vmatpush.msra.mxu0 %v427
      %451 = vmatpush.msra.mxu0 %v425
      %452 = vmatpush.msra.mxu0 %v423
      %453 = vmatpush.msra.mxu0 %v421
      %454 = vmatpush.msra.mxu0 %v419
      %455 = vmatpush.msra.mxu0 %v417
      %456 = vmatpush.msra.mxu0 %v415
      %457 = vmatmul.f32.gmra.mxu0 %v439
      %v458 = vpop.f32.mrf.mxu0
      %v459 = vadd.f32 %v435, %v458
      %460 = vdwg.mxu0
      %461 = vmatpush.msra.mxu0 0.0
      %462 = vmatpush.msra.mxu0 0.0
      %463 = vmatpush.msra.mxu0 0.0
      %464 = vmatpush.msra.mxu0 0.0
      %465 = vmatpush.msra.mxu0 0.0
      %466 = vmatpush.msra.mxu0 0.0
      %467 = vmatpush.msra.mxu0 0.0
      %468 = vmatpush.msra.mxu0 0.0
      %469 = vmatpush.msra.mxu0 %v430
      %470 = vmatpush.msra.mxu0 %v428
      %471 = vmatpush.msra.mxu0 %v426
      %472 = vmatpush.msra.mxu0 %v424
      %473 = vmatpush.msra.mxu0 %v422
      %474 = vmatpush.msra.mxu0 %v420
      %475 = vmatpush.msra.mxu0 %v418
      %476 = vmatpush.msra.mxu0 %v416
      %477 = vmatmul.f32.gmra.mxu0 %v439
      %v478 = vpop.f32.mrf.mxu0
      %v479 = vadd.f32 %v435, %v478
      %480 = vdwg.mxu0
      %v481 = vmax.f32 %v459, 0.0
      %v482 = vmax.f32 %v479, 0.0
      %v483 = vld [vmem:[%s3] sm:$0xff]
      %v484 = vld [vmem:[%s3 + $0x8] sm:$0xff]
      %v485 = vld [vmem:[%s3 + $0x10] sm:$0xff]
      %v486 = vld [vmem:[%s3 + $0x18] sm:$0xff]
      %v487 = vld [vmem:[%s3 + $0x20] sm:$0xff]
      %v488 = vld [vmem:[%s3 + $0x28] sm:$0xff]
      %v489 = vld [vmem:[%s3 + $0x30] sm:$0xff]
      %v490 = vld [vmem:[%s3 + $0x38] sm:$0xff]
      %v491 = vld [vmem:[%s3 + $0x40] sm:$0xff]
      %v492 = vld [vmem:[%s3 + $0x48] sm:$0xff]
      %v493 = vld [vmem:[%s3 + $0x50] sm:$0xff]
      %v494 = vld [vmem:[%s3 + $0x58] sm:$0xff]
      %v495 = vld [vmem:[%s3 + $0x60] sm:$0xff]
      %v496 = vld [vmem:[%s3 + $0x68] sm:$0xff]
      %v497 = vld [vmem:[%s3 + $0x70] sm:$0xff]
      %v498 = vld [vmem:[%s3 + $0x78] sm:$0xff]
      %v499 = vld [vmem:[%s3 + $0x80] sm:$0xff]
      %v500 = vld [vmem:[%s3 + $0x88] sm:$0xff]
      %v501 = vld [vmem:[%s3 + $0x90] sm:$0xff]
      %v502 = vld [vmem:[%s3 + $0x98] sm:$0xff]
      %v503 = vld [vmem:[%s3 + $0xa0] sm:$0xff]
      %v504 = vld [vmem:[%s3 + $0xa8] sm:$0xff]
      %v505 = vld [vmem:[%s3 + $0xb0] sm:$0xff]
      %v506 = vld [vmem:[%s3 + $0xb8] sm:$0xff]
      %v507 = vld [vmem:[%s3 + $0xc0] sm:$0xff]
      %v508 = vld [vmem:[%s3 + $0xc8] sm:$0xff]
      %v509 = vld [vmem:[%s3 + $0xd0] sm:$0xff]
      %v510 = vld [vmem:[%s3 + $0xd8] sm:$0xff]
      %v511 = vld [vmem:[%s3 + $0xe0] sm:$0xff]
      %v512 = vld [vmem:[%s3 + $0xe8] sm:$0xff]
      %v513 = vld [vmem:[%s3 + $0xf0] sm:$0xff]
      %v514 = vld [vmem:[%s3 + $0xf8] sm:$0xff]
      %515 = vmatpush.msra.mxu0 %v498
      %516 = vmatpush.msra.mxu0 %v497
      %517 = vmatpush.msra.mxu0 %v496
      %518 = vmatpush.msra.mxu0 %v495
      %519 = vmatpush.msra.mxu0 %v494
      %520 = vmatpush.msra.mxu0 %v493
      %521 = vmatpush.msra.mxu0 %v492
      %522 = vmatpush.msra.mxu0 %v491
      %523 = vmatpush.msra.mxu0 %v490
      %524 = vmatpush.msra.mxu0 %v489
      %525 = vmatpush.msra.mxu0 %v488
      %526 = vmatpush.msra.mxu0 %v487
      %527 = vmatpush.msra.mxu0 %v486
      %528 = vmatpush.msra.mxu0 %v485
      %529 = vmatpush.msra.mxu0 %v484
      %530 = vmatpush.msra.mxu0 %v483
      %531 = vmatmul.f32.gmra.mxu0 %v481
      %v532 = vpop.f32.mrf.mxu0
      %v533 = vadd.f32 0.0, %v532
      %534 = vdwg.mxu0
      %535 = vmatpush.msra.mxu0 %v514
      %536 = vmatpush.msra.mxu0 %v513
      %537 = vmatpush.msra.mxu0 %v512
      %538 = vmatpush.msra.mxu0 %v511
      %539 = vmatpush.msra.mxu0 %v510
      %540 = vmatpush.msra.mxu0 %v509
      %541 = vmatpush.msra.mxu0 %v508
      %542 = vmatpush.msra.mxu0 %v507
      %543 = vmatpush.msra.mxu0 %v506
      %544 = vmatpush.msra.mxu0 %v505
      %545 = vmatpush.msra.mxu0 %v504
      %546 = vmatpush.msra.mxu0 %v503
      %547 = vmatpush.msra.mxu0 %v502
      %548 = vmatpush.msra.mxu0 %v501
      %549 = vmatpush.msra.mxu0 %v500
      %550 = vmatpush.msra.mxu0 %v499
      %551 = vmatmul.f32.gmra.mxu0 %v482
      %v552 = vpop.f32.mrf.mxu0
      %v553 = vadd.f32 %v533, %v552
      %554 = vdwg.mxu0
      %v555 = vld [vmem:[%s4] sm:$0xff]
      %v556 = vld [vmem:[%s4 + $0x8] sm:$0xff]
      %s557 = scalar_lea.vmem %s3, 256
      %v558 = vld [vmem:[%s557] sm:$0xff]
      %v559 = vld [vmem:[%s557 + $0x8] sm:$0xff]
      %v560 = vld [vmem:[%s557 + $0x10] sm:$0xff]
      %v561 = vld [vmem:[%s557 + $0x18] sm:$0xff]
      %v562 = vld [vmem:[%s557 + $0x20] sm:$0xff]
      %v563 = vld [vmem:[%s557 + $0x28] sm:$0xff]
      %v564 = vld [vmem:[%s557 + $0x30] sm:$0xff]
      %v565 = vld [vmem:[%s557 + $0x38] sm:$0xff]
      %v566 = vld [vmem:[%s557 + $0x40] sm:$0xff]
      %v567 = vld [vmem:[%s557 + $0x48] sm:$0xff]
      %v568 = vld [vmem:[%s557 + $0x50] sm:$0xff]
      %v569 = vld [vmem:[%s557 + $0x58] sm:$0xff]
      %v570 = vld [vmem:[%s557 + $0x60] sm:$0xff]
      %v571 = vld [vmem:[%s557 + $0x68] sm:$0xff]
      %v572 = vld [vmem:[%s557 + $0x70] sm:$0xff]
      %v573 = vld [vmem:[%s557 + $0x78] sm:$0xff]
      %v574 = vld [vmem:[%s557 + $0x80] sm:$0xff]
      %v575 = vld [vmem:[%s557 + $0x88] sm:$0xff]
      %v576 = vld [vmem:[%s557 + $0x90] sm:$0xff]
      %v577 = vld [vmem:[%s557 + $0x98] sm:$0xff]
      %v578 = vld [vmem:[%s557 + $0xa0] sm:$0xff]
      %v579 = vld [vmem:[%s557 + $0xa8] sm:$0xff]
      %v580 = vld [vmem:[%s557 + $0xb0] sm:$0xff]
      %v581 = vld [vmem:[%s557 + $0xb8] sm:$0xff]
      %v582 = vld [vmem:[%s557 + $0xc0] sm:$0xff]
      %v583 = vld [vmem:[%s557 + $0xc8] sm:$0xff]
      %v584 = vld [vmem:[%s557 + $0xd0] sm:$0xff]
      %v585 = vld [vmem:[%s557 + $0xd8] sm:$0xff]
      %v586 = vld [vmem:[%s557 + $0xe0] sm:$0xff]
      %v587 = vld [vmem:[%s557 + $0xe8] sm:$0xff]
      %v588 = vld [vmem:[%s557 + $0xf0] sm:$0xff]
      %v589 = vld [vmem:[%s557 + $0xf8] sm:$0xff]
      %590 = vmatpush.msra.mxu0 %v573
      %591 = vmatpush.msra.mxu0 %v572
      %592 = vmatpush.msra.mxu0 %v571
      %593 = vmatpush.msra.mxu0 %v570
      %594 = vmatpush.msra.mxu0 %v569
      %595 = vmatpush.msra.mxu0 %v568
      %596 = vmatpush.msra.mxu0 %v567
      %597 = vmatpush.msra.mxu0 %v566
      %598 = vmatpush.msra.mxu0 %v565
      %599 = vmatpush.msra.mxu0 %v564
      %600 = vmatpush.msra.mxu0 %v563
      %601 = vmatpush.msra.mxu0 %v562
      %602 = vmatpush.msra.mxu0 %v561
      %603 = vmatpush.msra.mxu0 %v560
      %604 = vmatpush.msra.mxu0 %v559
      %605 = vmatpush.msra.mxu0 %v558
      %606 = vmatmul.f32.gmra.mxu0 %v481
      %v607 = vpop.f32.mrf.mxu0
      %v608 = vadd.f32 0.0, %v607
      %609 = vdwg.mxu0
      %610 = vmatpush.msra.mxu0 %v589
      %611 = vmatpush.msra.mxu0 %v588
      %612 = vmatpush.msra.mxu0 %v587
      %613 = vmatpush.msra.mxu0 %v586
      %614 = vmatpush.msra.mxu0 %v585
      %615 = vmatpush.msra.mxu0 %v584
      %616 = vmatpush.msra.mxu0 %v583
      %617 = vmatpush.msra.mxu0 %v582
      %618 = vmatpush.msra.mxu0 %v581
      %619 = vmatpush.msra.mxu0 %v580
      %620 = vmatpush.msra.mxu0 %v579
      %621 = vmatpush.msra.mxu0 %v578
      %622 = vmatpush.msra.mxu0 %v577
      %623 = vmatpush.msra.mxu0 %v576
      %624 = vmatpush.msra.mxu0 %v575
      %625 = vmatpush.msra.mxu0 %v574
      %626 = vmatmul.f32.gmra.mxu0 %v482
      %v627 = vpop.f32.mrf.mxu0
      %v628 = vadd.f32 %v608, %v627
      %629 = vdwg.mxu0
      %s630 = scalar_lea.vmem %s4, 16
      %v631 = vld [vmem:[%s630] sm:$0xff]
      %v632 = vld [vmem:[%s630 + $0x8] sm:$0xff]
      %vm633 = vcmask 64512
      %v635 = vsel %vm633, %v631, 0
      %v638 = vsel %vm633, %v632, 0
      %640 = vmatpush.msra.mxu0 0.0
      %641 = vmatpush.msra.mxu0 0.0
      %642 = vmatpush.msra.mxu0 0.0
      %643 = vmatpush.msra.mxu0 0.0
      %644 = vmatpush.msra.mxu0 0.0
      %645 = vmatpush.msra.mxu0 0.0
      %646 = vmatpush.msra.mxu0 0.0
      %647 = vmatpush.msra.mxu0 0.0
      %648 = vmatpush.msra.mxu0 0.0
      %649 = vmatpush.msra.mxu0 0.0
      %650 = vmatpush.msra.mxu0 0.0
      %651 = vmatpush.msra.mxu0 0.0
      %652 = vmatpush.msra.mxu0 0.0
      %653 = vmatpush.msra.mxu0 0.0
      %654 = vmatpush.msra.mxu0 0.0
      %655 = vmatpush.msra.mxu0 %v628
      %656 = vmatmul.f32.gmra.mxu0 %v635
      %v657 = vpop.f32.mrf.mxu0
      %v658 = vadd.f32 0.0, %v657
      %659 = vmatmul.f32.gmra.mxu0 %v638
      %v660 = vpop.f32.mrf.mxu0
      %v661 = vadd.f32 0.0, %v660
      %662 = vdwg.mxu0
      %v664 = vsel %vm633, %v555, 0
      %v667 = vsel %vm633, %v556, 0
      %669 = vmatpush.msra.mxu0 0.0
      %670 = vmatpush.msra.mxu0 0.0
      %671 = vmatpush.msra.mxu0 0.0
      %672 = vmatpush.msra.mxu0 0.0
      %673 = vmatpush.msra.mxu0 0.0
      %674 = vmatpush.msra.mxu0 0.0
      %675 = vmatpush.msra.mxu0 0.0
      %676 = vmatpush.msra.mxu0 0.0
      %677 = vmatpush.msra.mxu0 0.0
      %678 = vmatpush.msra.mxu0 0.0
      %679 = vmatpush.msra.mxu0 0.0
      %680 = vmatpush.msra.mxu0 0.0
      %681 = vmatpush.msra.mxu0 0.0
      %682 = vmatpush.msra.mxu0 0.0
      %683 = vmatpush.msra.mxu0 0.0
      %684 = vmatpush.msra.mxu0 %v553
      %685 = vmatmul.f32.gmra.mxu0 %v664
      %v686 = vpop.f32.mrf.mxu0
      %v687 = vadd.f32 %v658, %v686
      %688 = vmatmul.f32.gmra.mxu0 %v667
      %v689 = vpop.f32.mrf.mxu0
      %v690 = vadd.f32 %v661, %v689
      %691 = vdwg.mxu0
      %s692 = scalar_lea.vmem %s3, 512
      %v693 = vld [vmem:[%s692] sm:$0xff]
      %v694 = vld [vmem:[%s692 + $0x8] sm:$0xff]
      %v695 = vld [vmem:[%s692 + $0x10] sm:$0xff]
      %v696 = vld [vmem:[%s692 + $0x18] sm:$0xff]
      %v697 = vld [vmem:[%s692 + $0x20] sm:$0xff]
      %v698 = vld [vmem:[%s692 + $0x28] sm:$0xff]
      %v699 = vld [vmem:[%s692 + $0x30] sm:$0xff]
      %v700 = vld [vmem:[%s692 + $0x38] sm:$0xff]
      %v701 = vld [vmem:[%s692 + $0x40] sm:$0xff]
      %v702 = vld [vmem:[%s692 + $0x48] sm:$0xff]
      %v703 = vld [vmem:[%s692 + $0x50] sm:$0xff]
      %v704 = vld [vmem:[%s692 + $0x58] sm:$0xff]
      %v705 = vld [vmem:[%s692 + $0x60] sm:$0xff]
      %v706 = vld [vmem:[%s692 + $0x68] sm:$0xff]
      %v707 = vld [vmem:[%s692 + $0x70] sm:$0xff]
      %v708 = vld [vmem:[%s692 + $0x78] sm:$0xff]
      %v709 = vld [vmem:[%s692 + $0x80] sm:$0xff]
      %v710 = vld [vmem:[%s692 + $0x88] sm:$0xff]
      %v711 = vld [vmem:[%s692 + $0x90] sm:$0xff]
      %v712 = vld [vmem:[%s692 + $0x98] sm:$0xff]
      %v713 = vld [vmem:[%s692 + $0xa0] sm:$0xff]
      %v714 = vld [vmem:[%s692 + $0xa8] sm:$0xff]
      %v715 = vld [vmem:[%s692 + $0xb0] sm:$0xff]
      %v716 = vld [vmem:[%s692 + $0xb8] sm:$0xff]
      %v717 = vld [vmem:[%s692 + $0xc0] sm:$0xff]
      %v718 = vld [vmem:[%s692 + $0xc8] sm:$0xff]
      %v719 = vld [vmem:[%s692 + $0xd0] sm:$0xff]
      %v720 = vld [vmem:[%s692 + $0xd8] sm:$0xff]
      %v721 = vld [vmem:[%s692 + $0xe0] sm:$0xff]
      %v722 = vld [vmem:[%s692 + $0xe8] sm:$0xff]
      %v723 = vld [vmem:[%s692 + $0xf0] sm:$0xff]
      %v724 = vld [vmem:[%s692 + $0xf8] sm:$0xff]
      %725 = vmatpush.msra.mxu0 %v708
      %726 = vmatpush.msra.mxu0 %v707
      %727 = vmatpush.msra.mxu0 %v706
      %728 = vmatpush.msra.mxu0 %v705
      %729 = vmatpush.msra.mxu0 %v704
      %730 = vmatpush.msra.mxu0 %v703
      %731 = vmatpush.msra.mxu0 %v702
      %732 = vmatpush.msra.mxu0 %v701
      %733 = vmatpush.msra.mxu0 %v700
      %734 = vmatpush.msra.mxu0 %v699
      %735 = vmatpush.msra.mxu0 %v698
      %736 = vmatpush.msra.mxu0 %v697
      %737 = vmatpush.msra.mxu0 %v696
      %738 = vmatpush.msra.mxu0 %v695
      %739 = vmatpush.msra.mxu0 %v694
      %740 = vmatpush.msra.mxu0 %v693
      %741 = vmatmul.f32.gmra.mxu0 %v481
      %v742 = vpop.f32.mrf.mxu0
      %v743 = vadd.f32 0.0, %v742
      %744 = vdwg.mxu0
      %745 = vmatpush.msra.mxu0 %v724
      %746 = vmatpush.msra.mxu0 %v723
      %747 = vmatpush.msra.mxu0 %v722
      %748 = vmatpush.msra.mxu0 %v721
      %749 = vmatpush.msra.mxu0 %v720
      %750 = vmatpush.msra.mxu0 %v719
      %751 = vmatpush.msra.mxu0 %v718
      %752 = vmatpush.msra.mxu0 %v717
      %753 = vmatpush.msra.mxu0 %v716
      %754 = vmatpush.msra.mxu0 %v715
      %755 = vmatpush.msra.mxu0 %v714
      %756 = vmatpush.msra.mxu0 %v713
      %757 = vmatpush.msra.mxu0 %v712
      %758 = vmatpush.msra.mxu0 %v711
      %759 = vmatpush.msra.mxu0 %v710
      %760 = vmatpush.msra.mxu0 %v709
      %761 = vmatmul.f32.gmra.mxu0 %v482
      %v762 = vpop.f32.mrf.mxu0
      %v763 = vadd.f32 %v743, %v762
      %764 = vdwg.mxu0
      %s765 = scalar_lea.vmem %s4, 32
      %v766 = vld [vmem:[%s765] sm:$0xff]
      %v767 = vld [vmem:[%s765 + $0x8] sm:$0xff]
      %v769 = vsel %vm633, %v766, 0
      %v772 = vsel %vm633, %v767, 0
      %774 = vmatpush.msra.mxu0 0.0
      %775 = vmatpush.msra.mxu0 0.0
      %776 = vmatpush.msra.mxu0 0.0
      %777 = vmatpush.msra.mxu0 0.0
      %778 = vmatpush.msra.mxu0 0.0
      %779 = vmatpush.msra.mxu0 0.0
      %780 = vmatpush.msra.mxu0 0.0
      %781 = vmatpush.msra.mxu0 0.0
      %782 = vmatpush.msra.mxu0 0.0
      %783 = vmatpush.msra.mxu0 0.0
      %784 = vmatpush.msra.mxu0 0.0
      %785 = vmatpush.msra.mxu0 0.0
      %786 = vmatpush.msra.mxu0 0.0
      %787 = vmatpush.msra.mxu0 0.0
      %788 = vmatpush.msra.mxu0 0.0
      %789 = vmatpush.msra.mxu0 %v763
      %790 = vmatmul.f32.gmra.mxu0 %v769
      %v791 = vpop.f32.mrf.mxu0
      %v792 = vadd.f32 0.0, %v791
      %793 = vmatmul.f32.gmra.mxu0 %v772
      %v794 = vpop.f32.mrf.mxu0
      %v795 = vadd.f32 0.0, %v794
      %796 = vdwg.mxu0
      %v797 = vadd.f32 %v687, %v792
      %v798 = vadd.f32 %v690, %v795
      %s799 = scalar_lea.vmem %s3, 768
      %v800 = vld [vmem:[%s799] sm:$0xff]
      %v801 = vld [vmem:[%s799 + $0x8] sm:$0xff]
      %v802 = vld [vmem:[%s799 + $0x10] sm:$0xff]
      %v803 = vld [vmem:[%s799 + $0x18] sm:$0xff]
      %v804 = vld [vmem:[%s799 + $0x20] sm:$0xff]
      %v805 = vld [vmem:[%s799 + $0x28] sm:$0xff]
      %v806 = vld [vmem:[%s799 + $0x30] sm:$0xff]
      %v807 = vld [vmem:[%s799 + $0x38] sm:$0xff]
      %v808 = vld [vmem:[%s799 + $0x40] sm:$0xff]
      %v809 = vld [vmem:[%s799 + $0x48] sm:$0xff]
      %v810 = vld [vmem:[%s799 + $0x50] sm:$0xff]
      %v811 = vld [vmem:[%s799 + $0x58] sm:$0xff]
      %v812 = vld [vmem:[%s799 + $0x60] sm:$0xff]
      %v813 = vld [vmem:[%s799 + $0x68] sm:$0xff]
      %v814 = vld [vmem:[%s799 + $0x70] sm:$0xff]
      %v815 = vld [vmem:[%s799 + $0x78] sm:$0xff]
      %v816 = vld [vmem:[%s799 + $0x80] sm:$0xff]
      %v817 = vld [vmem:[%s799 + $0x88] sm:$0xff]
      %v818 = vld [vmem:[%s799 + $0x90] sm:$0xff]
      %v819 = vld [vmem:[%s799 + $0x98] sm:$0xff]
      %v820 = vld [vmem:[%s799 + $0xa0] sm:$0xff]
      %v821 = vld [vmem:[%s799 + $0xa8] sm:$0xff]
      %v822 = vld [vmem:[%s799 + $0xb0] sm:$0xff]
      %v823 = vld [vmem:[%s799 + $0xb8] sm:$0xff]
      %v824 = vld [vmem:[%s799 + $0xc0] sm:$0xff]
      %v825 = vld [vmem:[%s799 + $0xc8] sm:$0xff]
      %v826 = vld [vmem:[%s799 + $0xd0] sm:$0xff]
      %v827 = vld [vmem:[%s799 + $0xd8] sm:$0xff]
      %v828 = vld [vmem:[%s799 + $0xe0] sm:$0xff]
      %v829 = vld [vmem:[%s799 + $0xe8] sm:$0xff]
      %v830 = vld [vmem:[%s799 + $0xf0] sm:$0xff]
      %v831 = vld [vmem:[%s799 + $0xf8] sm:$0xff]
      %832 = vmatpush.msra.mxu0 %v815
      %833 = vmatpush.msra.mxu0 %v814
      %834 = vmatpush.msra.mxu0 %v813
      %835 = vmatpush.msra.mxu0 %v812
      %836 = vmatpush.msra.mxu0 %v811
      %837 = vmatpush.msra.mxu0 %v810
      %838 = vmatpush.msra.mxu0 %v809
      %839 = vmatpush.msra.mxu0 %v808
      %840 = vmatpush.msra.mxu0 %v807
      %841 = vmatpush.msra.mxu0 %v806
      %842 = vmatpush.msra.mxu0 %v805
      %843 = vmatpush.msra.mxu0 %v804
      %844 = vmatpush.msra.mxu0 %v803
      %845 = vmatpush.msra.mxu0 %v802
      %846 = vmatpush.msra.mxu0 %v801
      %847 = vmatpush.msra.mxu0 %v800
      %848 = vmatmul.f32.gmra.mxu0 %v481
      %v849 = vpop.f32.mrf.mxu0
      %v850 = vadd.f32 0.0, %v849
      %851 = vdwg.mxu0
      %852 = vmatpush.msra.mxu0 %v831
      %853 = vmatpush.msra.mxu0 %v830
      %854 = vmatpush.msra.mxu0 %v829
      %855 = vmatpush.msra.mxu0 %v828
      %856 = vmatpush.msra.mxu0 %v827
      %857 = vmatpush.msra.mxu0 %v826
      %858 = vmatpush.msra.mxu0 %v825
      %859 = vmatpush.msra.mxu0 %v824
      %860 = vmatpush.msra.mxu0 %v823
      %861 = vmatpush.msra.mxu0 %v822
      %862 = vmatpush.msra.mxu0 %v821
      %863 = vmatpush.msra.mxu0 %v820
      %864 = vmatpush.msra.mxu0 %v819
      %865 = vmatpush.msra.mxu0 %v818
      %866 = vmatpush.msra.mxu0 %v817
      %867 = vmatpush.msra.mxu0 %v816
      %868 = vmatmul.f32.gmra.mxu0 %v482
      %v869 = vpop.f32.mrf.mxu0
      %v870 = vadd.f32 %v850, %v869
      %871 = vdwg.mxu0
      %s872 = scalar_lea.vmem %s4, 48
      %v873 = vld [vmem:[%s872] sm:$0xff]
      %v874 = vld [vmem:[%s872 + $0x8] sm:$0xff]
      %v876 = vsel %vm633, %v873, 0
      %v879 = vsel %vm633, %v874, 0
      %881 = vmatpush.msra.mxu0 0.0
      %882 = vmatpush.msra.mxu0 0.0
      %883 = vmatpush.msra.mxu0 0.0
      %884 = vmatpush.msra.mxu0 0.0
      %885 = vmatpush.msra.mxu0 0.0
      %886 = vmatpush.msra.mxu0 0.0
      %887 = vmatpush.msra.mxu0 0.0
      %888 = vmatpush.msra.mxu0 0.0
      %889 = vmatpush.msra.mxu0 0.0
      %890 = vmatpush.msra.mxu0 0.0
      %891 = vmatpush.msra.mxu0 0.0
      %892 = vmatpush.msra.mxu0 0.0
      %893 = vmatpush.msra.mxu0 0.0
      %894 = vmatpush.msra.mxu0 0.0
      %895 = vmatpush.msra.mxu0 0.0
      %896 = vmatpush.msra.mxu0 %v870
      %897 = vmatmul.f32.gmra.mxu0 %v876
      %v898 = vpop.f32.mrf.mxu0
      %v899 = vadd.f32 0.0, %v898
      %900 = vmatmul.f32.gmra.mxu0 %v879
      %v901 = vpop.f32.mrf.mxu0
      %v902 = vadd.f32 0.0, %v901
      %903 = vdwg.mxu0
      %v904 = vadd.f32 %v797, %v899
      %v905 = vadd.f32 %v798, %v902
      %s906 = scalar_lea.vmem %s3, 1024
      %v907 = vld [vmem:[%s906] sm:$0xff]
      %v908 = vld [vmem:[%s906 + $0x8] sm:$0xff]
      %v909 = vld [vmem:[%s906 + $0x10] sm:$0xff]
      %v910 = vld [vmem:[%s906 + $0x18] sm:$0xff]
      %v911 = vld [vmem:[%s906 + $0x20] sm:$0xff]
      %v912 = vld [vmem:[%s906 + $0x28] sm:$0xff]
      %v913 = vld [vmem:[%s906 + $0x30] sm:$0xff]
      %v914 = vld [vmem:[%s906 + $0x38] sm:$0xff]
      %v915 = vld [vmem:[%s906 + $0x40] sm:$0xff]
      %v916 = vld [vmem:[%s906 + $0x48] sm:$0xff]
      %v917 = vld [vmem:[%s906 + $0x50] sm:$0xff]
      %v918 = vld [vmem:[%s906 + $0x58] sm:$0xff]
      %v919 = vld [vmem:[%s906 + $0x60] sm:$0xff]
      %v920 = vld [vmem:[%s906 + $0x68] sm:$0xff]
      %v921 = vld [vmem:[%s906 + $0x70] sm:$0xff]
      %v922 = vld [vmem:[%s906 + $0x78] sm:$0xff]
      %v923 = vld [vmem:[%s906 + $0x80] sm:$0xff]
      %v924 = vld [vmem:[%s906 + $0x88] sm:$0xff]
      %v925 = vld [vmem:[%s906 + $0x90] sm:$0xff]
      %v926 = vld [vmem:[%s906 + $0x98] sm:$0xff]
      %v927 = vld [vmem:[%s906 + $0xa0] sm:$0xff]
      %v928 = vld [vmem:[%s906 + $0xa8] sm:$0xff]
      %v929 = vld [vmem:[%s906 + $0xb0] sm:$0xff]
      %v930 = vld [vmem:[%s906 + $0xb8] sm:$0xff]
      %v931 = vld [vmem:[%s906 + $0xc0] sm:$0xff]
      %v932 = vld [vmem:[%s906 + $0xc8] sm:$0xff]
      %v933 = vld [vmem:[%s906 + $0xd0] sm:$0xff]
      %v934 = vld [vmem:[%s906 + $0xd8] sm:$0xff]
      %v935 = vld [vmem:[%s906 + $0xe0] sm:$0xff]
      %v936 = vld [vmem:[%s906 + $0xe8] sm:$0xff]
      %v937 = vld [vmem:[%s906 + $0xf0] sm:$0xff]
      %v938 = vld [vmem:[%s906 + $0xf8] sm:$0xff]
      %939 = vmatpush.msra.mxu0 %v922
      %940 = vmatpush.msra.mxu0 %v921
      %941 = vmatpush.msra.mxu0 %v920
      %942 = vmatpush.msra.mxu0 %v919
      %943 = vmatpush.msra.mxu0 %v918
      %944 = vmatpush.msra.mxu0 %v917
      %945 = vmatpush.msra.mxu0 %v916
      %946 = vmatpush.msra.mxu0 %v915
      %947 = vmatpush.msra.mxu0 %v914
      %948 = vmatpush.msra.mxu0 %v913
      %949 = vmatpush.msra.mxu0 %v912
      %950 = vmatpush.msra.mxu0 %v911
      %951 = vmatpush.msra.mxu0 %v910
      %952 = vmatpush.msra.mxu0 %v909
      %953 = vmatpush.msra.mxu0 %v908
      %954 = vmatpush.msra.mxu0 %v907
      %955 = vmatmul.f32.gmra.mxu0 %v481
      %v956 = vpop.f32.mrf.mxu0
      %v957 = vadd.f32 0.0, %v956
      %958 = vdwg.mxu0
      %959 = vmatpush.msra.mxu0 %v938
      %960 = vmatpush.msra.mxu0 %v937
      %961 = vmatpush.msra.mxu0 %v936
      %962 = vmatpush.msra.mxu0 %v935
      %963 = vmatpush.msra.mxu0 %v934
      %964 = vmatpush.msra.mxu0 %v933
      %965 = vmatpush.msra.mxu0 %v932
      %966 = vmatpush.msra.mxu0 %v931
      %967 = vmatpush.msra.mxu0 %v930
      %968 = vmatpush.msra.mxu0 %v929
      %969 = vmatpush.msra.mxu0 %v928
      %970 = vmatpush.msra.mxu0 %v927
      %971 = vmatpush.msra.mxu0 %v926
      %972 = vmatpush.msra.mxu0 %v925
      %973 = vmatpush.msra.mxu0 %v924
      %974 = vmatpush.msra.mxu0 %v923
      %975 = vmatmul.f32.gmra.mxu0 %v482
      %v976 = vpop.f32.mrf.mxu0
      %v977 = vadd.f32 %v957, %v976
      %978 = vdwg.mxu0
      %s979 = scalar_lea.vmem %s4, 64
      %v980 = vld [vmem:[%s979] sm:$0xff]
      %v981 = vld [vmem:[%s979 + $0x8] sm:$0xff]
      %v983 = vsel %vm633, %v980, 0
      %v986 = vsel %vm633, %v981, 0
      %988 = vmatpush.msra.mxu0 0.0
      %989 = vmatpush.msra.mxu0 0.0
      %990 = vmatpush.msra.mxu0 0.0
      %991 = vmatpush.msra.mxu0 0.0
      %992 = vmatpush.msra.mxu0 0.0
      %993 = vmatpush.msra.mxu0 0.0
      %994 = vmatpush.msra.mxu0 0.0
      %995 = vmatpush.msra.mxu0 0.0
      %996 = vmatpush.msra.mxu0 0.0
      %997 = vmatpush.msra.mxu0 0.0
      %998 = vmatpush.msra.mxu0 0.0
      %999 = vmatpush.msra.mxu0 0.0
      %1000 = vmatpush.msra.mxu0 0.0
      %1001 = vmatpush.msra.mxu0 0.0
      %1002 = vmatpush.msra.mxu0 0.0
      %1003 = vmatpush.msra.mxu0 %v977
      %1004 = vmatmul.f32.gmra.mxu0 %v983
      %v1005 = vpop.f32.mrf.mxu0
      %v1006 = vadd.f32 0.0, %v1005
      %1007 = vmatmul.f32.gmra.mxu0 %v986
      %v1008 = vpop.f32.mrf.mxu0
      %v1009 = vadd.f32 0.0, %v1008
      %1010 = vdwg.mxu0
      %v1011 = vadd.f32 %v904, %v1006
      %v1012 = vadd.f32 %v905, %v1009
      %s1013 = scalar_lea.vmem %s3, 1280
      %v1014 = vld [vmem:[%s1013] sm:$0xff]
      %v1015 = vld [vmem:[%s1013 + $0x8] sm:$0xff]
      %v1016 = vld [vmem:[%s1013 + $0x10] sm:$0xff]
      %v1017 = vld [vmem:[%s1013 + $0x18] sm:$0xff]
      %v1018 = vld [vmem:[%s1013 + $0x20] sm:$0xff]
      %v1019 = vld [vmem:[%s1013 + $0x28] sm:$0xff]
      %v1020 = vld [vmem:[%s1013 + $0x30] sm:$0xff]
      %v1021 = vld [vmem:[%s1013 + $0x38] sm:$0xff]
      %v1022 = vld [vmem:[%s1013 + $0x40] sm:$0xff]
      %v1023 = vld [vmem:[%s1013 + $0x48] sm:$0xff]
      %v1024 = vld [vmem:[%s1013 + $0x50] sm:$0xff]
      %v1025 = vld [vmem:[%s1013 + $0x58] sm:$0xff]
      %v1026 = vld [vmem:[%s1013 + $0x60] sm:$0xff]
      %v1027 = vld [vmem:[%s1013 + $0x68] sm:$0xff]
      %v1028 = vld [vmem:[%s1013 + $0x70] sm:$0xff]
      %v1029 = vld [vmem:[%s1013 + $0x78] sm:$0xff]
      %v1030 = vld [vmem:[%s1013 + $0x80] sm:$0xff]
      %v1031 = vld [vmem:[%s1013 + $0x88] sm:$0xff]
      %v1032 = vld [vmem:[%s1013 + $0x90] sm:$0xff]
      %v1033 = vld [vmem:[%s1013 + $0x98] sm:$0xff]
      %v1034 = vld [vmem:[%s1013 + $0xa0] sm:$0xff]
      %v1035 = vld [vmem:[%s1013 + $0xa8] sm:$0xff]
      %v1036 = vld [vmem:[%s1013 + $0xb0] sm:$0xff]
      %v1037 = vld [vmem:[%s1013 + $0xb8] sm:$0xff]
      %v1038 = vld [vmem:[%s1013 + $0xc0] sm:$0xff]
      %v1039 = vld [vmem:[%s1013 + $0xc8] sm:$0xff]
      %v1040 = vld [vmem:[%s1013 + $0xd0] sm:$0xff]
      %v1041 = vld [vmem:[%s1013 + $0xd8] sm:$0xff]
      %v1042 = vld [vmem:[%s1013 + $0xe0] sm:$0xff]
      %v1043 = vld [vmem:[%s1013 + $0xe8] sm:$0xff]
      %v1044 = vld [vmem:[%s1013 + $0xf0] sm:$0xff]
      %v1045 = vld [vmem:[%s1013 + $0xf8] sm:$0xff]
      %1046 = vmatpush.msra.mxu0 %v1029
      %1047 = vmatpush.msra.mxu0 %v1028
      %1048 = vmatpush.msra.mxu0 %v1027
      %1049 = vmatpush.msra.mxu0 %v1026
      %1050 = vmatpush.msra.mxu0 %v1025
      %1051 = vmatpush.msra.mxu0 %v1024
      %1052 = vmatpush.msra.mxu0 %v1023
      %1053 = vmatpush.msra.mxu0 %v1022
      %1054 = vmatpush.msra.mxu0 %v1021
      %1055 = vmatpush.msra.mxu0 %v1020
      %1056 = vmatpush.msra.mxu0 %v1019
      %1057 = vmatpush.msra.mxu0 %v1018
      %1058 = vmatpush.msra.mxu0 %v1017
      %1059 = vmatpush.msra.mxu0 %v1016
      %1060 = vmatpush.msra.mxu0 %v1015
      %1061 = vmatpush.msra.mxu0 %v1014
      %1062 = vmatmul.f32.gmra.mxu0 %v481
      %v1063 = vpop.f32.mrf.mxu0
      %v1064 = vadd.f32 0.0, %v1063
      %1065 = vdwg.mxu0
      %1066 = vmatpush.msra.mxu0 %v1045
      %1067 = vmatpush.msra.mxu0 %v1044
      %1068 = vmatpush.msra.mxu0 %v1043
      %1069 = vmatpush.msra.mxu0 %v1042
      %1070 = vmatpush.msra.mxu0 %v1041
      %1071 = vmatpush.msra.mxu0 %v1040
      %1072 = vmatpush.msra.mxu0 %v1039
      %1073 = vmatpush.msra.mxu0 %v1038
      %1074 = vmatpush.msra.mxu0 %v1037
      %1075 = vmatpush.msra.mxu0 %v1036
      %1076 = vmatpush.msra.mxu0 %v1035
      %1077 = vmatpush.msra.mxu0 %v1034
      %1078 = vmatpush.msra.mxu0 %v1033
      %1079 = vmatpush.msra.mxu0 %v1032
      %1080 = vmatpush.msra.mxu0 %v1031
      %1081 = vmatpush.msra.mxu0 %v1030
      %1082 = vmatmul.f32.gmra.mxu0 %v482
      %v1083 = vpop.f32.mrf.mxu0
      %v1084 = vadd.f32 %v1064, %v1083
      %1085 = vdwg.mxu0
      %s1086 = scalar_lea.vmem %s4, 80
      %v1087 = vld [vmem:[%s1086] sm:$0xff]
      %v1088 = vld [vmem:[%s1086 + $0x8] sm:$0xff]
      %v1090 = vsel %vm633, %v1087, 0
      %v1093 = vsel %vm633, %v1088, 0
      %1095 = vmatpush.msra.mxu0 0.0
      %1096 = vmatpush.msra.mxu0 0.0
      %1097 = vmatpush.msra.mxu0 0.0
      %1098 = vmatpush.msra.mxu0 0.0
      %1099 = vmatpush.msra.mxu0 0.0
      %1100 = vmatpush.msra.mxu0 0.0
      %1101 = vmatpush.msra.mxu0 0.0
      %1102 = vmatpush.msra.mxu0 0.0
      %1103 = vmatpush.msra.mxu0 0.0
      %1104 = vmatpush.msra.mxu0 0.0
      %1105 = vmatpush.msra.mxu0 0.0
      %1106 = vmatpush.msra.mxu0 0.0
      %1107 = vmatpush.msra.mxu0 0.0
      %1108 = vmatpush.msra.mxu0 0.0
      %1109 = vmatpush.msra.mxu0 0.0
      %1110 = vmatpush.msra.mxu0 %v1084
      %1111 = vmatmul.f32.gmra.mxu0 %v1090
      %v1112 = vpop.f32.mrf.mxu0
      %v1113 = vadd.f32 0.0, %v1112
      %1114 = vmatmul.f32.gmra.mxu0 %v1093
      %v1115 = vpop.f32.mrf.mxu0
      %v1116 = vadd.f32 0.0, %v1115
      %1117 = vdwg.mxu0
      %v1118 = vadd.f32 %v1011, %v1113
      %v1119 = vadd.f32 %v1012, %v1116
      %s1120 = scalar_lea.vmem %s3, 1536
      %v1121 = vld [vmem:[%s1120] sm:$0xff]
      %v1122 = vld [vmem:[%s1120 + $0x8] sm:$0xff]
      %v1123 = vld [vmem:[%s1120 + $0x10] sm:$0xff]
      %v1124 = vld [vmem:[%s1120 + $0x18] sm:$0xff]
      %v1125 = vld [vmem:[%s1120 + $0x20] sm:$0xff]
      %v1126 = vld [vmem:[%s1120 + $0x28] sm:$0xff]
      %v1127 = vld [vmem:[%s1120 + $0x30] sm:$0xff]
      %v1128 = vld [vmem:[%s1120 + $0x38] sm:$0xff]
      %v1129 = vld [vmem:[%s1120 + $0x40] sm:$0xff]
      %v1130 = vld [vmem:[%s1120 + $0x48] sm:$0xff]
      %v1131 = vld [vmem:[%s1120 + $0x50] sm:$0xff]
      %v1132 = vld [vmem:[%s1120 + $0x58] sm:$0xff]
      %v1133 = vld [vmem:[%s1120 + $0x60] sm:$0xff]
      %v1134 = vld [vmem:[%s1120 + $0x68] sm:$0xff]
      %v1135 = vld [vmem:[%s1120 + $0x70] sm:$0xff]
      %v1136 = vld [vmem:[%s1120 + $0x78] sm:$0xff]
      %v1137 = vld [vmem:[%s1120 + $0x80] sm:$0xff]
      %v1138 = vld [vmem:[%s1120 + $0x88] sm:$0xff]
      %v1139 = vld [vmem:[%s1120 + $0x90] sm:$0xff]
      %v1140 = vld [vmem:[%s1120 + $0x98] sm:$0xff]
      %v1141 = vld [vmem:[%s1120 + $0xa0] sm:$0xff]
      %v1142 = vld [vmem:[%s1120 + $0xa8] sm:$0xff]
      %v1143 = vld [vmem:[%s1120 + $0xb0] sm:$0xff]
      %v1144 = vld [vmem:[%s1120 + $0xb8] sm:$0xff]
      %v1145 = vld [vmem:[%s1120 + $0xc0] sm:$0xff]
      %v1146 = vld [vmem:[%s1120 + $0xc8] sm:$0xff]
      %v1147 = vld [vmem:[%s1120 + $0xd0] sm:$0xff]
      %v1148 = vld [vmem:[%s1120 + $0xd8] sm:$0xff]
      %v1149 = vld [vmem:[%s1120 + $0xe0] sm:$0xff]
      %v1150 = vld [vmem:[%s1120 + $0xe8] sm:$0xff]
      %v1151 = vld [vmem:[%s1120 + $0xf0] sm:$0xff]
      %v1152 = vld [vmem:[%s1120 + $0xf8] sm:$0xff]
      %1153 = vmatpush.msra.mxu0 %v1136
      %1154 = vmatpush.msra.mxu0 %v1135
      %1155 = vmatpush.msra.mxu0 %v1134
      %1156 = vmatpush.msra.mxu0 %v1133
      %1157 = vmatpush.msra.mxu0 %v1132
      %1158 = vmatpush.msra.mxu0 %v1131
      %1159 = vmatpush.msra.mxu0 %v1130
      %1160 = vmatpush.msra.mxu0 %v1129
      %1161 = vmatpush.msra.mxu0 %v1128
      %1162 = vmatpush.msra.mxu0 %v1127
      %1163 = vmatpush.msra.mxu0 %v1126
      %1164 = vmatpush.msra.mxu0 %v1125
      %1165 = vmatpush.msra.mxu0 %v1124
      %1166 = vmatpush.msra.mxu0 %v1123
      %1167 = vmatpush.msra.mxu0 %v1122
      %1168 = vmatpush.msra.mxu0 %v1121
      %1169 = vmatmul.f32.gmra.mxu0 %v481
      %v1170 = vpop.f32.mrf.mxu0
      %v1171 = vadd.f32 0.0, %v1170
      %1172 = vdwg.mxu0
      %1173 = vmatpush.msra.mxu0 %v1152
      %1174 = vmatpush.msra.mxu0 %v1151
      %1175 = vmatpush.msra.mxu0 %v1150
      %1176 = vmatpush.msra.mxu0 %v1149
      %1177 = vmatpush.msra.mxu0 %v1148
      %1178 = vmatpush.msra.mxu0 %v1147
      %1179 = vmatpush.msra.mxu0 %v1146
      %1180 = vmatpush.msra.mxu0 %v1145
      %1181 = vmatpush.msra.mxu0 %v1144
      %1182 = vmatpush.msra.mxu0 %v1143
      %1183 = vmatpush.msra.mxu0 %v1142
      %1184 = vmatpush.msra.mxu0 %v1141
      %1185 = vmatpush.msra.mxu0 %v1140
      %1186 = vmatpush.msra.mxu0 %v1139
      %1187 = vmatpush.msra.mxu0 %v1138
      %1188 = vmatpush.msra.mxu0 %v1137
      %1189 = vmatmul.f32.gmra.mxu0 %v482
      %v1190 = vpop.f32.mrf.mxu0
      %v1191 = vadd.f32 %v1171, %v1190
      %1192 = vdwg.mxu0
      %s1193 = scalar_lea.vmem %s4, 96
      %v1194 = vld [vmem:[%s1193] sm:$0xff]
      %v1195 = vld [vmem:[%s1193 + $0x8] sm:$0xff]
      %v1197 = vsel %vm633, %v1194, 0
      %v1200 = vsel %vm633, %v1195, 0
      %1202 = vmatpush.msra.mxu0 0.0
      %1203 = vmatpush.msra.mxu0 0.0
      %1204 = vmatpush.msra.mxu0 0.0
      %1205 = vmatpush.msra.mxu0 0.0
      %1206 = vmatpush.msra.mxu0 0.0
      %1207 = vmatpush.msra.mxu0 0.0
      %1208 = vmatpush.msra.mxu0 0.0
      %1209 = vmatpush.msra.mxu0 0.0
      %1210 = vmatpush.msra.mxu0 0.0
      %1211 = vmatpush.msra.mxu0 0.0
      %1212 = vmatpush.msra.mxu0 0.0
      %1213 = vmatpush.msra.mxu0 0.0
      %1214 = vmatpush.msra.mxu0 0.0
      %1215 = vmatpush.msra.mxu0 0.0
      %1216 = vmatpush.msra.mxu0 0.0
      %1217 = vmatpush.msra.mxu0 %v1191
      %1218 = vmatmul.f32.gmra.mxu0 %v1197
      %v1219 = vpop.f32.mrf.mxu0
      %v1220 = vadd.f32 0.0, %v1219
      %1221 = vmatmul.f32.gmra.mxu0 %v1200
      %v1222 = vpop.f32.mrf.mxu0
      %v1223 = vadd.f32 0.0, %v1222
      %1224 = vdwg.mxu0
      %v1225 = vadd.f32 %v1118, %v1220
      %v1226 = vadd.f32 %v1119, %v1223
      %s1227 = scalar_lea.vmem %s3, 1792
      %v1228 = vld [vmem:[%s1227] sm:$0xff]
      %v1229 = vld [vmem:[%s1227 + $0x8] sm:$0xff]
      %v1230 = vld [vmem:[%s1227 + $0x10] sm:$0xff]
      %v1231 = vld [vmem:[%s1227 + $0x18] sm:$0xff]
      %v1232 = vld [vmem:[%s1227 + $0x20] sm:$0xff]
      %v1233 = vld [vmem:[%s1227 + $0x28] sm:$0xff]
      %v1234 = vld [vmem:[%s1227 + $0x30] sm:$0xff]
      %v1235 = vld [vmem:[%s1227 + $0x38] sm:$0xff]
      %v1236 = vld [vmem:[%s1227 + $0x40] sm:$0xff]
      %v1237 = vld [vmem:[%s1227 + $0x48] sm:$0xff]
      %v1238 = vld [vmem:[%s1227 + $0x50] sm:$0xff]
      %v1239 = vld [vmem:[%s1227 + $0x58] sm:$0xff]
      %v1240 = vld [vmem:[%s1227 + $0x60] sm:$0xff]
      %v1241 = vld [vmem:[%s1227 + $0x68] sm:$0xff]
      %v1242 = vld [vmem:[%s1227 + $0x70] sm:$0xff]
      %v1243 = vld [vmem:[%s1227 + $0x78] sm:$0xff]
      %v1244 = vld [vmem:[%s1227 + $0x80] sm:$0xff]
      %v1245 = vld [vmem:[%s1227 + $0x88] sm:$0xff]
      %v1246 = vld [vmem:[%s1227 + $0x90] sm:$0xff]
      %v1247 = vld [vmem:[%s1227 + $0x98] sm:$0xff]
      %v1248 = vld [vmem:[%s1227 + $0xa0] sm:$0xff]
      %v1249 = vld [vmem:[%s1227 + $0xa8] sm:$0xff]
      %v1250 = vld [vmem:[%s1227 + $0xb0] sm:$0xff]
      %v1251 = vld [vmem:[%s1227 + $0xb8] sm:$0xff]
      %v1252 = vld [vmem:[%s1227 + $0xc0] sm:$0xff]
      %v1253 = vld [vmem:[%s1227 + $0xc8] sm:$0xff]
      %v1254 = vld [vmem:[%s1227 + $0xd0] sm:$0xff]
      %v1255 = vld [vmem:[%s1227 + $0xd8] sm:$0xff]
      %v1256 = vld [vmem:[%s1227 + $0xe0] sm:$0xff]
      %v1257 = vld [vmem:[%s1227 + $0xe8] sm:$0xff]
      %v1258 = vld [vmem:[%s1227 + $0xf0] sm:$0xff]
      %v1259 = vld [vmem:[%s1227 + $0xf8] sm:$0xff]
      %1260 = vmatpush.msra.mxu0 %v1243
      %1261 = vmatpush.msra.mxu0 %v1242
      %1262 = vmatpush.msra.mxu0 %v1241
      %1263 = vmatpush.msra.mxu0 %v1240
      %1264 = vmatpush.msra.mxu0 %v1239
      %1265 = vmatpush.msra.mxu0 %v1238
      %1266 = vmatpush.msra.mxu0 %v1237
      %1267 = vmatpush.msra.mxu0 %v1236
      %1268 = vmatpush.msra.mxu0 %v1235
      %1269 = vmatpush.msra.mxu0 %v1234
      %1270 = vmatpush.msra.mxu0 %v1233
      %1271 = vmatpush.msra.mxu0 %v1232
      %1272 = vmatpush.msra.mxu0 %v1231
      %1273 = vmatpush.msra.mxu0 %v1230
      %1274 = vmatpush.msra.mxu0 %v1229
      %1275 = vmatpush.msra.mxu0 %v1228
      %1276 = vmatmul.f32.gmra.mxu0 %v481
      %v1277 = vpop.f32.mrf.mxu0
      %v1278 = vadd.f32 0.0, %v1277
      %1279 = vdwg.mxu0
      %1280 = vmatpush.msra.mxu0 %v1259
      %1281 = vmatpush.msra.mxu0 %v1258
      %1282 = vmatpush.msra.mxu0 %v1257
      %1283 = vmatpush.msra.mxu0 %v1256
      %1284 = vmatpush.msra.mxu0 %v1255
      %1285 = vmatpush.msra.mxu0 %v1254
      %1286 = vmatpush.msra.mxu0 %v1253
      %1287 = vmatpush.msra.mxu0 %v1252
      %1288 = vmatpush.msra.mxu0 %v1251
      %1289 = vmatpush.msra.mxu0 %v1250
      %1290 = vmatpush.msra.mxu0 %v1249
      %1291 = vmatpush.msra.mxu0 %v1248
      %1292 = vmatpush.msra.mxu0 %v1247
      %1293 = vmatpush.msra.mxu0 %v1246
      %1294 = vmatpush.msra.mxu0 %v1245
      %1295 = vmatpush.msra.mxu0 %v1244
      %1296 = vmatmul.f32.gmra.mxu0 %v482
      %v1297 = vpop.f32.mrf.mxu0
      %v1298 = vadd.f32 %v1278, %v1297
      %1299 = vdwg.mxu0
      %s1300 = scalar_lea.vmem %s4, 112
      %v1301 = vld [vmem:[%s1300] sm:$0xff]
      %v1302 = vld [vmem:[%s1300 + $0x8] sm:$0xff]
      %v1304 = vsel %vm633, %v1301, 0
      %v1307 = vsel %vm633, %v1302, 0
      %1309 = vmatpush.msra.mxu0 0.0
      %1310 = vmatpush.msra.mxu0 0.0
      %1311 = vmatpush.msra.mxu0 0.0
      %1312 = vmatpush.msra.mxu0 0.0
      %1313 = vmatpush.msra.mxu0 0.0
      %1314 = vmatpush.msra.mxu0 0.0
      %1315 = vmatpush.msra.mxu0 0.0
      %1316 = vmatpush.msra.mxu0 0.0
      %1317 = vmatpush.msra.mxu0 0.0
      %1318 = vmatpush.msra.mxu0 0.0
      %1319 = vmatpush.msra.mxu0 0.0
      %1320 = vmatpush.msra.mxu0 0.0
      %1321 = vmatpush.msra.mxu0 0.0
      %1322 = vmatpush.msra.mxu0 0.0
      %1323 = vmatpush.msra.mxu0 0.0
      %1324 = vmatpush.msra.mxu0 %v1298
      %1325 = vmatmul.f32.gmra.mxu0 %v1304
      %v1326 = vpop.f32.mrf.mxu0
      %v1327 = vadd.f32 0.0, %v1326
      %1328 = vmatmul.f32.gmra.mxu0 %v1307
      %v1329 = vpop.f32.mrf.mxu0
      %v1330 = vadd.f32 0.0, %v1329
      %1331 = vdwg.mxu0
      %v1332 = vadd.f32 %v1225, %v1327
      %v1333 = vadd.f32 %v1226, %v1330
      %s1334 = scalar_lea.vmem %s3, 2048
      %v1335 = vld [vmem:[%s1334] sm:$0xff]
      %v1336 = vld [vmem:[%s1334 + $0x8] sm:$0xff]
      %v1337 = vld [vmem:[%s1334 + $0x10] sm:$0xff]
      %v1338 = vld [vmem:[%s1334 + $0x18] sm:$0xff]
      %v1339 = vld [vmem:[%s1334 + $0x20] sm:$0xff]
      %v1340 = vld [vmem:[%s1334 + $0x28] sm:$0xff]
      %v1341 = vld [vmem:[%s1334 + $0x30] sm:$0xff]
      %v1342 = vld [vmem:[%s1334 + $0x38] sm:$0xff]
      %v1343 = vld [vmem:[%s1334 + $0x40] sm:$0xff]
      %v1344 = vld [vmem:[%s1334 + $0x48] sm:$0xff]
      %v1345 = vld [vmem:[%s1334 + $0x50] sm:$0xff]
      %v1346 = vld [vmem:[%s1334 + $0x58] sm:$0xff]
      %v1347 = vld [vmem:[%s1334 + $0x60] sm:$0xff]
      %v1348 = vld [vmem:[%s1334 + $0x68] sm:$0xff]
      %v1349 = vld [vmem:[%s1334 + $0x70] sm:$0xff]
      %v1350 = vld [vmem:[%s1334 + $0x78] sm:$0xff]
      %v1351 = vld [vmem:[%s1334 + $0x80] sm:$0xff]
      %v1352 = vld [vmem:[%s1334 + $0x88] sm:$0xff]
      %v1353 = vld [vmem:[%s1334 + $0x90] sm:$0xff]
      %v1354 = vld [vmem:[%s1334 + $0x98] sm:$0xff]
      %v1355 = vld [vmem:[%s1334 + $0xa0] sm:$0xff]
      %v1356 = vld [vmem:[%s1334 + $0xa8] sm:$0xff]
      %v1357 = vld [vmem:[%s1334 + $0xb0] sm:$0xff]
      %v1358 = vld [vmem:[%s1334 + $0xb8] sm:$0xff]
      %v1359 = vld [vmem:[%s1334 + $0xc0] sm:$0xff]
      %v1360 = vld [vmem:[%s1334 + $0xc8] sm:$0xff]
      %v1361 = vld [vmem:[%s1334 + $0xd0] sm:$0xff]
      %v1362 = vld [vmem:[%s1334 + $0xd8] sm:$0xff]
      %v1363 = vld [vmem:[%s1334 + $0xe0] sm:$0xff]
      %v1364 = vld [vmem:[%s1334 + $0xe8] sm:$0xff]
      %v1365 = vld [vmem:[%s1334 + $0xf0] sm:$0xff]
      %v1366 = vld [vmem:[%s1334 + $0xf8] sm:$0xff]
      %1367 = vmatpush.msra.mxu0 %v1350
      %1368 = vmatpush.msra.mxu0 %v1349
      %1369 = vmatpush.msra.mxu0 %v1348
      %1370 = vmatpush.msra.mxu0 %v1347
      %1371 = vmatpush.msra.mxu0 %v1346
      %1372 = vmatpush.msra.mxu0 %v1345
      %1373 = vmatpush.msra.mxu0 %v1344
      %1374 = vmatpush.msra.mxu0 %v1343
      %1375 = vmatpush.msra.mxu0 %v1342
      %1376 = vmatpush.msra.mxu0 %v1341
      %1377 = vmatpush.msra.mxu0 %v1340
      %1378 = vmatpush.msra.mxu0 %v1339
      %1379 = vmatpush.msra.mxu0 %v1338
      %1380 = vmatpush.msra.mxu0 %v1337
      %1381 = vmatpush.msra.mxu0 %v1336
      %1382 = vmatpush.msra.mxu0 %v1335
      %1383 = vmatmul.f32.gmra.mxu0 %v481
      %v1384 = vpop.f32.mrf.mxu0
      %v1385 = vadd.f32 0.0, %v1384
      %1386 = vdwg.mxu0
      %1387 = vmatpush.msra.mxu0 %v1366
      %1388 = vmatpush.msra.mxu0 %v1365
      %1389 = vmatpush.msra.mxu0 %v1364
      %1390 = vmatpush.msra.mxu0 %v1363
      %1391 = vmatpush.msra.mxu0 %v1362
      %1392 = vmatpush.msra.mxu0 %v1361
      %1393 = vmatpush.msra.mxu0 %v1360
      %1394 = vmatpush.msra.mxu0 %v1359
      %1395 = vmatpush.msra.mxu0 %v1358
      %1396 = vmatpush.msra.mxu0 %v1357
      %1397 = vmatpush.msra.mxu0 %v1356
      %1398 = vmatpush.msra.mxu0 %v1355
      %1399 = vmatpush.msra.mxu0 %v1354
      %1400 = vmatpush.msra.mxu0 %v1353
      %1401 = vmatpush.msra.mxu0 %v1352
      %1402 = vmatpush.msra.mxu0 %v1351
      %1403 = vmatmul.f32.gmra.mxu0 %v482
      %v1404 = vpop.f32.mrf.mxu0
      %v1405 = vadd.f32 %v1385, %v1404
      %1406 = vdwg.mxu0
      %s1407 = scalar_lea.vmem %s4, 128
      %v1408 = vld [vmem:[%s1407] sm:$0xff]
      %v1409 = vld [vmem:[%s1407 + $0x8] sm:$0xff]
      %v1411 = vsel %vm633, %v1408, 0
      %v1414 = vsel %vm633, %v1409, 0
      %1416 = vmatpush.msra.mxu0 0.0
      %1417 = vmatpush.msra.mxu0 0.0
      %1418 = vmatpush.msra.mxu0 0.0
      %1419 = vmatpush.msra.mxu0 0.0
      %1420 = vmatpush.msra.mxu0 0.0
      %1421 = vmatpush.msra.mxu0 0.0
      %1422 = vmatpush.msra.mxu0 0.0
      %1423 = vmatpush.msra.mxu0 0.0
      %1424 = vmatpush.msra.mxu0 0.0
      %1425 = vmatpush.msra.mxu0 0.0
      %1426 = vmatpush.msra.mxu0 0.0
      %1427 = vmatpush.msra.mxu0 0.0
      %1428 = vmatpush.msra.mxu0 0.0
      %1429 = vmatpush.msra.mxu0 0.0
      %1430 = vmatpush.msra.mxu0 0.0
      %1431 = vmatpush.msra.mxu0 %v1405
      %1432 = vmatmul.f32.gmra.mxu0 %v1411
      %v1433 = vpop.f32.mrf.mxu0
      %v1434 = vadd.f32 0.0, %v1433
      %1435 = vmatmul.f32.gmra.mxu0 %v1414
      %v1436 = vpop.f32.mrf.mxu0
      %v1437 = vadd.f32 0.0, %v1436
      %1438 = vdwg.mxu0
      %v1439 = vadd.f32 %v1332, %v1434
      %v1440 = vadd.f32 %v1333, %v1437
      %s1441 = scalar_lea.vmem %s3, 2304
      %v1442 = vld [vmem:[%s1441] sm:$0xff]
      %v1443 = vld [vmem:[%s1441 + $0x8] sm:$0xff]
      %v1444 = vld [vmem:[%s1441 + $0x10] sm:$0xff]
      %v1445 = vld [vmem:[%s1441 + $0x18] sm:$0xff]
      %v1446 = vld [vmem:[%s1441 + $0x20] sm:$0xff]
      %v1447 = vld [vmem:[%s1441 + $0x28] sm:$0xff]
      %v1448 = vld [vmem:[%s1441 + $0x30] sm:$0xff]
      %v1449 = vld [vmem:[%s1441 + $0x38] sm:$0xff]
      %v1450 = vld [vmem:[%s1441 + $0x40] sm:$0xff]
      %v1451 = vld [vmem:[%s1441 + $0x48] sm:$0xff]
      %v1452 = vld [vmem:[%s1441 + $0x50] sm:$0xff]
      %v1453 = vld [vmem:[%s1441 + $0x58] sm:$0xff]
      %v1454 = vld [vmem:[%s1441 + $0x60] sm:$0xff]
      %v1455 = vld [vmem:[%s1441 + $0x68] sm:$0xff]
      %v1456 = vld [vmem:[%s1441 + $0x70] sm:$0xff]
      %v1457 = vld [vmem:[%s1441 + $0x78] sm:$0xff]
      %v1458 = vld [vmem:[%s1441 + $0x80] sm:$0xff]
      %v1459 = vld [vmem:[%s1441 + $0x88] sm:$0xff]
      %v1460 = vld [vmem:[%s1441 + $0x90] sm:$0xff]
      %v1461 = vld [vmem:[%s1441 + $0x98] sm:$0xff]
      %v1462 = vld [vmem:[%s1441 + $0xa0] sm:$0xff]
      %v1463 = vld [vmem:[%s1441 + $0xa8] sm:$0xff]
      %v1464 = vld [vmem:[%s1441 + $0xb0] sm:$0xff]
      %v1465 = vld [vmem:[%s1441 + $0xb8] sm:$0xff]
      %v1466 = vld [vmem:[%s1441 + $0xc0] sm:$0xff]
      %v1467 = vld [vmem:[%s1441 + $0xc8] sm:$0xff]
      %v1468 = vld [vmem:[%s1441 + $0xd0] sm:$0xff]
      %v1469 = vld [vmem:[%s1441 + $0xd8] sm:$0xff]
      %v1470 = vld [vmem:[%s1441 + $0xe0] sm:$0xff]
      %v1471 = vld [vmem:[%s1441 + $0xe8] sm:$0xff]
      %v1472 = vld [vmem:[%s1441 + $0xf0] sm:$0xff]
      %v1473 = vld [vmem:[%s1441 + $0xf8] sm:$0xff]
      %1474 = vmatpush.msra.mxu0 %v1457
      %1475 = vmatpush.msra.mxu0 %v1456
      %1476 = vmatpush.msra.mxu0 %v1455
      %1477 = vmatpush.msra.mxu0 %v1454
      %1478 = vmatpush.msra.mxu0 %v1453
      %1479 = vmatpush.msra.mxu0 %v1452
      %1480 = vmatpush.msra.mxu0 %v1451
      %1481 = vmatpush.msra.mxu0 %v1450
      %1482 = vmatpush.msra.mxu0 %v1449
      %1483 = vmatpush.msra.mxu0 %v1448
      %1484 = vmatpush.msra.mxu0 %v1447
      %1485 = vmatpush.msra.mxu0 %v1446
      %1486 = vmatpush.msra.mxu0 %v1445
      %1487 = vmatpush.msra.mxu0 %v1444
      %1488 = vmatpush.msra.mxu0 %v1443
      %1489 = vmatpush.msra.mxu0 %v1442
      %1490 = vmatmul.f32.gmra.mxu0 %v481
      %v1491 = vpop.f32.mrf.mxu0
      %v1492 = vadd.f32 0.0, %v1491
      %1493 = vdwg.mxu0
      %1494 = vmatpush.msra.mxu0 %v1473
      %1495 = vmatpush.msra.mxu0 %v1472
      %1496 = vmatpush.msra.mxu0 %v1471
      %1497 = vmatpush.msra.mxu0 %v1470
      %1498 = vmatpush.msra.mxu0 %v1469
      %1499 = vmatpush.msra.mxu0 %v1468
      %1500 = vmatpush.msra.mxu0 %v1467
      %1501 = vmatpush.msra.mxu0 %v1466
      %1502 = vmatpush.msra.mxu0 %v1465
      %1503 = vmatpush.msra.mxu0 %v1464
      %1504 = vmatpush.msra.mxu0 %v1463
      %1505 = vmatpush.msra.mxu0 %v1462
      %1506 = vmatpush.msra.mxu0 %v1461
      %1507 = vmatpush.msra.mxu0 %v1460
      %1508 = vmatpush.msra.mxu0 %v1459
      %1509 = vmatpush.msra.mxu0 %v1458
      %1510 = vmatmul.f32.gmra.mxu0 %v482
      %v1511 = vpop.f32.mrf.mxu0
      %v1512 = vadd.f32 %v1492, %v1511
      %1513 = vdwg.mxu0
      %s1514 = scalar_lea.vmem %s4, 144
      %v1515 = vld [vmem:[%s1514] sm:$0xff]
      %v1516 = vld [vmem:[%s1514 + $0x8] sm:$0xff]
      %v1518 = vsel %vm633, %v1515, 0
      %v1521 = vsel %vm633, %v1516, 0
      %1523 = vmatpush.msra.mxu0 0.0
      %1524 = vmatpush.msra.mxu0 0.0
      %1525 = vmatpush.msra.mxu0 0.0
      %1526 = vmatpush.msra.mxu0 0.0
      %1527 = vmatpush.msra.mxu0 0.0
      %1528 = vmatpush.msra.mxu0 0.0
      %1529 = vmatpush.msra.mxu0 0.0
      %1530 = vmatpush.msra.mxu0 0.0
      %1531 = vmatpush.msra.mxu0 0.0
      %1532 = vmatpush.msra.mxu0 0.0
      %1533 = vmatpush.msra.mxu0 0.0
      %1534 = vmatpush.msra.mxu0 0.0
      %1535 = vmatpush.msra.mxu0 0.0
      %1536 = vmatpush.msra.mxu0 0.0
      %1537 = vmatpush.msra.mxu0 0.0
      %1538 = vmatpush.msra.mxu0 %v1512
      %1539 = vmatmul.f32.gmra.mxu0 %v1518
      %v1540 = vpop.f32.mrf.mxu0
      %v1541 = vadd.f32 0.0, %v1540
      %1542 = vmatmul.f32.gmra.mxu0 %v1521
      %v1543 = vpop.f32.mrf.mxu0
      %v1544 = vadd.f32 0.0, %v1543
      %1545 = vdwg.mxu0
      %v1546 = vadd.f32 %v1439, %v1541
      %v1547 = vadd.f32 %v1440, %v1544
      %s1548 = scalar_lea.vmem %s3, 2560
      %v1549 = vld [vmem:[%s1548] sm:$0xff]
      %v1550 = vld [vmem:[%s1548 + $0x8] sm:$0xff]
      %v1551 = vld [vmem:[%s1548 + $0x10] sm:$0xff]
      %v1552 = vld [vmem:[%s1548 + $0x18] sm:$0xff]
      %v1553 = vld [vmem:[%s1548 + $0x20] sm:$0xff]
      %v1554 = vld [vmem:[%s1548 + $0x28] sm:$0xff]
      %v1555 = vld [vmem:[%s1548 + $0x30] sm:$0xff]
      %v1556 = vld [vmem:[%s1548 + $0x38] sm:$0xff]
      %v1557 = vld [vmem:[%s1548 + $0x40] sm:$0xff]
      %v1558 = vld [vmem:[%s1548 + $0x48] sm:$0xff]
      %v1559 = vld [vmem:[%s1548 + $0x50] sm:$0xff]
      %v1560 = vld [vmem:[%s1548 + $0x58] sm:$0xff]
      %v1561 = vld [vmem:[%s1548 + $0x60] sm:$0xff]
      %v1562 = vld [vmem:[%s1548 + $0x68] sm:$0xff]
      %v1563 = vld [vmem:[%s1548 + $0x70] sm:$0xff]
      %v1564 = vld [vmem:[%s1548 + $0x78] sm:$0xff]
      %v1565 = vld [vmem:[%s1548 + $0x80] sm:$0xff]
      %v1566 = vld [vmem:[%s1548 + $0x88] sm:$0xff]
      %v1567 = vld [vmem:[%s1548 + $0x90] sm:$0xff]
      %v1568 = vld [vmem:[%s1548 + $0x98] sm:$0xff]
      %v1569 = vld [vmem:[%s1548 + $0xa0] sm:$0xff]
      %v1570 = vld [vmem:[%s1548 + $0xa8] sm:$0xff]
      %v1571 = vld [vmem:[%s1548 + $0xb0] sm:$0xff]
      %v1572 = vld [vmem:[%s1548 + $0xb8] sm:$0xff]
      %v1573 = vld [vmem:[%s1548 + $0xc0] sm:$0xff]
      %v1574 = vld [vmem:[%s1548 + $0xc8] sm:$0xff]
      %v1575 = vld [vmem:[%s1548 + $0xd0] sm:$0xff]
      %v1576 = vld [vmem:[%s1548 + $0xd8] sm:$0xff]
      %v1577 = vld [vmem:[%s1548 + $0xe0] sm:$0xff]
      %v1578 = vld [vmem:[%s1548 + $0xe8] sm:$0xff]
      %v1579 = vld [vmem:[%s1548 + $0xf0] sm:$0xff]
      %v1580 = vld [vmem:[%s1548 + $0xf8] sm:$0xff]
      %1581 = vmatpush.msra.mxu0 %v1564
      %1582 = vmatpush.msra.mxu0 %v1563
      %1583 = vmatpush.msra.mxu0 %v1562
      %1584 = vmatpush.msra.mxu0 %v1561
      %1585 = vmatpush.msra.mxu0 %v1560
      %1586 = vmatpush.msra.mxu0 %v1559
      %1587 = vmatpush.msra.mxu0 %v1558
      %1588 = vmatpush.msra.mxu0 %v1557
      %1589 = vmatpush.msra.mxu0 %v1556
      %1590 = vmatpush.msra.mxu0 %v1555
      %1591 = vmatpush.msra.mxu0 %v1554
      %1592 = vmatpush.msra.mxu0 %v1553
      %1593 = vmatpush.msra.mxu0 %v1552
      %1594 = vmatpush.msra.mxu0 %v1551
      %1595 = vmatpush.msra.mxu0 %v1550
      %1596 = vmatpush.msra.mxu0 %v1549
      %1597 = vmatmul.f32.gmra.mxu0 %v481
      %v1598 = vpop.f32.mrf.mxu0
      %v1599 = vadd.f32 0.0, %v1598
      %1600 = vdwg.mxu0
      %1601 = vmatpush.msra.mxu0 %v1580
      %1602 = vmatpush.msra.mxu0 %v1579
      %1603 = vmatpush.msra.mxu0 %v1578
      %1604 = vmatpush.msra.mxu0 %v1577
      %1605 = vmatpush.msra.mxu0 %v1576
      %1606 = vmatpush.msra.mxu0 %v1575
      %1607 = vmatpush.msra.mxu0 %v1574
      %1608 = vmatpush.msra.mxu0 %v1573
      %1609 = vmatpush.msra.mxu0 %v1572
      %1610 = vmatpush.msra.mxu0 %v1571
      %1611 = vmatpush.msra.mxu0 %v1570
      %1612 = vmatpush.msra.mxu0 %v1569
      %1613 = vmatpush.msra.mxu0 %v1568
      %1614 = vmatpush.msra.mxu0 %v1567
      %1615 = vmatpush.msra.mxu0 %v1566
      %1616 = vmatpush.msra.mxu0 %v1565
      %1617 = vmatmul.f32.gmra.mxu0 %v482
      %v1618 = vpop.f32.mrf.mxu0
      %v1619 = vadd.f32 %v1599, %v1618
      %1620 = vdwg.mxu0
      %s1621 = scalar_lea.vmem %s4, 160
      %v1622 = vld [vmem:[%s1621] sm:$0xff]
      %v1623 = vld [vmem:[%s1621 + $0x8] sm:$0xff]
      %v1625 = vsel %vm633, %v1622, 0
      %v1628 = vsel %vm633, %v1623, 0
      %1630 = vmatpush.msra.mxu0 0.0
      %1631 = vmatpush.msra.mxu0 0.0
      %1632 = vmatpush.msra.mxu0 0.0
      %1633 = vmatpush.msra.mxu0 0.0
      %1634 = vmatpush.msra.mxu0 0.0
      %1635 = vmatpush.msra.mxu0 0.0
      %1636 = vmatpush.msra.mxu0 0.0
      %1637 = vmatpush.msra.mxu0 0.0
      %1638 = vmatpush.msra.mxu0 0.0
      %1639 = vmatpush.msra.mxu0 0.0
      %1640 = vmatpush.msra.mxu0 0.0
      %1641 = vmatpush.msra.mxu0 0.0
      %1642 = vmatpush.msra.mxu0 0.0
      %1643 = vmatpush.msra.mxu0 0.0
      %1644 = vmatpush.msra.mxu0 0.0
      %1645 = vmatpush.msra.mxu0 %v1619
      %1646 = vmatmul.f32.gmra.mxu0 %v1625
      %v1647 = vpop.f32.mrf.mxu0
      %v1648 = vadd.f32 0.0, %v1647
      %1649 = vmatmul.f32.gmra.mxu0 %v1628
      %v1650 = vpop.f32.mrf.mxu0
      %v1651 = vadd.f32 0.0, %v1650
      %1652 = vdwg.mxu0
      %v1653 = vadd.f32 %v1546, %v1648
      %v1654 = vadd.f32 %v1547, %v1651
      %s1655 = scalar_lea.vmem %s3, 2816
      %v1656 = vld [vmem:[%s1655] sm:$0xff]
      %v1657 = vld [vmem:[%s1655 + $0x8] sm:$0xff]
      %v1658 = vld [vmem:[%s1655 + $0x10] sm:$0xff]
      %v1659 = vld [vmem:[%s1655 + $0x18] sm:$0xff]
      %v1660 = vld [vmem:[%s1655 + $0x20] sm:$0xff]
      %v1661 = vld [vmem:[%s1655 + $0x28] sm:$0xff]
      %v1662 = vld [vmem:[%s1655 + $0x30] sm:$0xff]
      %v1663 = vld [vmem:[%s1655 + $0x38] sm:$0xff]
      %v1664 = vld [vmem:[%s1655 + $0x40] sm:$0xff]
      %v1665 = vld [vmem:[%s1655 + $0x48] sm:$0xff]
      %v1666 = vld [vmem:[%s1655 + $0x50] sm:$0xff]
      %v1667 = vld [vmem:[%s1655 + $0x58] sm:$0xff]
      %v1668 = vld [vmem:[%s1655 + $0x60] sm:$0xff]
      %v1669 = vld [vmem:[%s1655 + $0x68] sm:$0xff]
      %v1670 = vld [vmem:[%s1655 + $0x70] sm:$0xff]
      %v1671 = vld [vmem:[%s1655 + $0x78] sm:$0xff]
      %v1672 = vld [vmem:[%s1655 + $0x80] sm:$0xff]
      %v1673 = vld [vmem:[%s1655 + $0x88] sm:$0xff]
      %v1674 = vld [vmem:[%s1655 + $0x90] sm:$0xff]
      %v1675 = vld [vmem:[%s1655 + $0x98] sm:$0xff]
      %v1676 = vld [vmem:[%s1655 + $0xa0] sm:$0xff]
      %v1677 = vld [vmem:[%s1655 + $0xa8] sm:$0xff]
      %v1678 = vld [vmem:[%s1655 + $0xb0] sm:$0xff]
      %v1679 = vld [vmem:[%s1655 + $0xb8] sm:$0xff]
      %v1680 = vld [vmem:[%s1655 + $0xc0] sm:$0xff]
      %v1681 = vld [vmem:[%s1655 + $0xc8] sm:$0xff]
      %v1682 = vld [vmem:[%s1655 + $0xd0] sm:$0xff]
      %v1683 = vld [vmem:[%s1655 + $0xd8] sm:$0xff]
      %v1684 = vld [vmem:[%s1655 + $0xe0] sm:$0xff]
      %v1685 = vld [vmem:[%s1655 + $0xe8] sm:$0xff]
      %v1686 = vld [vmem:[%s1655 + $0xf0] sm:$0xff]
      %v1687 = vld [vmem:[%s1655 + $0xf8] sm:$0xff]
      %1688 = vmatpush.msra.mxu0 %v1671
      %1689 = vmatpush.msra.mxu0 %v1670
      %1690 = vmatpush.msra.mxu0 %v1669
      %1691 = vmatpush.msra.mxu0 %v1668
      %1692 = vmatpush.msra.mxu0 %v1667
      %1693 = vmatpush.msra.mxu0 %v1666
      %1694 = vmatpush.msra.mxu0 %v1665
      %1695 = vmatpush.msra.mxu0 %v1664
      %1696 = vmatpush.msra.mxu0 %v1663
      %1697 = vmatpush.msra.mxu0 %v1662
      %1698 = vmatpush.msra.mxu0 %v1661
      %1699 = vmatpush.msra.mxu0 %v1660
      %1700 = vmatpush.msra.mxu0 %v1659
      %1701 = vmatpush.msra.mxu0 %v1658
      %1702 = vmatpush.msra.mxu0 %v1657
      %1703 = vmatpush.msra.mxu0 %v1656
      %1704 = vmatmul.f32.gmra.mxu0 %v481
      %v1705 = vpop.f32.mrf.mxu0
      %v1706 = vadd.f32 0.0, %v1705
      %1707 = vdwg.mxu0
      %1708 = vmatpush.msra.mxu0 %v1687
      %1709 = vmatpush.msra.mxu0 %v1686
      %1710 = vmatpush.msra.mxu0 %v1685
      %1711 = vmatpush.msra.mxu0 %v1684
      %1712 = vmatpush.msra.mxu0 %v1683
      %1713 = vmatpush.msra.mxu0 %v1682
      %1714 = vmatpush.msra.mxu0 %v1681
      %1715 = vmatpush.msra.mxu0 %v1680
      %1716 = vmatpush.msra.mxu0 %v1679
      %1717 = vmatpush.msra.mxu0 %v1678
      %1718 = vmatpush.msra.mxu0 %v1677
      %1719 = vmatpush.msra.mxu0 %v1676
      %1720 = vmatpush.msra.mxu0 %v1675
      %1721 = vmatpush.msra.mxu0 %v1674
      %1722 = vmatpush.msra.mxu0 %v1673
      %1723 = vmatpush.msra.mxu0 %v1672
      %1724 = vmatmul.f32.gmra.mxu0 %v482
      %v1725 = vpop.f32.mrf.mxu0
      %v1726 = vadd.f32 %v1706, %v1725
      %1727 = vdwg.mxu0
      %s1728 = scalar_lea.vmem %s4, 176
      %v1729 = vld [vmem:[%s1728] sm:$0xff]
      %v1730 = vld [vmem:[%s1728 + $0x8] sm:$0xff]
      %v1732 = vsel %vm633, %v1729, 0
      %v1735 = vsel %vm633, %v1730, 0
      %1737 = vmatpush.msra.mxu0 0.0
      %1738 = vmatpush.msra.mxu0 0.0
      %1739 = vmatpush.msra.mxu0 0.0
      %1740 = vmatpush.msra.mxu0 0.0
      %1741 = vmatpush.msra.mxu0 0.0
      %1742 = vmatpush.msra.mxu0 0.0
      %1743 = vmatpush.msra.mxu0 0.0
      %1744 = vmatpush.msra.mxu0 0.0
      %1745 = vmatpush.msra.mxu0 0.0
      %1746 = vmatpush.msra.mxu0 0.0
      %1747 = vmatpush.msra.mxu0 0.0
      %1748 = vmatpush.msra.mxu0 0.0
      %1749 = vmatpush.msra.mxu0 0.0
      %1750 = vmatpush.msra.mxu0 0.0
      %1751 = vmatpush.msra.mxu0 0.0
      %1752 = vmatpush.msra.mxu0 %v1726
      %1753 = vmatmul.f32.gmra.mxu0 %v1732
      %v1754 = vpop.f32.mrf.mxu0
      %v1755 = vadd.f32 0.0, %v1754
      %1756 = vmatmul.f32.gmra.mxu0 %v1735
      %v1757 = vpop.f32.mrf.mxu0
      %v1758 = vadd.f32 0.0, %v1757
      %1759 = vdwg.mxu0
      %v1760 = vadd.f32 %v1653, %v1755
      %v1761 = vadd.f32 %v1654, %v1758
      %s1762 = scalar_lea.vmem %s3, 3072
      %v1763 = vld [vmem:[%s1762] sm:$0xff]
      %v1764 = vld [vmem:[%s1762 + $0x8] sm:$0xff]
      %v1765 = vld [vmem:[%s1762 + $0x10] sm:$0xff]
      %v1766 = vld [vmem:[%s1762 + $0x18] sm:$0xff]
      %v1767 = vld [vmem:[%s1762 + $0x20] sm:$0xff]
      %v1768 = vld [vmem:[%s1762 + $0x28] sm:$0xff]
      %v1769 = vld [vmem:[%s1762 + $0x30] sm:$0xff]
      %v1770 = vld [vmem:[%s1762 + $0x38] sm:$0xff]
      %v1771 = vld [vmem:[%s1762 + $0x40] sm:$0xff]
      %v1772 = vld [vmem:[%s1762 + $0x48] sm:$0xff]
      %v1773 = vld [vmem:[%s1762 + $0x50] sm:$0xff]
      %v1774 = vld [vmem:[%s1762 + $0x58] sm:$0xff]
      %v1775 = vld [vmem:[%s1762 + $0x60] sm:$0xff]
      %v1776 = vld [vmem:[%s1762 + $0x68] sm:$0xff]
      %v1777 = vld [vmem:[%s1762 + $0x70] sm:$0xff]
      %v1778 = vld [vmem:[%s1762 + $0x78] sm:$0xff]
      %v1779 = vld [vmem:[%s1762 + $0x80] sm:$0xff]
      %v1780 = vld [vmem:[%s1762 + $0x88] sm:$0xff]
      %v1781 = vld [vmem:[%s1762 + $0x90] sm:$0xff]
      %v1782 = vld [vmem:[%s1762 + $0x98] sm:$0xff]
      %v1783 = vld [vmem:[%s1762 + $0xa0] sm:$0xff]
      %v1784 = vld [vmem:[%s1762 + $0xa8] sm:$0xff]
      %v1785 = vld [vmem:[%s1762 + $0xb0] sm:$0xff]
      %v1786 = vld [vmem:[%s1762 + $0xb8] sm:$0xff]
      %v1787 = vld [vmem:[%s1762 + $0xc0] sm:$0xff]
      %v1788 = vld [vmem:[%s1762 + $0xc8] sm:$0xff]
      %v1789 = vld [vmem:[%s1762 + $0xd0] sm:$0xff]
      %v1790 = vld [vmem:[%s1762 + $0xd8] sm:$0xff]
      %v1791 = vld [vmem:[%s1762 + $0xe0] sm:$0xff]
      %v1792 = vld [vmem:[%s1762 + $0xe8] sm:$0xff]
      %v1793 = vld [vmem:[%s1762 + $0xf0] sm:$0xff]
      %v1794 = vld [vmem:[%s1762 + $0xf8] sm:$0xff]
      %1795 = vmatpush.msra.mxu0 %v1778
      %1796 = vmatpush.msra.mxu0 %v1777
      %1797 = vmatpush.msra.mxu0 %v1776
      %1798 = vmatpush.msra.mxu0 %v1775
      %1799 = vmatpush.msra.mxu0 %v1774
      %1800 = vmatpush.msra.mxu0 %v1773
      %1801 = vmatpush.msra.mxu0 %v1772
      %1802 = vmatpush.msra.mxu0 %v1771
      %1803 = vmatpush.msra.mxu0 %v1770
      %1804 = vmatpush.msra.mxu0 %v1769
      %1805 = vmatpush.msra.mxu0 %v1768
      %1806 = vmatpush.msra.mxu0 %v1767
      %1807 = vmatpush.msra.mxu0 %v1766
      %1808 = vmatpush.msra.mxu0 %v1765
      %1809 = vmatpush.msra.mxu0 %v1764
      %1810 = vmatpush.msra.mxu0 %v1763
      %1811 = vmatmul.f32.gmra.mxu0 %v481
      %v1812 = vpop.f32.mrf.mxu0
      %v1813 = vadd.f32 0.0, %v1812
      %1814 = vdwg.mxu0
      %1815 = vmatpush.msra.mxu0 %v1794
      %1816 = vmatpush.msra.mxu0 %v1793
      %1817 = vmatpush.msra.mxu0 %v1792
      %1818 = vmatpush.msra.mxu0 %v1791
      %1819 = vmatpush.msra.mxu0 %v1790
      %1820 = vmatpush.msra.mxu0 %v1789
      %1821 = vmatpush.msra.mxu0 %v1788
      %1822 = vmatpush.msra.mxu0 %v1787
      %1823 = vmatpush.msra.mxu0 %v1786
      %1824 = vmatpush.msra.mxu0 %v1785
      %1825 = vmatpush.msra.mxu0 %v1784
      %1826 = vmatpush.msra.mxu0 %v1783
      %1827 = vmatpush.msra.mxu0 %v1782
      %1828 = vmatpush.msra.mxu0 %v1781
      %1829 = vmatpush.msra.mxu0 %v1780
      %1830 = vmatpush.msra.mxu0 %v1779
      %1831 = vmatmul.f32.gmra.mxu0 %v482
      %v1832 = vpop.f32.mrf.mxu0
      %v1833 = vadd.f32 %v1813, %v1832
      %1834 = vdwg.mxu0
      %s1835 = scalar_lea.vmem %s4, 192
      %v1836 = vld [vmem:[%s1835] sm:$0xff]
      %v1837 = vld [vmem:[%s1835 + $0x8] sm:$0xff]
      %v1839 = vsel %vm633, %v1836, 0
      %v1842 = vsel %vm633, %v1837, 0
      %1844 = vmatpush.msra.mxu0 0.0
      %1845 = vmatpush.msra.mxu0 0.0
      %1846 = vmatpush.msra.mxu0 0.0
      %1847 = vmatpush.msra.mxu0 0.0
      %1848 = vmatpush.msra.mxu0 0.0
      %1849 = vmatpush.msra.mxu0 0.0
      %1850 = vmatpush.msra.mxu0 0.0
      %1851 = vmatpush.msra.mxu0 0.0
      %1852 = vmatpush.msra.mxu0 0.0
      %1853 = vmatpush.msra.mxu0 0.0
      %1854 = vmatpush.msra.mxu0 0.0
      %1855 = vmatpush.msra.mxu0 0.0
      %1856 = vmatpush.msra.mxu0 0.0
      %1857 = vmatpush.msra.mxu0 0.0
      %1858 = vmatpush.msra.mxu0 0.0
      %1859 = vmatpush.msra.mxu0 %v1833
      %1860 = vmatmul.f32.gmra.mxu0 %v1839
      %v1861 = vpop.f32.mrf.mxu0
      %v1862 = vadd.f32 0.0, %v1861
      %1863 = vmatmul.f32.gmra.mxu0 %v1842
      %v1864 = vpop.f32.mrf.mxu0
      %v1865 = vadd.f32 0.0, %v1864
      %1866 = vdwg.mxu0
      %v1867 = vadd.f32 %v1760, %v1862
      %v1868 = vadd.f32 %v1761, %v1865
      %s1869 = scalar_lea.vmem %s3, 3328
      %v1870 = vld [vmem:[%s1869] sm:$0xff]
      %v1871 = vld [vmem:[%s1869 + $0x8] sm:$0xff]
      %v1872 = vld [vmem:[%s1869 + $0x10] sm:$0xff]
      %v1873 = vld [vmem:[%s1869 + $0x18] sm:$0xff]
      %v1874 = vld [vmem:[%s1869 + $0x20] sm:$0xff]
      %v1875 = vld [vmem:[%s1869 + $0x28] sm:$0xff]
      %v1876 = vld [vmem:[%s1869 + $0x30] sm:$0xff]
      %v1877 = vld [vmem:[%s1869 + $0x38] sm:$0xff]
      %v1878 = vld [vmem:[%s1869 + $0x40] sm:$0xff]
      %v1879 = vld [vmem:[%s1869 + $0x48] sm:$0xff]
      %v1880 = vld [vmem:[%s1869 + $0x50] sm:$0xff]
      %v1881 = vld [vmem:[%s1869 + $0x58] sm:$0xff]
      %v1882 = vld [vmem:[%s1869 + $0x60] sm:$0xff]
      %v1883 = vld [vmem:[%s1869 + $0x68] sm:$0xff]
      %v1884 = vld [vmem:[%s1869 + $0x70] sm:$0xff]
      %v1885 = vld [vmem:[%s1869 + $0x78] sm:$0xff]
      %v1886 = vld [vmem:[%s1869 + $0x80] sm:$0xff]
      %v1887 = vld [vmem:[%s1869 + $0x88] sm:$0xff]
      %v1888 = vld [vmem:[%s1869 + $0x90] sm:$0xff]
      %v1889 = vld [vmem:[%s1869 + $0x98] sm:$0xff]
      %v1890 = vld [vmem:[%s1869 + $0xa0] sm:$0xff]
      %v1891 = vld [vmem:[%s1869 + $0xa8] sm:$0xff]
      %v1892 = vld [vmem:[%s1869 + $0xb0] sm:$0xff]
      %v1893 = vld [vmem:[%s1869 + $0xb8] sm:$0xff]
      %v1894 = vld [vmem:[%s1869 + $0xc0] sm:$0xff]
      %v1895 = vld [vmem:[%s1869 + $0xc8] sm:$0xff]
      %v1896 = vld [vmem:[%s1869 + $0xd0] sm:$0xff]
      %v1897 = vld [vmem:[%s1869 + $0xd8] sm:$0xff]
      %v1898 = vld [vmem:[%s1869 + $0xe0] sm:$0xff]
      %v1899 = vld [vmem:[%s1869 + $0xe8] sm:$0xff]
      %v1900 = vld [vmem:[%s1869 + $0xf0] sm:$0xff]
      %v1901 = vld [vmem:[%s1869 + $0xf8] sm:$0xff]
      %1902 = vmatpush.msra.mxu0 %v1885
      %1903 = vmatpush.msra.mxu0 %v1884
      %1904 = vmatpush.msra.mxu0 %v1883
      %1905 = vmatpush.msra.mxu0 %v1882
      %1906 = vmatpush.msra.mxu0 %v1881
      %1907 = vmatpush.msra.mxu0 %v1880
      %1908 = vmatpush.msra.mxu0 %v1879
      %1909 = vmatpush.msra.mxu0 %v1878
      %1910 = vmatpush.msra.mxu0 %v1877
      %1911 = vmatpush.msra.mxu0 %v1876
      %1912 = vmatpush.msra.mxu0 %v1875
      %1913 = vmatpush.msra.mxu0 %v1874
      %1914 = vmatpush.msra.mxu0 %v1873
      %1915 = vmatpush.msra.mxu0 %v1872
      %1916 = vmatpush.msra.mxu0 %v1871
      %1917 = vmatpush.msra.mxu0 %v1870
      %1918 = vmatmul.f32.gmra.mxu0 %v481
      %v1919 = vpop.f32.mrf.mxu0
      %v1920 = vadd.f32 0.0, %v1919
      %1921 = vdwg.mxu0
      %1922 = vmatpush.msra.mxu0 %v1901
      %1923 = vmatpush.msra.mxu0 %v1900
      %1924 = vmatpush.msra.mxu0 %v1899
      %1925 = vmatpush.msra.mxu0 %v1898
      %1926 = vmatpush.msra.mxu0 %v1897
      %1927 = vmatpush.msra.mxu0 %v1896
      %1928 = vmatpush.msra.mxu0 %v1895
      %1929 = vmatpush.msra.mxu0 %v1894
      %1930 = vmatpush.msra.mxu0 %v1893
      %1931 = vmatpush.msra.mxu0 %v1892
      %1932 = vmatpush.msra.mxu0 %v1891
      %1933 = vmatpush.msra.mxu0 %v1890
      %1934 = vmatpush.msra.mxu0 %v1889
      %1935 = vmatpush.msra.mxu0 %v1888
      %1936 = vmatpush.msra.mxu0 %v1887
      %1937 = vmatpush.msra.mxu0 %v1886
      %1938 = vmatmul.f32.gmra.mxu0 %v482
      %v1939 = vpop.f32.mrf.mxu0
      %v1940 = vadd.f32 %v1920, %v1939
      %1941 = vdwg.mxu0
      %s1942 = scalar_lea.vmem %s4, 208
      %v1943 = vld [vmem:[%s1942] sm:$0xff]
      %v1944 = vld [vmem:[%s1942 + $0x8] sm:$0xff]
      %v1946 = vsel %vm633, %v1943, 0
      %v1949 = vsel %vm633, %v1944, 0
      %1951 = vmatpush.msra.mxu0 0.0
      %1952 = vmatpush.msra.mxu0 0.0
      %1953 = vmatpush.msra.mxu0 0.0
      %1954 = vmatpush.msra.mxu0 0.0
      %1955 = vmatpush.msra.mxu0 0.0
      %1956 = vmatpush.msra.mxu0 0.0
      %1957 = vmatpush.msra.mxu0 0.0
      %1958 = vmatpush.msra.mxu0 0.0
      %1959 = vmatpush.msra.mxu0 0.0
      %1960 = vmatpush.msra.mxu0 0.0
      %1961 = vmatpush.msra.mxu0 0.0
      %1962 = vmatpush.msra.mxu0 0.0
      %1963 = vmatpush.msra.mxu0 0.0
      %1964 = vmatpush.msra.mxu0 0.0
      %1965 = vmatpush.msra.mxu0 0.0
      %1966 = vmatpush.msra.mxu0 %v1940
      %1967 = vmatmul.f32.gmra.mxu0 %v1946
      %v1968 = vpop.f32.mrf.mxu0
      %v1969 = vadd.f32 0.0, %v1968
      %1970 = vmatmul.f32.gmra.mxu0 %v1949
      %v1971 = vpop.f32.mrf.mxu0
      %v1972 = vadd.f32 0.0, %v1971
      %1973 = vdwg.mxu0
      %v1974 = vadd.f32 %v1867, %v1969
      %v1975 = vadd.f32 %v1868, %v1972
      %s1976 = scalar_lea.vmem %s3, 3584
      %v1977 = vld [vmem:[%s1976] sm:$0xff]
      %v1978 = vld [vmem:[%s1976 + $0x8] sm:$0xff]
      %v1979 = vld [vmem:[%s1976 + $0x10] sm:$0xff]
      %v1980 = vld [vmem:[%s1976 + $0x18] sm:$0xff]
      %v1981 = vld [vmem:[%s1976 + $0x20] sm:$0xff]
      %v1982 = vld [vmem:[%s1976 + $0x28] sm:$0xff]
      %v1983 = vld [vmem:[%s1976 + $0x30] sm:$0xff]
      %v1984 = vld [vmem:[%s1976 + $0x38] sm:$0xff]
      %v1985 = vld [vmem:[%s1976 + $0x40] sm:$0xff]
      %v1986 = vld [vmem:[%s1976 + $0x48] sm:$0xff]
      %v1987 = vld [vmem:[%s1976 + $0x50] sm:$0xff]
      %v1988 = vld [vmem:[%s1976 + $0x58] sm:$0xff]
      %v1989 = vld [vmem:[%s1976 + $0x60] sm:$0xff]
      %v1990 = vld [vmem:[%s1976 + $0x68] sm:$0xff]
      %v1991 = vld [vmem:[%s1976 + $0x70] sm:$0xff]
      %v1992 = vld [vmem:[%s1976 + $0x78] sm:$0xff]
      %v1993 = vld [vmem:[%s1976 + $0x80] sm:$0xff]
      %v1994 = vld [vmem:[%s1976 + $0x88] sm:$0xff]
      %v1995 = vld [vmem:[%s1976 + $0x90] sm:$0xff]
      %v1996 = vld [vmem:[%s1976 + $0x98] sm:$0xff]
      %v1997 = vld [vmem:[%s1976 + $0xa0] sm:$0xff]
      %v1998 = vld [vmem:[%s1976 + $0xa8] sm:$0xff]
      %v1999 = vld [vmem:[%s1976 + $0xb0] sm:$0xff]
      %v2000 = vld [vmem:[%s1976 + $0xb8] sm:$0xff]
      %v2001 = vld [vmem:[%s1976 + $0xc0] sm:$0xff]
      %v2002 = vld [vmem:[%s1976 + $0xc8] sm:$0xff]
      %v2003 = vld [vmem:[%s1976 + $0xd0] sm:$0xff]
      %v2004 = vld [vmem:[%s1976 + $0xd8] sm:$0xff]
      %v2005 = vld [vmem:[%s1976 + $0xe0] sm:$0xff]
      %v2006 = vld [vmem:[%s1976 + $0xe8] sm:$0xff]
      %v2007 = vld [vmem:[%s1976 + $0xf0] sm:$0xff]
      %v2008 = vld [vmem:[%s1976 + $0xf8] sm:$0xff]
      %2009 = vmatpush.msra.mxu0 %v1992
      %2010 = vmatpush.msra.mxu0 %v1991
      %2011 = vmatpush.msra.mxu0 %v1990
      %2012 = vmatpush.msra.mxu0 %v1989
      %2013 = vmatpush.msra.mxu0 %v1988
      %2014 = vmatpush.msra.mxu0 %v1987
      %2015 = vmatpush.msra.mxu0 %v1986
      %2016 = vmatpush.msra.mxu0 %v1985
      %2017 = vmatpush.msra.mxu0 %v1984
      %2018 = vmatpush.msra.mxu0 %v1983
      %2019 = vmatpush.msra.mxu0 %v1982
      %2020 = vmatpush.msra.mxu0 %v1981
      %2021 = vmatpush.msra.mxu0 %v1980
      %2022 = vmatpush.msra.mxu0 %v1979
      %2023 = vmatpush.msra.mxu0 %v1978
      %2024 = vmatpush.msra.mxu0 %v1977
      %2025 = vmatmul.f32.gmra.mxu0 %v481
      %v2026 = vpop.f32.mrf.mxu0
      %v2027 = vadd.f32 0.0, %v2026
      %2028 = vdwg.mxu0
      %2029 = vmatpush.msra.mxu0 %v2008
      %2030 = vmatpush.msra.mxu0 %v2007
      %2031 = vmatpush.msra.mxu0 %v2006
      %2032 = vmatpush.msra.mxu0 %v2005
      %2033 = vmatpush.msra.mxu0 %v2004
      %2034 = vmatpush.msra.mxu0 %v2003
      %2035 = vmatpush.msra.mxu0 %v2002
      %2036 = vmatpush.msra.mxu0 %v2001
      %2037 = vmatpush.msra.mxu0 %v2000
      %2038 = vmatpush.msra.mxu0 %v1999
      %2039 = vmatpush.msra.mxu0 %v1998
      %2040 = vmatpush.msra.mxu0 %v1997
      %2041 = vmatpush.msra.mxu0 %v1996
      %2042 = vmatpush.msra.mxu0 %v1995
      %2043 = vmatpush.msra.mxu0 %v1994
      %2044 = vmatpush.msra.mxu0 %v1993
      %2045 = vmatmul.f32.gmra.mxu0 %v482
      %v2046 = vpop.f32.mrf.mxu0
      %v2047 = vadd.f32 %v2027, %v2046
      %2048 = vdwg.mxu0
      %s2049 = scalar_lea.vmem %s4, 224
      %v2050 = vld [vmem:[%s2049] sm:$0xff]
      %v2051 = vld [vmem:[%s2049 + $0x8] sm:$0xff]
      %v2053 = vsel %vm633, %v2050, 0
      %v2056 = vsel %vm633, %v2051, 0
      %2058 = vmatpush.msra.mxu0 0.0
      %2059 = vmatpush.msra.mxu0 0.0
      %2060 = vmatpush.msra.mxu0 0.0
      %2061 = vmatpush.msra.mxu0 0.0
      %2062 = vmatpush.msra.mxu0 0.0
      %2063 = vmatpush.msra.mxu0 0.0
      %2064 = vmatpush.msra.mxu0 0.0
      %2065 = vmatpush.msra.mxu0 0.0
      %2066 = vmatpush.msra.mxu0 0.0
      %2067 = vmatpush.msra.mxu0 0.0
      %2068 = vmatpush.msra.mxu0 0.0
      %2069 = vmatpush.msra.mxu0 0.0
      %2070 = vmatpush.msra.mxu0 0.0
      %2071 = vmatpush.msra.mxu0 0.0
      %2072 = vmatpush.msra.mxu0 0.0
      %2073 = vmatpush.msra.mxu0 %v2047
      %2074 = vmatmul.f32.gmra.mxu0 %v2053
      %v2075 = vpop.f32.mrf.mxu0
      %v2076 = vadd.f32 0.0, %v2075
      %2077 = vmatmul.f32.gmra.mxu0 %v2056
      %v2078 = vpop.f32.mrf.mxu0
      %v2079 = vadd.f32 0.0, %v2078
      %2080 = vdwg.mxu0
      %v2081 = vadd.f32 %v1974, %v2076
      %v2082 = vadd.f32 %v1975, %v2079
      %s2083 = scalar_lea.vmem %s3, 3840
      %v2084 = vld [vmem:[%s2083] sm:$0xff]
      %v2085 = vld [vmem:[%s2083 + $0x8] sm:$0xff]
      %v2086 = vld [vmem:[%s2083 + $0x10] sm:$0xff]
      %v2087 = vld [vmem:[%s2083 + $0x18] sm:$0xff]
      %v2088 = vld [vmem:[%s2083 + $0x20] sm:$0xff]
      %v2089 = vld [vmem:[%s2083 + $0x28] sm:$0xff]
      %v2090 = vld [vmem:[%s2083 + $0x30] sm:$0xff]
      %v2091 = vld [vmem:[%s2083 + $0x38] sm:$0xff]
      %v2092 = vld [vmem:[%s2083 + $0x40] sm:$0xff]
      %v2093 = vld [vmem:[%s2083 + $0x48] sm:$0xff]
      %v2094 = vld [vmem:[%s2083 + $0x50] sm:$0xff]
      %v2095 = vld [vmem:[%s2083 + $0x58] sm:$0xff]
      %v2096 = vld [vmem:[%s2083 + $0x60] sm:$0xff]
      %v2097 = vld [vmem:[%s2083 + $0x68] sm:$0xff]
      %v2098 = vld [vmem:[%s2083 + $0x70] sm:$0xff]
      %v2099 = vld [vmem:[%s2083 + $0x78] sm:$0xff]
      %v2100 = vld [vmem:[%s2083 + $0x80] sm:$0xff]
      %v2101 = vld [vmem:[%s2083 + $0x88] sm:$0xff]
      %v2102 = vld [vmem:[%s2083 + $0x90] sm:$0xff]
      %v2103 = vld [vmem:[%s2083 + $0x98] sm:$0xff]
      %v2104 = vld [vmem:[%s2083 + $0xa0] sm:$0xff]
      %v2105 = vld [vmem:[%s2083 + $0xa8] sm:$0xff]
      %v2106 = vld [vmem:[%s2083 + $0xb0] sm:$0xff]
      %v2107 = vld [vmem:[%s2083 + $0xb8] sm:$0xff]
      %v2108 = vld [vmem:[%s2083 + $0xc0] sm:$0xff]
      %v2109 = vld [vmem:[%s2083 + $0xc8] sm:$0xff]
      %v2110 = vld [vmem:[%s2083 + $0xd0] sm:$0xff]
      %v2111 = vld [vmem:[%s2083 + $0xd8] sm:$0xff]
      %v2112 = vld [vmem:[%s2083 + $0xe0] sm:$0xff]
      %v2113 = vld [vmem:[%s2083 + $0xe8] sm:$0xff]
      %v2114 = vld [vmem:[%s2083 + $0xf0] sm:$0xff]
      %v2115 = vld [vmem:[%s2083 + $0xf8] sm:$0xff]
      %2116 = vmatpush.msra.mxu0 %v2099
      %2117 = vmatpush.msra.mxu0 %v2098
      %2118 = vmatpush.msra.mxu0 %v2097
      %2119 = vmatpush.msra.mxu0 %v2096
      %2120 = vmatpush.msra.mxu0 %v2095
      %2121 = vmatpush.msra.mxu0 %v2094
      %2122 = vmatpush.msra.mxu0 %v2093
      %2123 = vmatpush.msra.mxu0 %v2092
      %2124 = vmatpush.msra.mxu0 %v2091
      %2125 = vmatpush.msra.mxu0 %v2090
      %2126 = vmatpush.msra.mxu0 %v2089
      %2127 = vmatpush.msra.mxu0 %v2088
      %2128 = vmatpush.msra.mxu0 %v2087
      %2129 = vmatpush.msra.mxu0 %v2086
      %2130 = vmatpush.msra.mxu0 %v2085
      %2131 = vmatpush.msra.mxu0 %v2084
      %2132 = vmatmul.f32.gmra.mxu0 %v481
      %v2133 = vpop.f32.mrf.mxu0
      %v2134 = vadd.f32 0.0, %v2133
      %2135 = vdwg.mxu0
      %2136 = vmatpush.msra.mxu0 %v2115
      %2137 = vmatpush.msra.mxu0 %v2114
      %2138 = vmatpush.msra.mxu0 %v2113
      %2139 = vmatpush.msra.mxu0 %v2112
      %2140 = vmatpush.msra.mxu0 %v2111
      %2141 = vmatpush.msra.mxu0 %v2110
      %2142 = vmatpush.msra.mxu0 %v2109
      %2143 = vmatpush.msra.mxu0 %v2108
      %2144 = vmatpush.msra.mxu0 %v2107
      %2145 = vmatpush.msra.mxu0 %v2106
      %2146 = vmatpush.msra.mxu0 %v2105
      %2147 = vmatpush.msra.mxu0 %v2104
      %2148 = vmatpush.msra.mxu0 %v2103
      %2149 = vmatpush.msra.mxu0 %v2102
      %2150 = vmatpush.msra.mxu0 %v2101
      %2151 = vmatpush.msra.mxu0 %v2100
      %2152 = vmatmul.f32.gmra.mxu0 %v482
      %v2153 = vpop.f32.mrf.mxu0
      %v2154 = vadd.f32 %v2134, %v2153
      %2155 = vdwg.mxu0
      %s2156 = scalar_lea.vmem %s4, 240
      %v2157 = vld [vmem:[%s2156] sm:$0xff]
      %v2158 = vld [vmem:[%s2156 + $0x8] sm:$0xff]
      %v2160 = vsel %vm633, %v2157, 0
      %v2163 = vsel %vm633, %v2158, 0
      %2165 = vmatpush.msra.mxu0 0.0
      %2166 = vmatpush.msra.mxu0 0.0
      %2167 = vmatpush.msra.mxu0 0.0
      %2168 = vmatpush.msra.mxu0 0.0
      %2169 = vmatpush.msra.mxu0 0.0
      %2170 = vmatpush.msra.mxu0 0.0
      %2171 = vmatpush.msra.mxu0 0.0
      %2172 = vmatpush.msra.mxu0 0.0
      %2173 = vmatpush.msra.mxu0 0.0
      %2174 = vmatpush.msra.mxu0 0.0
      %2175 = vmatpush.msra.mxu0 0.0
      %2176 = vmatpush.msra.mxu0 0.0
      %2177 = vmatpush.msra.mxu0 0.0
      %2178 = vmatpush.msra.mxu0 0.0
      %2179 = vmatpush.msra.mxu0 0.0
      %2180 = vmatpush.msra.mxu0 %v2154
      %2181 = vmatmul.f32.gmra.mxu0 %v2160
      %v2182 = vpop.f32.mrf.mxu0
      %v2183 = vadd.f32 0.0, %v2182
      %2184 = vmatmul.f32.gmra.mxu0 %v2163
      %v2185 = vpop.f32.mrf.mxu0
      %v2186 = vadd.f32 0.0, %v2185
      %2187 = vdwg.mxu0
      %v2188 = vadd.f32 %v2081, %v2183
      %v2189 = vadd.f32 %v2082, %v2186
      %v2190 = vld [vmem:[%s5] sm:$0xff]
      %v2191 = vld [vmem:[%s5 + $0x8] sm:$0xff]
      %2193 = vset.pattern.permute.xlu0 0
      %2194 = vperm.xlu0 %2193, %v2190
      %v2195 = vpop.permute.xlu0 %2194
      %2198 = vset.pattern.permute.xlu0 0
      %2199 = vperm.xlu0 %2198, %v2191
      %v2200 = vpop.permute.xlu0 %2199
      %v2202 = vadd.f32 %v2188, %v2195
      %v2203 = vadd.f32 %v2189, %v2200
      %v2204 = vmax.f32 %v2202, 0.0
      %v2205 = vmax.f32 %v2203, 0.0
      %v2206 = vld [vmem:[%s6] sm:$0xff]
      %v2207 = vld [vmem:[%s6 + $0x8] sm:$0xff]
      %v2208 = vld [vmem:[%s6 + $0x10] sm:$0xff]
      %v2209 = vld [vmem:[%s6 + $0x18] sm:$0xff]
      %v2210 = vld [vmem:[%s6 + $0x20] sm:$0xff]
      %v2211 = vld [vmem:[%s6 + $0x28] sm:$0xff]
      %v2212 = vld [vmem:[%s6 + $0x30] sm:$0xff]
      %v2213 = vld [vmem:[%s6 + $0x38] sm:$0xff]
      %v2215 = vsel %vm437, %v2204, 0
      %v2218 = vsel %vm437, %v2205, 0
      %2220 = vmatpush.msra.mxu0 0.0
      %2221 = vmatpush.msra.mxu0 0.0
      %2222 = vmatpush.msra.mxu0 0.0
      %2223 = vmatpush.msra.mxu0 0.0
      %2224 = vmatpush.msra.mxu0 0.0
      %2225 = vmatpush.msra.mxu0 0.0
      %2226 = vmatpush.msra.mxu0 0.0
      %2227 = vmatpush.msra.mxu0 0.0
      %2228 = vmatpush.msra.mxu0 %v2213
      %2229 = vmatpush.msra.mxu0 %v2212
      %2230 = vmatpush.msra.mxu0 %v2211
      %2231 = vmatpush.msra.mxu0 %v2210
      %2232 = vmatpush.msra.mxu0 %v2209
      %2233 = vmatpush.msra.mxu0 %v2208
      %2234 = vmatpush.msra.mxu0 %v2207
      %2235 = vmatpush.msra.mxu0 %v2206
      %2236 = vmatmul.f32.gmra.mxu0 %v2215
      %v2237 = vpop.f32.mrf.mxu0
      %v2238 = vadd.f32 0.0, %v2237
      %2239 = vmatmul.f32.gmra.mxu0 %v2218
      %v2240 = vpop.f32.mrf.mxu0
      %v2241 = vadd.f32 0.0, %v2240
      %2242 = vdwg.mxu0
      %v2243 = vld [vmem:[%s7] sm:$0xff]
      %v2244 = vld [vmem:[%s7 + $0x8] sm:$0xff]
      %v2245 = vld [vmem:[%s7 + $0x10] sm:$0xff]
      %v2246 = vld [vmem:[%s7 + $0x18] sm:$0xff]
      %s2247 = scalar_lea.vmem %s6, 64
      %v2248 = vld [vmem:[%s2247] sm:$0xff]
      %v2249 = vld [vmem:[%s2247 + $0x8] sm:$0xff]
      %v2250 = vld [vmem:[%s2247 + $0x10] sm:$0xff]
      %v2251 = vld [vmem:[%s2247 + $0x18] sm:$0xff]
      %v2252 = vld [vmem:[%s2247 + $0x20] sm:$0xff]
      %v2253 = vld [vmem:[%s2247 + $0x28] sm:$0xff]
      %v2254 = vld [vmem:[%s2247 + $0x30] sm:$0xff]
      %v2255 = vld [vmem:[%s2247 + $0x38] sm:$0xff]
      %2256 = vmatpush.msra.mxu0 0.0
      %2257 = vmatpush.msra.mxu0 0.0
      %2258 = vmatpush.msra.mxu0 0.0
      %2259 = vmatpush.msra.mxu0 0.0
      %2260 = vmatpush.msra.mxu0 0.0
      %2261 = vmatpush.msra.mxu0 0.0
      %2262 = vmatpush.msra.mxu0 0.0
      %2263 = vmatpush.msra.mxu0 0.0
      %2264 = vmatpush.msra.mxu0 %v2255
      %2265 = vmatpush.msra.mxu0 %v2254
      %2266 = vmatpush.msra.mxu0 %v2253
      %2267 = vmatpush.msra.mxu0 %v2252
      %2268 = vmatpush.msra.mxu0 %v2251
      %2269 = vmatpush.msra.mxu0 %v2250
      %2270 = vmatpush.msra.mxu0 %v2249
      %2271 = vmatpush.msra.mxu0 %v2248
      %2272 = vmatmul.f32.gmra.mxu0 %v2215
      %v2273 = vpop.f32.mrf.mxu0
      %v2274 = vadd.f32 0.0, %v2273
      %2275 = vmatmul.f32.gmra.mxu0 %v2218
      %v2276 = vpop.f32.mrf.mxu0
      %v2277 = vadd.f32 0.0, %v2276
      %2278 = vdwg.mxu0
      %s2279 = scalar_lea.vmem %s7, 32
      %v2280 = vld [vmem:[%s2279] sm:$0xff]
      %v2281 = vld [vmem:[%s2279 + $0x8] sm:$0xff]
      %v2282 = vld [vmem:[%s2279 + $0x10] sm:$0xff]
      %v2283 = vld [vmem:[%s2279 + $0x18] sm:$0xff]
      %vm2284 = vcmask 130048
      %v2286 = vsel %vm2284, %v2280, 0
      %v2289 = vsel %vm2284, %v2281, 0
      %v2292 = vsel %vm2284, %v2282, 0
      %v2295 = vsel %vm2284, %v2283, 0
      %2297 = vmatpush.msra.mxu0 0.0
      %2298 = vmatpush.msra.mxu0 0.0
      %2299 = vmatpush.msra.mxu0 0.0
      %2300 = vmatpush.msra.mxu0 0.0
      %2301 = vmatpush.msra.mxu0 0.0
      %2302 = vmatpush.msra.mxu0 0.0
      %2303 = vmatpush.msra.mxu0 0.0
      %2304 = vmatpush.msra.mxu0 0.0
      %2305 = vmatpush.msra.mxu0 0.0
      %2306 = vmatpush.msra.mxu0 0.0
      %2307 = vmatpush.msra.mxu0 0.0
      %2308 = vmatpush.msra.mxu0 0.0
      %2309 = vmatpush.msra.mxu0 0.0
      %2310 = vmatpush.msra.mxu0 0.0
      %2311 = vmatpush.msra.mxu0 %v2277
      %2312 = vmatpush.msra.mxu0 %v2274
      %2313 = vmatmul.f32.gmra.mxu0 %v2286
      %v2314 = vpop.f32.mrf.mxu0
      %v2315 = vadd.f32 0.0, %v2314
      %2316 = vmatmul.f32.gmra.mxu0 %v2289
      %v2317 = vpop.f32.mrf.mxu0
      %v2318 = vadd.f32 0.0, %v2317
      %2319 = vmatmul.f32.gmra.mxu0 %v2292
      %v2320 = vpop.f32.mrf.mxu0
      %v2321 = vadd.f32 0.0, %v2320
      %2322 = vmatmul.f32.gmra.mxu0 %v2295
      %v2323 = vpop.f32.mrf.mxu0
      %v2324 = vadd.f32 0.0, %v2323
      %2325 = vdwg.mxu0
      %v2327 = vsel %vm2284, %v2243, 0
      %v2330 = vsel %vm2284, %v2244, 0
      %v2333 = vsel %vm2284, %v2245, 0
      %v2336 = vsel %vm2284, %v2246, 0
      %2338 = vmatpush.msra.mxu0 0.0
      %2339 = vmatpush.msra.mxu0 0.0
      %2340 = vmatpush.msra.mxu0 0.0
      %2341 = vmatpush.msra.mxu0 0.0
      %2342 = vmatpush.msra.mxu0 0.0
      %2343 = vmatpush.msra.mxu0 0.0
      %2344 = vmatpush.msra.mxu0 0.0
      %2345 = vmatpush.msra.mxu0 0.0
      %2346 = vmatpush.msra.mxu0 0.0
      %2347 = vmatpush.msra.mxu0 0.0
      %2348 = vmatpush.msra.mxu0 0.0
      %2349 = vmatpush.msra.mxu0 0.0
      %2350 = vmatpush.msra.mxu0 0.0
      %2351 = vmatpush.msra.mxu0 0.0
      %2352 = vmatpush.msra.mxu0 %v2241
      %2353 = vmatpush.msra.mxu0 %v2238
      %2354 = vmatmul.f32.gmra.mxu0 %v2327
      %v2355 = vpop.f32.mrf.mxu0
      %v2356 = vadd.f32 %v2315, %v2355
      %2357 = vmatmul.f32.gmra.mxu0 %v2330
      %v2358 = vpop.f32.mrf.mxu0
      %v2359 = vadd.f32 %v2318, %v2358
      %2360 = vmatmul.f32.gmra.mxu0 %v2333
      %v2361 = vpop.f32.mrf.mxu0
      %v2362 = vadd.f32 %v2321, %v2361
      %2363 = vmatmul.f32.gmra.mxu0 %v2336
      %v2364 = vpop.f32.mrf.mxu0
      %v2365 = vadd.f32 %v2324, %v2364
      %2366 = vdwg.mxu0
      %s2367 = scalar_lea.vmem %s6, 128
      %v2368 = vld [vmem:[%s2367] sm:$0xff]
      %v2369 = vld [vmem:[%s2367 + $0x8] sm:$0xff]
      %v2370 = vld [vmem:[%s2367 + $0x10] sm:$0xff]
      %v2371 = vld [vmem:[%s2367 + $0x18] sm:$0xff]
      %v2372 = vld [vmem:[%s2367 + $0x20] sm:$0xff]
      %v2373 = vld [vmem:[%s2367 + $0x28] sm:$0xff]
      %v2374 = vld [vmem:[%s2367 + $0x30] sm:$0xff]
      %v2375 = vld [vmem:[%s2367 + $0x38] sm:$0xff]
      %2376 = vmatpush.msra.mxu0 0.0
      %2377 = vmatpush.msra.mxu0 0.0
      %2378 = vmatpush.msra.mxu0 0.0
      %2379 = vmatpush.msra.mxu0 0.0
      %2380 = vmatpush.msra.mxu0 0.0
      %2381 = vmatpush.msra.mxu0 0.0
      %2382 = vmatpush.msra.mxu0 0.0
      %2383 = vmatpush.msra.mxu0 0.0
      %2384 = vmatpush.msra.mxu0 %v2375
      %2385 = vmatpush.msra.mxu0 %v2374
      %2386 = vmatpush.msra.mxu0 %v2373
      %2387 = vmatpush.msra.mxu0 %v2372
      %2388 = vmatpush.msra.mxu0 %v2371
      %2389 = vmatpush.msra.mxu0 %v2370
      %2390 = vmatpush.msra.mxu0 %v2369
      %2391 = vmatpush.msra.mxu0 %v2368
      %2392 = vmatmul.f32.gmra.mxu0 %v2215
      %v2393 = vpop.f32.mrf.mxu0
      %v2394 = vadd.f32 0.0, %v2393
      %2395 = vmatmul.f32.gmra.mxu0 %v2218
      %v2396 = vpop.f32.mrf.mxu0
      %v2397 = vadd.f32 0.0, %v2396
      %2398 = vdwg.mxu0
      %s2399 = scalar_lea.vmem %s7, 64
      %v2400 = vld [vmem:[%s2399] sm:$0xff]
      %v2401 = vld [vmem:[%s2399 + $0x8] sm:$0xff]
      %v2402 = vld [vmem:[%s2399 + $0x10] sm:$0xff]
      %v2403 = vld [vmem:[%s2399 + $0x18] sm:$0xff]
      %v2405 = vsel %vm2284, %v2400, 0
      %v2408 = vsel %vm2284, %v2401, 0
      %v2411 = vsel %vm2284, %v2402, 0
      %v2414 = vsel %vm2284, %v2403, 0
      %2416 = vmatpush.msra.mxu0 0.0
      %2417 = vmatpush.msra.mxu0 0.0
      %2418 = vmatpush.msra.mxu0 0.0
      %2419 = vmatpush.msra.mxu0 0.0
      %2420 = vmatpush.msra.mxu0 0.0
      %2421 = vmatpush.msra.mxu0 0.0
      %2422 = vmatpush.msra.mxu0 0.0
      %2423 = vmatpush.msra.mxu0 0.0
      %2424 = vmatpush.msra.mxu0 0.0
      %2425 = vmatpush.msra.mxu0 0.0
      %2426 = vmatpush.msra.mxu0 0.0
      %2427 = vmatpush.msra.mxu0 0.0
      %2428 = vmatpush.msra.mxu0 0.0
      %2429 = vmatpush.msra.mxu0 0.0
      %2430 = vmatpush.msra.mxu0 %v2397
      %2431 = vmatpush.msra.mxu0 %v2394
      %2432 = vmatmul.f32.gmra.mxu0 %v2405
      %v2433 = vpop.f32.mrf.mxu0
      %v2434 = vadd.f32 0.0, %v2433
      %2435 = vmatmul.f32.gmra.mxu0 %v2408
      %v2436 = vpop.f32.mrf.mxu0
      %v2437 = vadd.f32 0.0, %v2436
      %2438 = vmatmul.f32.gmra.mxu0 %v2411
      %v2439 = vpop.f32.mrf.mxu0
      %v2440 = vadd.f32 0.0, %v2439
      %2441 = vmatmul.f32.gmra.mxu0 %v2414
      %v2442 = vpop.f32.mrf.mxu0
      %v2443 = vadd.f32 0.0, %v2442
      %2444 = vdwg.mxu0
      %v2445 = vadd.f32 %v2356, %v2434
      %v2446 = vadd.f32 %v2359, %v2437
      %v2447 = vadd.f32 %v2362, %v2440
      %v2448 = vadd.f32 %v2365, %v2443
      %s2449 = scalar_lea.vmem %s6, 192
      %v2450 = vld [vmem:[%s2449] sm:$0xff]
      %v2451 = vld [vmem:[%s2449 + $0x8] sm:$0xff]
      %v2452 = vld [vmem:[%s2449 + $0x10] sm:$0xff]
      %v2453 = vld [vmem:[%s2449 + $0x18] sm:$0xff]
      %v2454 = vld [vmem:[%s2449 + $0x20] sm:$0xff]
      %v2455 = vld [vmem:[%s2449 + $0x28] sm:$0xff]
      %v2456 = vld [vmem:[%s2449 + $0x30] sm:$0xff]
      %v2457 = vld [vmem:[%s2449 + $0x38] sm:$0xff]
      %2458 = vmatpush.msra.mxu0 0.0
      %2459 = vmatpush.msra.mxu0 0.0
      %2460 = vmatpush.msra.mxu0 0.0
      %2461 = vmatpush.msra.mxu0 0.0
      %2462 = vmatpush.msra.mxu0 0.0
      %2463 = vmatpush.msra.mxu0 0.0
      %2464 = vmatpush.msra.mxu0 0.0
      %2465 = vmatpush.msra.mxu0 0.0
      %2466 = vmatpush.msra.mxu0 %v2457
      %2467 = vmatpush.msra.mxu0 %v2456
      %2468 = vmatpush.msra.mxu0 %v2455
      %2469 = vmatpush.msra.mxu0 %v2454
      %2470 = vmatpush.msra.mxu0 %v2453
      %2471 = vmatpush.msra.mxu0 %v2452
      %2472 = vmatpush.msra.mxu0 %v2451
      %2473 = vmatpush.msra.mxu0 %v2450
      %2474 = vmatmul.f32.gmra.mxu0 %v2215
      %v2475 = vpop.f32.mrf.mxu0
      %v2476 = vadd.f32 0.0, %v2475
      %2477 = vmatmul.f32.gmra.mxu0 %v2218
      %v2478 = vpop.f32.mrf.mxu0
      %v2479 = vadd.f32 0.0, %v2478
      %2480 = vdwg.mxu0
      %s2481 = scalar_lea.vmem %s7, 96
      %v2482 = vld [vmem:[%s2481] sm:$0xff]
      %v2483 = vld [vmem:[%s2481 + $0x8] sm:$0xff]
      %v2484 = vld [vmem:[%s2481 + $0x10] sm:$0xff]
      %v2485 = vld [vmem:[%s2481 + $0x18] sm:$0xff]
      %v2487 = vsel %vm2284, %v2482, 0
      %v2490 = vsel %vm2284, %v2483, 0
      %v2493 = vsel %vm2284, %v2484, 0
      %v2496 = vsel %vm2284, %v2485, 0
      %2498 = vmatpush.msra.mxu0 0.0
      %2499 = vmatpush.msra.mxu0 0.0
      %2500 = vmatpush.msra.mxu0 0.0
      %2501 = vmatpush.msra.mxu0 0.0
      %2502 = vmatpush.msra.mxu0 0.0
      %2503 = vmatpush.msra.mxu0 0.0
      %2504 = vmatpush.msra.mxu0 0.0
      %2505 = vmatpush.msra.mxu0 0.0
      %2506 = vmatpush.msra.mxu0 0.0
      %2507 = vmatpush.msra.mxu0 0.0
      %2508 = vmatpush.msra.mxu0 0.0
      %2509 = vmatpush.msra.mxu0 0.0
      %2510 = vmatpush.msra.mxu0 0.0
      %2511 = vmatpush.msra.mxu0 0.0
      %2512 = vmatpush.msra.mxu0 %v2479
      %2513 = vmatpush.msra.mxu0 %v2476
      %2514 = vmatmul.f32.gmra.mxu0 %v2487
      %v2515 = vpop.f32.mrf.mxu0
      %v2516 = vadd.f32 0.0, %v2515
      %2517 = vmatmul.f32.gmra.mxu0 %v2490
      %v2518 = vpop.f32.mrf.mxu0
      %v2519 = vadd.f32 0.0, %v2518
      %2520 = vmatmul.f32.gmra.mxu0 %v2493
      %v2521 = vpop.f32.mrf.mxu0
      %v2522 = vadd.f32 0.0, %v2521
      %2523 = vmatmul.f32.gmra.mxu0 %v2496
      %v2524 = vpop.f32.mrf.mxu0
      %v2525 = vadd.f32 0.0, %v2524
      %2526 = vdwg.mxu0
      %v2527 = vadd.f32 %v2445, %v2516
      %v2528 = vadd.f32 %v2446, %v2519
      %v2529 = vadd.f32 %v2447, %v2522
      %v2530 = vadd.f32 %v2448, %v2525
      %s2531 = scalar_lea.vmem %s6, 256
      %v2532 = vld [vmem:[%s2531] sm:$0xff]
      %v2533 = vld [vmem:[%s2531 + $0x8] sm:$0xff]
      %v2534 = vld [vmem:[%s2531 + $0x10] sm:$0xff]
      %v2535 = vld [vmem:[%s2531 + $0x18] sm:$0xff]
      %v2536 = vld [vmem:[%s2531 + $0x20] sm:$0xff]
      %v2537 = vld [vmem:[%s2531 + $0x28] sm:$0xff]
      %v2538 = vld [vmem:[%s2531 + $0x30] sm:$0xff]
      %v2539 = vld [vmem:[%s2531 + $0x38] sm:$0xff]
      %2540 = vmatpush.msra.mxu0 0.0
      %2541 = vmatpush.msra.mxu0 0.0
      %2542 = vmatpush.msra.mxu0 0.0
      %2543 = vmatpush.msra.mxu0 0.0
      %2544 = vmatpush.msra.mxu0 0.0
      %2545 = vmatpush.msra.mxu0 0.0
      %2546 = vmatpush.msra.mxu0 0.0
      %2547 = vmatpush.msra.mxu0 0.0
      %2548 = vmatpush.msra.mxu0 %v2539
      %2549 = vmatpush.msra.mxu0 %v2538
      %2550 = vmatpush.msra.mxu0 %v2537
      %2551 = vmatpush.msra.mxu0 %v2536
      %2552 = vmatpush.msra.mxu0 %v2535
      %2553 = vmatpush.msra.mxu0 %v2534
      %2554 = vmatpush.msra.mxu0 %v2533
      %2555 = vmatpush.msra.mxu0 %v2532
      %2556 = vmatmul.f32.gmra.mxu0 %v2215
      %v2557 = vpop.f32.mrf.mxu0
      %v2558 = vadd.f32 0.0, %v2557
      %2559 = vmatmul.f32.gmra.mxu0 %v2218
      %v2560 = vpop.f32.mrf.mxu0
      %v2561 = vadd.f32 0.0, %v2560
      %2562 = vdwg.mxu0
      %s2563 = scalar_lea.vmem %s7, 128
      %v2564 = vld [vmem:[%s2563] sm:$0xff]
      %v2565 = vld [vmem:[%s2563 + $0x8] sm:$0xff]
      %v2566 = vld [vmem:[%s2563 + $0x10] sm:$0xff]
      %v2567 = vld [vmem:[%s2563 + $0x18] sm:$0xff]
      %v2569 = vsel %vm2284, %v2564, 0
      %v2572 = vsel %vm2284, %v2565, 0
      %v2575 = vsel %vm2284, %v2566, 0
      %v2578 = vsel %vm2284, %v2567, 0
      %2580 = vmatpush.msra.mxu0 0.0
      %2581 = vmatpush.msra.mxu0 0.0
      %2582 = vmatpush.msra.mxu0 0.0
      %2583 = vmatpush.msra.mxu0 0.0
      %2584 = vmatpush.msra.mxu0 0.0
      %2585 = vmatpush.msra.mxu0 0.0
      %2586 = vmatpush.msra.mxu0 0.0
      %2587 = vmatpush.msra.mxu0 0.0
      %2588 = vmatpush.msra.mxu0 0.0
      %2589 = vmatpush.msra.mxu0 0.0
      %2590 = vmatpush.msra.mxu0 0.0
      %2591 = vmatpush.msra.mxu0 0.0
      %2592 = vmatpush.msra.mxu0 0.0
      %2593 = vmatpush.msra.mxu0 0.0
      %2594 = vmatpush.msra.mxu0 %v2561
      %2595 = vmatpush.msra.mxu0 %v2558
      %2596 = vmatmul.f32.gmra.mxu0 %v2569
      %v2597 = vpop.f32.mrf.mxu0
      %v2598 = vadd.f32 0.0, %v2597
      %2599 = vmatmul.f32.gmra.mxu0 %v2572
      %v2600 = vpop.f32.mrf.mxu0
      %v2601 = vadd.f32 0.0, %v2600
      %2602 = vmatmul.f32.gmra.mxu0 %v2575
      %v2603 = vpop.f32.mrf.mxu0
      %v2604 = vadd.f32 0.0, %v2603
      %2605 = vmatmul.f32.gmra.mxu0 %v2578
      %v2606 = vpop.f32.mrf.mxu0
      %v2607 = vadd.f32 0.0, %v2606
      %2608 = vdwg.mxu0
      %v2609 = vadd.f32 %v2527, %v2598
      %v2610 = vadd.f32 %v2528, %v2601
      %v2611 = vadd.f32 %v2529, %v2604
      %v2612 = vadd.f32 %v2530, %v2607
      %s2613 = scalar_lea.vmem %s6, 320
      %v2614 = vld [vmem:[%s2613] sm:$0xff]
      %v2615 = vld [vmem:[%s2613 + $0x8] sm:$0xff]
      %v2616 = vld [vmem:[%s2613 + $0x10] sm:$0xff]
      %v2617 = vld [vmem:[%s2613 + $0x18] sm:$0xff]
      %v2618 = vld [vmem:[%s2613 + $0x20] sm:$0xff]
      %v2619 = vld [vmem:[%s2613 + $0x28] sm:$0xff]
      %v2620 = vld [vmem:[%s2613 + $0x30] sm:$0xff]
      %v2621 = vld [vmem:[%s2613 + $0x38] sm:$0xff]
      %2622 = vmatpush.msra.mxu0 0.0
      %2623 = vmatpush.msra.mxu0 0.0
      %2624 = vmatpush.msra.mxu0 0.0
      %2625 = vmatpush.msra.mxu0 0.0
      %2626 = vmatpush.msra.mxu0 0.0
      %2627 = vmatpush.msra.mxu0 0.0
      %2628 = vmatpush.msra.mxu0 0.0
      %2629 = vmatpush.msra.mxu0 0.0
      %2630 = vmatpush.msra.mxu0 %v2621
      %2631 = vmatpush.msra.mxu0 %v2620
      %2632 = vmatpush.msra.mxu0 %v2619
      %2633 = vmatpush.msra.mxu0 %v2618
      %2634 = vmatpush.msra.mxu0 %v2617
      %2635 = vmatpush.msra.mxu0 %v2616
      %2636 = vmatpush.msra.mxu0 %v2615
      %2637 = vmatpush.msra.mxu0 %v2614
      %2638 = vmatmul.f32.gmra.mxu0 %v2215
      %v2639 = vpop.f32.mrf.mxu0
      %v2640 = vadd.f32 0.0, %v2639
      %2641 = vmatmul.f32.gmra.mxu0 %v2218
      %v2642 = vpop.f32.mrf.mxu0
      %v2643 = vadd.f32 0.0, %v2642
      %2644 = vdwg.mxu0
      %s2645 = scalar_lea.vmem %s7, 160
      %v2646 = vld [vmem:[%s2645] sm:$0xff]
      %v2647 = vld [vmem:[%s2645 + $0x8] sm:$0xff]
      %v2648 = vld [vmem:[%s2645 + $0x10] sm:$0xff]
      %v2649 = vld [vmem:[%s2645 + $0x18] sm:$0xff]
      %v2651 = vsel %vm2284, %v2646, 0
      %v2654 = vsel %vm2284, %v2647, 0
      %v2657 = vsel %vm2284, %v2648, 0
      %v2660 = vsel %vm2284, %v2649, 0
      %2662 = vmatpush.msra.mxu0 0.0
      %2663 = vmatpush.msra.mxu0 0.0
      %2664 = vmatpush.msra.mxu0 0.0
      %2665 = vmatpush.msra.mxu0 0.0
      %2666 = vmatpush.msra.mxu0 0.0
      %2667 = vmatpush.msra.mxu0 0.0
      %2668 = vmatpush.msra.mxu0 0.0
      %2669 = vmatpush.msra.mxu0 0.0
      %2670 = vmatpush.msra.mxu0 0.0
      %2671 = vmatpush.msra.mxu0 0.0
      %2672 = vmatpush.msra.mxu0 0.0
      %2673 = vmatpush.msra.mxu0 0.0
      %2674 = vmatpush.msra.mxu0 0.0
      %2675 = vmatpush.msra.mxu0 0.0
      %2676 = vmatpush.msra.mxu0 %v2643
      %2677 = vmatpush.msra.mxu0 %v2640
      %2678 = vmatmul.f32.gmra.mxu0 %v2651
      %v2679 = vpop.f32.mrf.mxu0
      %v2680 = vadd.f32 0.0, %v2679
      %2681 = vmatmul.f32.gmra.mxu0 %v2654
      %v2682 = vpop.f32.mrf.mxu0
      %v2683 = vadd.f32 0.0, %v2682
      %2684 = vmatmul.f32.gmra.mxu0 %v2657
      %v2685 = vpop.f32.mrf.mxu0
      %v2686 = vadd.f32 0.0, %v2685
      %2687 = vmatmul.f32.gmra.mxu0 %v2660
      %v2688 = vpop.f32.mrf.mxu0
      %v2689 = vadd.f32 0.0, %v2688
      %2690 = vdwg.mxu0
      %v2691 = vadd.f32 %v2609, %v2680
      %v2692 = vadd.f32 %v2610, %v2683
      %v2693 = vadd.f32 %v2611, %v2686
      %v2694 = vadd.f32 %v2612, %v2689
      %s2695 = scalar_lea.vmem %s6, 384
      %v2696 = vld [vmem:[%s2695] sm:$0xff]
      %v2697 = vld [vmem:[%s2695 + $0x8] sm:$0xff]
      %v2698 = vld [vmem:[%s2695 + $0x10] sm:$0xff]
      %v2699 = vld [vmem:[%s2695 + $0x18] sm:$0xff]
      %v2700 = vld [vmem:[%s2695 + $0x20] sm:$0xff]
      %v2701 = vld [vmem:[%s2695 + $0x28] sm:$0xff]
      %v2702 = vld [vmem:[%s2695 + $0x30] sm:$0xff]
      %v2703 = vld [vmem:[%s2695 + $0x38] sm:$0xff]
      %2704 = vmatpush.msra.mxu0 0.0
      %2705 = vmatpush.msra.mxu0 0.0
      %2706 = vmatpush.msra.mxu0 0.0
      %2707 = vmatpush.msra.mxu0 0.0
      %2708 = vmatpush.msra.mxu0 0.0
      %2709 = vmatpush.msra.mxu0 0.0
      %2710 = vmatpush.msra.mxu0 0.0
      %2711 = vmatpush.msra.mxu0 0.0
      %2712 = vmatpush.msra.mxu0 %v2703
      %2713 = vmatpush.msra.mxu0 %v2702
      %2714 = vmatpush.msra.mxu0 %v2701
      %2715 = vmatpush.msra.mxu0 %v2700
      %2716 = vmatpush.msra.mxu0 %v2699
      %2717 = vmatpush.msra.mxu0 %v2698
      %2718 = vmatpush.msra.mxu0 %v2697
      %2719 = vmatpush.msra.mxu0 %v2696
      %2720 = vmatmul.f32.gmra.mxu0 %v2215
      %v2721 = vpop.f32.mrf.mxu0
      %v2722 = vadd.f32 0.0, %v2721
      %2723 = vmatmul.f32.gmra.mxu0 %v2218
      %v2724 = vpop.f32.mrf.mxu0
      %v2725 = vadd.f32 0.0, %v2724
      %2726 = vdwg.mxu0
      %s2727 = scalar_lea.vmem %s7, 192
      %v2728 = vld [vmem:[%s2727] sm:$0xff]
      %v2729 = vld [vmem:[%s2727 + $0x8] sm:$0xff]
      %v2730 = vld [vmem:[%s2727 + $0x10] sm:$0xff]
      %v2731 = vld [vmem:[%s2727 + $0x18] sm:$0xff]
      %v2733 = vsel %vm2284, %v2728, 0
      %v2736 = vsel %vm2284, %v2729, 0
      %v2739 = vsel %vm2284, %v2730, 0
      %v2742 = vsel %vm2284, %v2731, 0
      %2744 = vmatpush.msra.mxu0 0.0
      %2745 = vmatpush.msra.mxu0 0.0
      %2746 = vmatpush.msra.mxu0 0.0
      %2747 = vmatpush.msra.mxu0 0.0
      %2748 = vmatpush.msra.mxu0 0.0
      %2749 = vmatpush.msra.mxu0 0.0
      %2750 = vmatpush.msra.mxu0 0.0
      %2751 = vmatpush.msra.mxu0 0.0
      %2752 = vmatpush.msra.mxu0 0.0
      %2753 = vmatpush.msra.mxu0 0.0
      %2754 = vmatpush.msra.mxu0 0.0
      %2755 = vmatpush.msra.mxu0 0.0
      %2756 = vmatpush.msra.mxu0 0.0
      %2757 = vmatpush.msra.mxu0 0.0
      %2758 = vmatpush.msra.mxu0 %v2725
      %2759 = vmatpush.msra.mxu0 %v2722
      %2760 = vmatmul.f32.gmra.mxu0 %v2733
      %v2761 = vpop.f32.mrf.mxu0
      %v2762 = vadd.f32 0.0, %v2761
      %2763 = vmatmul.f32.gmra.mxu0 %v2736
      %v2764 = vpop.f32.mrf.mxu0
      %v2765 = vadd.f32 0.0, %v2764
      %2766 = vmatmul.f32.gmra.mxu0 %v2739
      %v2767 = vpop.f32.mrf.mxu0
      %v2768 = vadd.f32 0.0, %v2767
      %2769 = vmatmul.f32.gmra.mxu0 %v2742
      %v2770 = vpop.f32.mrf.mxu0
      %v2771 = vadd.f32 0.0, %v2770
      %2772 = vdwg.mxu0
      %v2773 = vadd.f32 %v2691, %v2762
      %v2774 = vadd.f32 %v2692, %v2765
      %v2775 = vadd.f32 %v2693, %v2768
      %v2776 = vadd.f32 %v2694, %v2771
      %s2777 = scalar_lea.vmem %s6, 448
      %v2778 = vld [vmem:[%s2777] sm:$0xff]
      %v2779 = vld [vmem:[%s2777 + $0x8] sm:$0xff]
      %v2780 = vld [vmem:[%s2777 + $0x10] sm:$0xff]
      %v2781 = vld [vmem:[%s2777 + $0x18] sm:$0xff]
      %v2782 = vld [vmem:[%s2777 + $0x20] sm:$0xff]
      %v2783 = vld [vmem:[%s2777 + $0x28] sm:$0xff]
      %v2784 = vld [vmem:[%s2777 + $0x30] sm:$0xff]
      %v2785 = vld [vmem:[%s2777 + $0x38] sm:$0xff]
      %2786 = vmatpush.msra.mxu0 0.0
      %2787 = vmatpush.msra.mxu0 0.0
      %2788 = vmatpush.msra.mxu0 0.0
      %2789 = vmatpush.msra.mxu0 0.0
      %2790 = vmatpush.msra.mxu0 0.0
      %2791 = vmatpush.msra.mxu0 0.0
      %2792 = vmatpush.msra.mxu0 0.0
      %2793 = vmatpush.msra.mxu0 0.0
      %2794 = vmatpush.msra.mxu0 %v2785
      %2795 = vmatpush.msra.mxu0 %v2784
      %2796 = vmatpush.msra.mxu0 %v2783
      %2797 = vmatpush.msra.mxu0 %v2782
      %2798 = vmatpush.msra.mxu0 %v2781
      %2799 = vmatpush.msra.mxu0 %v2780
      %2800 = vmatpush.msra.mxu0 %v2779
      %2801 = vmatpush.msra.mxu0 %v2778
      %2802 = vmatmul.f32.gmra.mxu0 %v2215
      %v2803 = vpop.f32.mrf.mxu0
      %v2804 = vadd.f32 0.0, %v2803
      %2805 = vmatmul.f32.gmra.mxu0 %v2218
      %v2806 = vpop.f32.mrf.mxu0
      %v2807 = vadd.f32 0.0, %v2806
      %2808 = vdwg.mxu0
      %s2809 = scalar_lea.vmem %s7, 224
      %v2810 = vld [vmem:[%s2809] sm:$0xff]
      %v2811 = vld [vmem:[%s2809 + $0x8] sm:$0xff]
      %v2812 = vld [vmem:[%s2809 + $0x10] sm:$0xff]
      %v2813 = vld [vmem:[%s2809 + $0x18] sm:$0xff]
      %v2815 = vsel %vm2284, %v2810, 0
      %v2818 = vsel %vm2284, %v2811, 0
      %v2821 = vsel %vm2284, %v2812, 0
      %v2824 = vsel %vm2284, %v2813, 0
      %2826 = vmatpush.msra.mxu0 0.0
      %2827 = vmatpush.msra.mxu0 0.0
      %2828 = vmatpush.msra.mxu0 0.0
      %2829 = vmatpush.msra.mxu0 0.0
      %2830 = vmatpush.msra.mxu0 0.0
      %2831 = vmatpush.msra.mxu0 0.0
      %2832 = vmatpush.msra.mxu0 0.0
      %2833 = vmatpush.msra.mxu0 0.0
      %2834 = vmatpush.msra.mxu0 0.0
      %2835 = vmatpush.msra.mxu0 0.0
      %2836 = vmatpush.msra.mxu0 0.0
      %2837 = vmatpush.msra.mxu0 0.0
      %2838 = vmatpush.msra.mxu0 0.0
      %2839 = vmatpush.msra.mxu0 0.0
      %2840 = vmatpush.msra.mxu0 %v2807
      %2841 = vmatpush.msra.mxu0 %v2804
      %2842 = vmatmul.f32.gmra.mxu0 %v2815
      %v2843 = vpop.f32.mrf.mxu0
      %v2844 = vadd.f32 0.0, %v2843
      %2845 = vmatmul.f32.gmra.mxu0 %v2818
      %v2846 = vpop.f32.mrf.mxu0
      %v2847 = vadd.f32 0.0, %v2846
      %2848 = vmatmul.f32.gmra.mxu0 %v2821
      %v2849 = vpop.f32.mrf.mxu0
      %v2850 = vadd.f32 0.0, %v2849
      %2851 = vmatmul.f32.gmra.mxu0 %v2824
      %v2852 = vpop.f32.mrf.mxu0
      %v2853 = vadd.f32 0.0, %v2852
      %2854 = vdwg.mxu0
      %v2855 = vadd.f32 %v2773, %v2844
      %v2856 = vadd.f32 %v2774, %v2847
      %v2857 = vadd.f32 %v2775, %v2850
      %v2858 = vadd.f32 %v2776, %v2853
      %s2859 = scalar_lea.vmem %s6, 512
      %v2860 = vld [vmem:[%s2859] sm:$0xff]
      %v2861 = vld [vmem:[%s2859 + $0x8] sm:$0xff]
      %v2862 = vld [vmem:[%s2859 + $0x10] sm:$0xff]
      %v2863 = vld [vmem:[%s2859 + $0x18] sm:$0xff]
      %v2864 = vld [vmem:[%s2859 + $0x20] sm:$0xff]
      %v2865 = vld [vmem:[%s2859 + $0x28] sm:$0xff]
      %v2866 = vld [vmem:[%s2859 + $0x30] sm:$0xff]
      %v2867 = vld [vmem:[%s2859 + $0x38] sm:$0xff]
      %2868 = vmatpush.msra.mxu0 0.0
      %2869 = vmatpush.msra.mxu0 0.0
      %2870 = vmatpush.msra.mxu0 0.0
      %2871 = vmatpush.msra.mxu0 0.0
      %2872 = vmatpush.msra.mxu0 0.0
      %2873 = vmatpush.msra.mxu0 0.0
      %2874 = vmatpush.msra.mxu0 0.0
      %2875 = vmatpush.msra.mxu0 0.0
      %2876 = vmatpush.msra.mxu0 %v2867
      %2877 = vmatpush.msra.mxu0 %v2866
      %2878 = vmatpush.msra.mxu0 %v2865
      %2879 = vmatpush.msra.mxu0 %v2864
      %2880 = vmatpush.msra.mxu0 %v2863
      %2881 = vmatpush.msra.mxu0 %v2862
      %2882 = vmatpush.msra.mxu0 %v2861
      %2883 = vmatpush.msra.mxu0 %v2860
      %2884 = vmatmul.f32.gmra.mxu0 %v2215
      %v2885 = vpop.f32.mrf.mxu0
      %v2886 = vadd.f32 0.0, %v2885
      %2887 = vmatmul.f32.gmra.mxu0 %v2218
      %v2888 = vpop.f32.mrf.mxu0
      %v2889 = vadd.f32 0.0, %v2888
      %2890 = vdwg.mxu0
      %s2891 = scalar_lea.vmem %s7, 256
      %v2892 = vld [vmem:[%s2891] sm:$0xff]
      %v2893 = vld [vmem:[%s2891 + $0x8] sm:$0xff]
      %v2894 = vld [vmem:[%s2891 + $0x10] sm:$0xff]
      %v2895 = vld [vmem:[%s2891 + $0x18] sm:$0xff]
      %v2897 = vsel %vm2284, %v2892, 0
      %v2900 = vsel %vm2284, %v2893, 0
      %v2903 = vsel %vm2284, %v2894, 0
      %v2906 = vsel %vm2284, %v2895, 0
      %2908 = vmatpush.msra.mxu0 0.0
      %2909 = vmatpush.msra.mxu0 0.0
      %2910 = vmatpush.msra.mxu0 0.0
      %2911 = vmatpush.msra.mxu0 0.0
      %2912 = vmatpush.msra.mxu0 0.0
      %2913 = vmatpush.msra.mxu0 0.0
      %2914 = vmatpush.msra.mxu0 0.0
      %2915 = vmatpush.msra.mxu0 0.0
      %2916 = vmatpush.msra.mxu0 0.0
      %2917 = vmatpush.msra.mxu0 0.0
      %2918 = vmatpush.msra.mxu0 0.0
      %2919 = vmatpush.msra.mxu0 0.0
      %2920 = vmatpush.msra.mxu0 0.0
      %2921 = vmatpush.msra.mxu0 0.0
      %2922 = vmatpush.msra.mxu0 %v2889
      %2923 = vmatpush.msra.mxu0 %v2886
      %2924 = vmatmul.f32.gmra.mxu0 %v2897
      %v2925 = vpop.f32.mrf.mxu0
      %v2926 = vadd.f32 0.0, %v2925
      %2927 = vmatmul.f32.gmra.mxu0 %v2900
      %v2928 = vpop.f32.mrf.mxu0
      %v2929 = vadd.f32 0.0, %v2928
      %2930 = vmatmul.f32.gmra.mxu0 %v2903
      %v2931 = vpop.f32.mrf.mxu0
      %v2932 = vadd.f32 0.0, %v2931
      %2933 = vmatmul.f32.gmra.mxu0 %v2906
      %v2934 = vpop.f32.mrf.mxu0
      %v2935 = vadd.f32 0.0, %v2934
      %2936 = vdwg.mxu0
      %v2937 = vadd.f32 %v2855, %v2926
      %v2938 = vadd.f32 %v2856, %v2929
      %v2939 = vadd.f32 %v2857, %v2932
      %v2940 = vadd.f32 %v2858, %v2935
      %s2941 = scalar_lea.vmem %s6, 576
      %v2942 = vld [vmem:[%s2941] sm:$0xff]
      %v2943 = vld [vmem:[%s2941 + $0x8] sm:$0xff]
      %v2944 = vld [vmem:[%s2941 + $0x10] sm:$0xff]
      %v2945 = vld [vmem:[%s2941 + $0x18] sm:$0xff]
      %v2946 = vld [vmem:[%s2941 + $0x20] sm:$0xff]
      %v2947 = vld [vmem:[%s2941 + $0x28] sm:$0xff]
      %v2948 = vld [vmem:[%s2941 + $0x30] sm:$0xff]
      %v2949 = vld [vmem:[%s2941 + $0x38] sm:$0xff]
      %2950 = vmatpush.msra.mxu0 0.0
      %2951 = vmatpush.msra.mxu0 0.0
      %2952 = vmatpush.msra.mxu0 0.0
      %2953 = vmatpush.msra.mxu0 0.0
      %2954 = vmatpush.msra.mxu0 0.0
      %2955 = vmatpush.msra.mxu0 0.0
      %2956 = vmatpush.msra.mxu0 0.0
      %2957 = vmatpush.msra.mxu0 0.0
      %2958 = vmatpush.msra.mxu0 %v2949
      %2959 = vmatpush.msra.mxu0 %v2948
      %2960 = vmatpush.msra.mxu0 %v2947
      %2961 = vmatpush.msra.mxu0 %v2946
      %2962 = vmatpush.msra.mxu0 %v2945
      %2963 = vmatpush.msra.mxu0 %v2944
      %2964 = vmatpush.msra.mxu0 %v2943
      %2965 = vmatpush.msra.mxu0 %v2942
      %2966 = vmatmul.f32.gmra.mxu0 %v2215
      %v2967 = vpop.f32.mrf.mxu0
      %v2968 = vadd.f32 0.0, %v2967
      %2969 = vmatmul.f32.gmra.mxu0 %v2218
      %v2970 = vpop.f32.mrf.mxu0
      %v2971 = vadd.f32 0.0, %v2970
      %2972 = vdwg.mxu0
      %s2973 = scalar_lea.vmem %s7, 288
      %v2974 = vld [vmem:[%s2973] sm:$0xff]
      %v2975 = vld [vmem:[%s2973 + $0x8] sm:$0xff]
      %v2976 = vld [vmem:[%s2973 + $0x10] sm:$0xff]
      %v2977 = vld [vmem:[%s2973 + $0x18] sm:$0xff]
      %v2979 = vsel %vm2284, %v2974, 0
      %v2982 = vsel %vm2284, %v2975, 0
      %v2985 = vsel %vm2284, %v2976, 0
      %v2988 = vsel %vm2284, %v2977, 0
      %2990 = vmatpush.msra.mxu0 0.0
      %2991 = vmatpush.msra.mxu0 0.0
      %2992 = vmatpush.msra.mxu0 0.0
      %2993 = vmatpush.msra.mxu0 0.0
      %2994 = vmatpush.msra.mxu0 0.0
      %2995 = vmatpush.msra.mxu0 0.0
      %2996 = vmatpush.msra.mxu0 0.0
      %2997 = vmatpush.msra.mxu0 0.0
      %2998 = vmatpush.msra.mxu0 0.0
      %2999 = vmatpush.msra.mxu0 0.0
      %3000 = vmatpush.msra.mxu0 0.0
      %3001 = vmatpush.msra.mxu0 0.0
      %3002 = vmatpush.msra.mxu0 0.0
      %3003 = vmatpush.msra.mxu0 0.0
      %3004 = vmatpush.msra.mxu0 %v2971
      %3005 = vmatpush.msra.mxu0 %v2968
      %3006 = vmatmul.f32.gmra.mxu0 %v2979
      %v3007 = vpop.f32.mrf.mxu0
      %v3008 = vadd.f32 0.0, %v3007
      %3009 = vmatmul.f32.gmra.mxu0 %v2982
      %v3010 = vpop.f32.mrf.mxu0
      %v3011 = vadd.f32 0.0, %v3010
      %3012 = vmatmul.f32.gmra.mxu0 %v2985
      %v3013 = vpop.f32.mrf.mxu0
      %v3014 = vadd.f32 0.0, %v3013
      %3015 = vmatmul.f32.gmra.mxu0 %v2988
      %v3016 = vpop.f32.mrf.mxu0
      %v3017 = vadd.f32 0.0, %v3016
      %3018 = vdwg.mxu0
      %v3019 = vadd.f32 %v2937, %v3008
      %v3020 = vadd.f32 %v2938, %v3011
      %v3021 = vadd.f32 %v2939, %v3014
      %v3022 = vadd.f32 %v2940, %v3017
      %s3023 = scalar_lea.vmem %s6, 640
      %v3024 = vld [vmem:[%s3023] sm:$0xff]
      %v3025 = vld [vmem:[%s3023 + $0x8] sm:$0xff]
      %v3026 = vld [vmem:[%s3023 + $0x10] sm:$0xff]
      %v3027 = vld [vmem:[%s3023 + $0x18] sm:$0xff]
      %v3028 = vld [vmem:[%s3023 + $0x20] sm:$0xff]
      %v3029 = vld [vmem:[%s3023 + $0x28] sm:$0xff]
      %v3030 = vld [vmem:[%s3023 + $0x30] sm:$0xff]
      %v3031 = vld [vmem:[%s3023 + $0x38] sm:$0xff]
      %3032 = vmatpush.msra.mxu0 0.0
      %3033 = vmatpush.msra.mxu0 0.0
      %3034 = vmatpush.msra.mxu0 0.0
      %3035 = vmatpush.msra.mxu0 0.0
      %3036 = vmatpush.msra.mxu0 0.0
      %3037 = vmatpush.msra.mxu0 0.0
      %3038 = vmatpush.msra.mxu0 0.0
      %3039 = vmatpush.msra.mxu0 0.0
      %3040 = vmatpush.msra.mxu0 %v3031
      %3041 = vmatpush.msra.mxu0 %v3030
      %3042 = vmatpush.msra.mxu0 %v3029
      %3043 = vmatpush.msra.mxu0 %v3028
      %3044 = vmatpush.msra.mxu0 %v3027
      %3045 = vmatpush.msra.mxu0 %v3026
      %3046 = vmatpush.msra.mxu0 %v3025
      %3047 = vmatpush.msra.mxu0 %v3024
      %3048 = vmatmul.f32.gmra.mxu0 %v2215
      %v3049 = vpop.f32.mrf.mxu0
      %v3050 = vadd.f32 0.0, %v3049
      %3051 = vmatmul.f32.gmra.mxu0 %v2218
      %v3052 = vpop.f32.mrf.mxu0
      %v3053 = vadd.f32 0.0, %v3052
      %3054 = vdwg.mxu0
      %s3055 = scalar_lea.vmem %s7, 320
      %v3056 = vld [vmem:[%s3055] sm:$0xff]
      %v3057 = vld [vmem:[%s3055 + $0x8] sm:$0xff]
      %v3058 = vld [vmem:[%s3055 + $0x10] sm:$0xff]
      %v3059 = vld [vmem:[%s3055 + $0x18] sm:$0xff]
      %v3061 = vsel %vm2284, %v3056, 0
      %v3064 = vsel %vm2284, %v3057, 0
      %v3067 = vsel %vm2284, %v3058, 0
      %v3070 = vsel %vm2284, %v3059, 0
      %3072 = vmatpush.msra.mxu0 0.0
      %3073 = vmatpush.msra.mxu0 0.0
      %3074 = vmatpush.msra.mxu0 0.0
      %3075 = vmatpush.msra.mxu0 0.0
      %3076 = vmatpush.msra.mxu0 0.0
      %3077 = vmatpush.msra.mxu0 0.0
      %3078 = vmatpush.msra.mxu0 0.0
      %3079 = vmatpush.msra.mxu0 0.0
      %3080 = vmatpush.msra.mxu0 0.0
      %3081 = vmatpush.msra.mxu0 0.0
      %3082 = vmatpush.msra.mxu0 0.0
      %3083 = vmatpush.msra.mxu0 0.0
      %3084 = vmatpush.msra.mxu0 0.0
      %3085 = vmatpush.msra.mxu0 0.0
      %3086 = vmatpush.msra.mxu0 %v3053
      %3087 = vmatpush.msra.mxu0 %v3050
      %3088 = vmatmul.f32.gmra.mxu0 %v3061
      %v3089 = vpop.f32.mrf.mxu0
      %v3090 = vadd.f32 0.0, %v3089
      %3091 = vmatmul.f32.gmra.mxu0 %v3064
      %v3092 = vpop.f32.mrf.mxu0
      %v3093 = vadd.f32 0.0, %v3092
      %3094 = vmatmul.f32.gmra.mxu0 %v3067
      %v3095 = vpop.f32.mrf.mxu0
      %v3096 = vadd.f32 0.0, %v3095
      %3097 = vmatmul.f32.gmra.mxu0 %v3070
      %v3098 = vpop.f32.mrf.mxu0
      %v3099 = vadd.f32 0.0, %v3098
      %3100 = vdwg.mxu0
      %v3101 = vadd.f32 %v3019, %v3090
      %v3102 = vadd.f32 %v3020, %v3093
      %v3103 = vadd.f32 %v3021, %v3096
      %v3104 = vadd.f32 %v3022, %v3099
      %s3105 = scalar_lea.vmem %s6, 704
      %v3106 = vld [vmem:[%s3105] sm:$0xff]
      %v3107 = vld [vmem:[%s3105 + $0x8] sm:$0xff]
      %v3108 = vld [vmem:[%s3105 + $0x10] sm:$0xff]
      %v3109 = vld [vmem:[%s3105 + $0x18] sm:$0xff]
      %v3110 = vld [vmem:[%s3105 + $0x20] sm:$0xff]
      %v3111 = vld [vmem:[%s3105 + $0x28] sm:$0xff]
      %v3112 = vld [vmem:[%s3105 + $0x30] sm:$0xff]
      %v3113 = vld [vmem:[%s3105 + $0x38] sm:$0xff]
      %3114 = vmatpush.msra.mxu0 0.0
      %3115 = vmatpush.msra.mxu0 0.0
      %3116 = vmatpush.msra.mxu0 0.0
      %3117 = vmatpush.msra.mxu0 0.0
      %3118 = vmatpush.msra.mxu0 0.0
      %3119 = vmatpush.msra.mxu0 0.0
      %3120 = vmatpush.msra.mxu0 0.0
      %3121 = vmatpush.msra.mxu0 0.0
      %3122 = vmatpush.msra.mxu0 %v3113
      %3123 = vmatpush.msra.mxu0 %v3112
      %3124 = vmatpush.msra.mxu0 %v3111
      %3125 = vmatpush.msra.mxu0 %v3110
      %3126 = vmatpush.msra.mxu0 %v3109
      %3127 = vmatpush.msra.mxu0 %v3108
      %3128 = vmatpush.msra.mxu0 %v3107
      %3129 = vmatpush.msra.mxu0 %v3106
      %3130 = vmatmul.f32.gmra.mxu0 %v2215
      %v3131 = vpop.f32.mrf.mxu0
      %v3132 = vadd.f32 0.0, %v3131
      %3133 = vmatmul.f32.gmra.mxu0 %v2218
      %v3134 = vpop.f32.mrf.mxu0
      %v3135 = vadd.f32 0.0, %v3134
      %3136 = vdwg.mxu0
      %s3137 = scalar_lea.vmem %s7, 352
      %v3138 = vld [vmem:[%s3137] sm:$0xff]
      %v3139 = vld [vmem:[%s3137 + $0x8] sm:$0xff]
      %v3140 = vld [vmem:[%s3137 + $0x10] sm:$0xff]
      %v3141 = vld [vmem:[%s3137 + $0x18] sm:$0xff]
      %v3143 = vsel %vm2284, %v3138, 0
      %v3146 = vsel %vm2284, %v3139, 0
      %v3149 = vsel %vm2284, %v3140, 0
      %v3152 = vsel %vm2284, %v3141, 0
      %3154 = vmatpush.msra.mxu0 0.0
      %3155 = vmatpush.msra.mxu0 0.0
      %3156 = vmatpush.msra.mxu0 0.0
      %3157 = vmatpush.msra.mxu0 0.0
      %3158 = vmatpush.msra.mxu0 0.0
      %3159 = vmatpush.msra.mxu0 0.0
      %3160 = vmatpush.msra.mxu0 0.0
      %3161 = vmatpush.msra.mxu0 0.0
      %3162 = vmatpush.msra.mxu0 0.0
      %3163 = vmatpush.msra.mxu0 0.0
      %3164 = vmatpush.msra.mxu0 0.0
      %3165 = vmatpush.msra.mxu0 0.0
      %3166 = vmatpush.msra.mxu0 0.0
      %3167 = vmatpush.msra.mxu0 0.0
      %3168 = vmatpush.msra.mxu0 %v3135
      %3169 = vmatpush.msra.mxu0 %v3132
      %3170 = vmatmul.f32.gmra.mxu0 %v3143
      %v3171 = vpop.f32.mrf.mxu0
      %v3172 = vadd.f32 0.0, %v3171
      %3173 = vmatmul.f32.gmra.mxu0 %v3146
      %v3174 = vpop.f32.mrf.mxu0
      %v3175 = vadd.f32 0.0, %v3174
      %3176 = vmatmul.f32.gmra.mxu0 %v3149
      %v3177 = vpop.f32.mrf.mxu0
      %v3178 = vadd.f32 0.0, %v3177
      %3179 = vmatmul.f32.gmra.mxu0 %v3152
      %v3180 = vpop.f32.mrf.mxu0
      %v3181 = vadd.f32 0.0, %v3180
      %3182 = vdwg.mxu0
      %v3183 = vadd.f32 %v3101, %v3172
      %v3184 = vadd.f32 %v3102, %v3175
      %v3185 = vadd.f32 %v3103, %v3178
      %v3186 = vadd.f32 %v3104, %v3181
      %s3187 = scalar_lea.vmem %s6, 768
      %v3188 = vld [vmem:[%s3187] sm:$0xff]
      %v3189 = vld [vmem:[%s3187 + $0x8] sm:$0xff]
      %v3190 = vld [vmem:[%s3187 + $0x10] sm:$0xff]
      %v3191 = vld [vmem:[%s3187 + $0x18] sm:$0xff]
      %v3192 = vld [vmem:[%s3187 + $0x20] sm:$0xff]
      %v3193 = vld [vmem:[%s3187 + $0x28] sm:$0xff]
      %v3194 = vld [vmem:[%s3187 + $0x30] sm:$0xff]
      %v3195 = vld [vmem:[%s3187 + $0x38] sm:$0xff]
      %3196 = vmatpush.msra.mxu0 0.0
      %3197 = vmatpush.msra.mxu0 0.0
      %3198 = vmatpush.msra.mxu0 0.0
      %3199 = vmatpush.msra.mxu0 0.0
      %3200 = vmatpush.msra.mxu0 0.0
      %3201 = vmatpush.msra.mxu0 0.0
      %3202 = vmatpush.msra.mxu0 0.0
      %3203 = vmatpush.msra.mxu0 0.0
      %3204 = vmatpush.msra.mxu0 %v3195
      %3205 = vmatpush.msra.mxu0 %v3194
      %3206 = vmatpush.msra.mxu0 %v3193
      %3207 = vmatpush.msra.mxu0 %v3192
      %3208 = vmatpush.msra.mxu0 %v3191
      %3209 = vmatpush.msra.mxu0 %v3190
      %3210 = vmatpush.msra.mxu0 %v3189
      %3211 = vmatpush.msra.mxu0 %v3188
      %3212 = vmatmul.f32.gmra.mxu0 %v2215
      %v3213 = vpop.f32.mrf.mxu0
      %v3214 = vadd.f32 0.0, %v3213
      %3215 = vmatmul.f32.gmra.mxu0 %v2218
      %v3216 = vpop.f32.mrf.mxu0
      %v3217 = vadd.f32 0.0, %v3216
      %3218 = vdwg.mxu0
      %s3219 = scalar_lea.vmem %s7, 384
      %v3220 = vld [vmem:[%s3219] sm:$0xff]
      %v3221 = vld [vmem:[%s3219 + $0x8] sm:$0xff]
      %v3222 = vld [vmem:[%s3219 + $0x10] sm:$0xff]
      %v3223 = vld [vmem:[%s3219 + $0x18] sm:$0xff]
      %v3225 = vsel %vm2284, %v3220, 0
      %v3228 = vsel %vm2284, %v3221, 0
      %v3231 = vsel %vm2284, %v3222, 0
      %v3234 = vsel %vm2284, %v3223, 0
      %3236 = vmatpush.msra.mxu0 0.0
      %3237 = vmatpush.msra.mxu0 0.0
      %3238 = vmatpush.msra.mxu0 0.0
      %3239 = vmatpush.msra.mxu0 0.0
      %3240 = vmatpush.msra.mxu0 0.0
      %3241 = vmatpush.msra.mxu0 0.0
      %3242 = vmatpush.msra.mxu0 0.0
      %3243 = vmatpush.msra.mxu0 0.0
      %3244 = vmatpush.msra.mxu0 0.0
      %3245 = vmatpush.msra.mxu0 0.0
      %3246 = vmatpush.msra.mxu0 0.0
      %3247 = vmatpush.msra.mxu0 0.0
      %3248 = vmatpush.msra.mxu0 0.0
      %3249 = vmatpush.msra.mxu0 0.0
      %3250 = vmatpush.msra.mxu0 %v3217
      %3251 = vmatpush.msra.mxu0 %v3214
      %3252 = vmatmul.f32.gmra.mxu0 %v3225
      %v3253 = vpop.f32.mrf.mxu0
      %v3254 = vadd.f32 0.0, %v3253
      %3255 = vmatmul.f32.gmra.mxu0 %v3228
      %v3256 = vpop.f32.mrf.mxu0
      %v3257 = vadd.f32 0.0, %v3256
      %3258 = vmatmul.f32.gmra.mxu0 %v3231
      %v3259 = vpop.f32.mrf.mxu0
      %v3260 = vadd.f32 0.0, %v3259
      %3261 = vmatmul.f32.gmra.mxu0 %v3234
      %v3262 = vpop.f32.mrf.mxu0
      %v3263 = vadd.f32 0.0, %v3262
      %3264 = vdwg.mxu0
      %v3265 = vadd.f32 %v3183, %v3254
      %v3266 = vadd.f32 %v3184, %v3257
      %v3267 = vadd.f32 %v3185, %v3260
      %v3268 = vadd.f32 %v3186, %v3263
      %s3269 = scalar_lea.vmem %s6, 832
      %v3270 = vld [vmem:[%s3269] sm:$0xff]
      %v3271 = vld [vmem:[%s3269 + $0x8] sm:$0xff]
      %v3272 = vld [vmem:[%s3269 + $0x10] sm:$0xff]
      %v3273 = vld [vmem:[%s3269 + $0x18] sm:$0xff]
      %v3274 = vld [vmem:[%s3269 + $0x20] sm:$0xff]
      %v3275 = vld [vmem:[%s3269 + $0x28] sm:$0xff]
      %v3276 = vld [vmem:[%s3269 + $0x30] sm:$0xff]
      %v3277 = vld [vmem:[%s3269 + $0x38] sm:$0xff]
      %3278 = vmatpush.msra.mxu0 0.0
      %3279 = vmatpush.msra.mxu0 0.0
      %3280 = vmatpush.msra.mxu0 0.0
      %3281 = vmatpush.msra.mxu0 0.0
      %3282 = vmatpush.msra.mxu0 0.0
      %3283 = vmatpush.msra.mxu0 0.0
      %3284 = vmatpush.msra.mxu0 0.0
      %3285 = vmatpush.msra.mxu0 0.0
      %3286 = vmatpush.msra.mxu0 %v3277
      %3287 = vmatpush.msra.mxu0 %v3276
      %3288 = vmatpush.msra.mxu0 %v3275
      %3289 = vmatpush.msra.mxu0 %v3274
      %3290 = vmatpush.msra.mxu0 %v3273
      %3291 = vmatpush.msra.mxu0 %v3272
      %3292 = vmatpush.msra.mxu0 %v3271
      %3293 = vmatpush.msra.mxu0 %v3270
      %3294 = vmatmul.f32.gmra.mxu0 %v2215
      %v3295 = vpop.f32.mrf.mxu0
      %v3296 = vadd.f32 0.0, %v3295
      %3297 = vmatmul.f32.gmra.mxu0 %v2218
      %v3298 = vpop.f32.mrf.mxu0
      %v3299 = vadd.f32 0.0, %v3298
      %3300 = vdwg.mxu0
      %s3301 = scalar_lea.vmem %s7, 416
      %v3302 = vld [vmem:[%s3301] sm:$0xff]
      %v3303 = vld [vmem:[%s3301 + $0x8] sm:$0xff]
      %v3304 = vld [vmem:[%s3301 + $0x10] sm:$0xff]
      %v3305 = vld [vmem:[%s3301 + $0x18] sm:$0xff]
      %v3307 = vsel %vm2284, %v3302, 0
      %v3310 = vsel %vm2284, %v3303, 0
      %v3313 = vsel %vm2284, %v3304, 0
      %v3316 = vsel %vm2284, %v3305, 0
      %3318 = vmatpush.msra.mxu0 0.0
      %3319 = vmatpush.msra.mxu0 0.0
      %3320 = vmatpush.msra.mxu0 0.0
      %3321 = vmatpush.msra.mxu0 0.0
      %3322 = vmatpush.msra.mxu0 0.0
      %3323 = vmatpush.msra.mxu0 0.0
      %3324 = vmatpush.msra.mxu0 0.0
      %3325 = vmatpush.msra.mxu0 0.0
      %3326 = vmatpush.msra.mxu0 0.0
      %3327 = vmatpush.msra.mxu0 0.0
      %3328 = vmatpush.msra.mxu0 0.0
      %3329 = vmatpush.msra.mxu0 0.0
      %3330 = vmatpush.msra.mxu0 0.0
      %3331 = vmatpush.msra.mxu0 0.0
      %3332 = vmatpush.msra.mxu0 %v3299
      %3333 = vmatpush.msra.mxu0 %v3296
      %3334 = vmatmul.f32.gmra.mxu0 %v3307
      %v3335 = vpop.f32.mrf.mxu0
      %v3336 = vadd.f32 0.0, %v3335
      %3337 = vmatmul.f32.gmra.mxu0 %v3310
      %v3338 = vpop.f32.mrf.mxu0
      %v3339 = vadd.f32 0.0, %v3338
      %3340 = vmatmul.f32.gmra.mxu0 %v3313
      %v3341 = vpop.f32.mrf.mxu0
      %v3342 = vadd.f32 0.0, %v3341
      %3343 = vmatmul.f32.gmra.mxu0 %v3316
      %v3344 = vpop.f32.mrf.mxu0
      %v3345 = vadd.f32 0.0, %v3344
      %3346 = vdwg.mxu0
      %v3347 = vadd.f32 %v3265, %v3336
      %v3348 = vadd.f32 %v3266, %v3339
      %v3349 = vadd.f32 %v3267, %v3342
      %v3350 = vadd.f32 %v3268, %v3345
      %s3351 = scalar_lea.vmem %s6, 896
      %v3352 = vld [vmem:[%s3351] sm:$0xff]
      %v3353 = vld [vmem:[%s3351 + $0x8] sm:$0xff]
      %v3354 = vld [vmem:[%s3351 + $0x10] sm:$0xff]
      %v3355 = vld [vmem:[%s3351 + $0x18] sm:$0xff]
      %v3356 = vld [vmem:[%s3351 + $0x20] sm:$0xff]
      %v3357 = vld [vmem:[%s3351 + $0x28] sm:$0xff]
      %v3358 = vld [vmem:[%s3351 + $0x30] sm:$0xff]
      %v3359 = vld [vmem:[%s3351 + $0x38] sm:$0xff]
      %3360 = vmatpush.msra.mxu0 0.0
      %3361 = vmatpush.msra.mxu0 0.0
      %3362 = vmatpush.msra.mxu0 0.0
      %3363 = vmatpush.msra.mxu0 0.0
      %3364 = vmatpush.msra.mxu0 0.0
      %3365 = vmatpush.msra.mxu0 0.0
      %3366 = vmatpush.msra.mxu0 0.0
      %3367 = vmatpush.msra.mxu0 0.0
      %3368 = vmatpush.msra.mxu0 %v3359
      %3369 = vmatpush.msra.mxu0 %v3358
      %3370 = vmatpush.msra.mxu0 %v3357
      %3371 = vmatpush.msra.mxu0 %v3356
      %3372 = vmatpush.msra.mxu0 %v3355
      %3373 = vmatpush.msra.mxu0 %v3354
      %3374 = vmatpush.msra.mxu0 %v3353
      %3375 = vmatpush.msra.mxu0 %v3352
      %3376 = vmatmul.f32.gmra.mxu0 %v2215
      %v3377 = vpop.f32.mrf.mxu0
      %v3378 = vadd.f32 0.0, %v3377
      %3379 = vmatmul.f32.gmra.mxu0 %v2218
      %v3380 = vpop.f32.mrf.mxu0
      %v3381 = vadd.f32 0.0, %v3380
      %3382 = vdwg.mxu0
      %s3383 = scalar_lea.vmem %s7, 448
      %v3384 = vld [vmem:[%s3383] sm:$0xff]
      %v3385 = vld [vmem:[%s3383 + $0x8] sm:$0xff]
      %v3386 = vld [vmem:[%s3383 + $0x10] sm:$0xff]
      %v3387 = vld [vmem:[%s3383 + $0x18] sm:$0xff]
      %v3389 = vsel %vm2284, %v3384, 0
      %v3392 = vsel %vm2284, %v3385, 0
      %v3395 = vsel %vm2284, %v3386, 0
      %v3398 = vsel %vm2284, %v3387, 0
      %3400 = vmatpush.msra.mxu0 0.0
      %3401 = vmatpush.msra.mxu0 0.0
      %3402 = vmatpush.msra.mxu0 0.0
      %3403 = vmatpush.msra.mxu0 0.0
      %3404 = vmatpush.msra.mxu0 0.0
      %3405 = vmatpush.msra.mxu0 0.0
      %3406 = vmatpush.msra.mxu0 0.0
      %3407 = vmatpush.msra.mxu0 0.0
      %3408 = vmatpush.msra.mxu0 0.0
      %3409 = vmatpush.msra.mxu0 0.0
      %3410 = vmatpush.msra.mxu0 0.0
      %3411 = vmatpush.msra.mxu0 0.0
      %3412 = vmatpush.msra.mxu0 0.0
      %3413 = vmatpush.msra.mxu0 0.0
      %3414 = vmatpush.msra.mxu0 %v3381
      %3415 = vmatpush.msra.mxu0 %v3378
      %3416 = vmatmul.f32.gmra.mxu0 %v3389
      %v3417 = vpop.f32.mrf.mxu0
      %v3418 = vadd.f32 0.0, %v3417
      %3419 = vmatmul.f32.gmra.mxu0 %v3392
      %v3420 = vpop.f32.mrf.mxu0
      %v3421 = vadd.f32 0.0, %v3420
      %3422 = vmatmul.f32.gmra.mxu0 %v3395
      %v3423 = vpop.f32.mrf.mxu0
      %v3424 = vadd.f32 0.0, %v3423
      %3425 = vmatmul.f32.gmra.mxu0 %v3398
      %v3426 = vpop.f32.mrf.mxu0
      %v3427 = vadd.f32 0.0, %v3426
      %3428 = vdwg.mxu0
      %v3429 = vadd.f32 %v3347, %v3418
      %v3430 = vadd.f32 %v3348, %v3421
      %v3431 = vadd.f32 %v3349, %v3424
      %v3432 = vadd.f32 %v3350, %v3427
      %s3433 = scalar_lea.vmem %s6, 960
      %v3434 = vld [vmem:[%s3433] sm:$0xff]
      %v3435 = vld [vmem:[%s3433 + $0x8] sm:$0xff]
      %v3436 = vld [vmem:[%s3433 + $0x10] sm:$0xff]
      %v3437 = vld [vmem:[%s3433 + $0x18] sm:$0xff]
      %v3438 = vld [vmem:[%s3433 + $0x20] sm:$0xff]
      %v3439 = vld [vmem:[%s3433 + $0x28] sm:$0xff]
      %v3440 = vld [vmem:[%s3433 + $0x30] sm:$0xff]
      %v3441 = vld [vmem:[%s3433 + $0x38] sm:$0xff]
      %3442 = vmatpush.msra.mxu0 0.0
      %3443 = vmatpush.msra.mxu0 0.0
      %3444 = vmatpush.msra.mxu0 0.0
      %3445 = vmatpush.msra.mxu0 0.0
      %3446 = vmatpush.msra.mxu0 0.0
      %3447 = vmatpush.msra.mxu0 0.0
      %3448 = vmatpush.msra.mxu0 0.0
      %3449 = vmatpush.msra.mxu0 0.0
      %3450 = vmatpush.msra.mxu0 %v3441
      %3451 = vmatpush.msra.mxu0 %v3440
      %3452 = vmatpush.msra.mxu0 %v3439
      %3453 = vmatpush.msra.mxu0 %v3438
      %3454 = vmatpush.msra.mxu0 %v3437
      %3455 = vmatpush.msra.mxu0 %v3436
      %3456 = vmatpush.msra.mxu0 %v3435
      %3457 = vmatpush.msra.mxu0 %v3434
      %3458 = vmatmul.f32.gmra.mxu0 %v2215
      %v3459 = vpop.f32.mrf.mxu0
      %v3460 = vadd.f32 0.0, %v3459
      %3461 = vmatmul.f32.gmra.mxu0 %v2218
      %v3462 = vpop.f32.mrf.mxu0
      %v3463 = vadd.f32 0.0, %v3462
      %3464 = vdwg.mxu0
      %s3465 = scalar_lea.vmem %s7, 480
      %v3466 = vld [vmem:[%s3465] sm:$0xff]
      %v3467 = vld [vmem:[%s3465 + $0x8] sm:$0xff]
      %v3468 = vld [vmem:[%s3465 + $0x10] sm:$0xff]
      %v3469 = vld [vmem:[%s3465 + $0x18] sm:$0xff]
      %v3471 = vsel %vm2284, %v3466, 0
      %v3474 = vsel %vm2284, %v3467, 0
      %v3477 = vsel %vm2284, %v3468, 0
      %v3480 = vsel %vm2284, %v3469, 0
      %3482 = vmatpush.msra.mxu0 0.0
      %3483 = vmatpush.msra.mxu0 0.0
      %3484 = vmatpush.msra.mxu0 0.0
      %3485 = vmatpush.msra.mxu0 0.0
      %3486 = vmatpush.msra.mxu0 0.0
      %3487 = vmatpush.msra.mxu0 0.0
      %3488 = vmatpush.msra.mxu0 0.0
      %3489 = vmatpush.msra.mxu0 0.0
      %3490 = vmatpush.msra.mxu0 0.0
      %3491 = vmatpush.msra.mxu0 0.0
      %3492 = vmatpush.msra.mxu0 0.0
      %3493 = vmatpush.msra.mxu0 0.0
      %3494 = vmatpush.msra.mxu0 0.0
      %3495 = vmatpush.msra.mxu0 0.0
      %3496 = vmatpush.msra.mxu0 %v3463
      %3497 = vmatpush.msra.mxu0 %v3460
      %3498 = vmatmul.f32.gmra.mxu0 %v3471
      %v3499 = vpop.f32.mrf.mxu0
      %v3500 = vadd.f32 0.0, %v3499
      %3501 = vmatmul.f32.gmra.mxu0 %v3474
      %v3502 = vpop.f32.mrf.mxu0
      %v3503 = vadd.f32 0.0, %v3502
      %3504 = vmatmul.f32.gmra.mxu0 %v3477
      %v3505 = vpop.f32.mrf.mxu0
      %v3506 = vadd.f32 0.0, %v3505
      %3507 = vmatmul.f32.gmra.mxu0 %v3480
      %v3508 = vpop.f32.mrf.mxu0
      %v3509 = vadd.f32 0.0, %v3508
      %3510 = vdwg.mxu0
      %v3511 = vadd.f32 %v3429, %v3500
      %v3512 = vadd.f32 %v3430, %v3503
      %v3513 = vadd.f32 %v3431, %v3506
      %v3514 = vadd.f32 %v3432, %v3509
      %v3515 = vld [vmem:[%s8] sm:$0xff]
      %v3516 = vld [vmem:[%s8 + $0x8] sm:$0xff]
      %v3517 = vld [vmem:[%s8 + $0x10] sm:$0xff]
      %v3518 = vld [vmem:[%s8 + $0x18] sm:$0xff]
      %3520 = vset.pattern.permute.xlu0 0
      %3521 = vperm.xlu0 %3520, %v3515
      %v3522 = vpop.permute.xlu0 %3521
      %3525 = vset.pattern.permute.xlu0 0
      %3526 = vperm.xlu0 %3525, %v3516
      %v3527 = vpop.permute.xlu0 %3526
      %3530 = vset.pattern.permute.xlu0 0
      %3531 = vperm.xlu0 %3530, %v3517
      %v3532 = vpop.permute.xlu0 %3531
      %3535 = vset.pattern.permute.xlu0 0
      %3536 = vperm.xlu0 %3535, %v3518
      %v3537 = vpop.permute.xlu0 %3536
      %v3539 = vadd.f32 %v3511, %v3522
      %v3540 = vadd.f32 %v3512, %v3527
      %v3541 = vadd.f32 %v3513, %v3532
      %v3542 = vadd.f32 %v3514, %v3537
      %v3543 = vmax.f32 %v3539, 0.0
      %v3544 = vmax.f32 %v3540, 0.0
      %v3545 = vmax.f32 %v3541, 0.0
      %v3546 = vmax.f32 %v3542, 0.0
      %v3547 = vld [vmem:[%s9] sm:$0xff]
      %v3548 = vld [vmem:[%s9 + $0x8] sm:$0xff]
      %v3550 = vsel %vm2284, %v3543, 0
      %v3553 = vsel %vm2284, %v3544, 0
      %v3556 = vsel %vm2284, %v3545, 0
      %v3559 = vsel %vm2284, %v3546, 0
      %3561 = vmatpush.msra.mxu0 0.0
      %3562 = vmatpush.msra.mxu0 0.0
      %3563 = vmatpush.msra.mxu0 0.0
      %3564 = vmatpush.msra.mxu0 0.0
      %3565 = vmatpush.msra.mxu0 0.0
      %3566 = vmatpush.msra.mxu0 0.0
      %3567 = vmatpush.msra.mxu0 0.0
      %3568 = vmatpush.msra.mxu0 0.0
      %3569 = vmatpush.msra.mxu0 0.0
      %3570 = vmatpush.msra.mxu0 0.0
      %3571 = vmatpush.msra.mxu0 0.0
      %3572 = vmatpush.msra.mxu0 0.0
      %3573 = vmatpush.msra.mxu0 0.0
      %3574 = vmatpush.msra.mxu0 0.0
      %3575 = vmatpush.msra.mxu0 %v3548
      %3576 = vmatpush.msra.mxu0 %v3547
      %3577 = vmatmul.f32.gmra.mxu0 %v3550
      %v3578 = vpop.f32.mrf.mxu0
      %v3579 = vadd.f32 0.0, %v3578
      %3580 = vmatmul.f32.gmra.mxu0 %v3553
      %v3581 = vpop.f32.mrf.mxu0
      %v3582 = vadd.f32 0.0, %v3581
      %3583 = vmatmul.f32.gmra.mxu0 %v3556
      %v3584 = vpop.f32.mrf.mxu0
      %v3585 = vadd.f32 0.0, %v3584
      %3586 = vmatmul.f32.gmra.mxu0 %v3559
      %v3587 = vpop.f32.mrf.mxu0
      %v3588 = vadd.f32 0.0, %v3587
      %3589 = vdwg.mxu0
      %v3590 = vld [vmem:[%s10] sm:$0xff]
      %v3591 = vld [vmem:[%s10 + $0x8] sm:$0xff]
      %s3592 = scalar_lea.vmem %s9, 16
      %v3593 = vld [vmem:[%s3592] sm:$0xff]
      %v3594 = vld [vmem:[%s3592 + $0x8] sm:$0xff]
      %3595 = vmatpush.msra.mxu0 0.0
      %3596 = vmatpush.msra.mxu0 0.0
      %3597 = vmatpush.msra.mxu0 0.0
      %3598 = vmatpush.msra.mxu0 0.0
      %3599 = vmatpush.msra.mxu0 0.0
      %3600 = vmatpush.msra.mxu0 0.0
      %3601 = vmatpush.msra.mxu0 0.0
      %3602 = vmatpush.msra.mxu0 0.0
      %3603 = vmatpush.msra.mxu0 0.0
      %3604 = vmatpush.msra.mxu0 0.0
      %3605 = vmatpush.msra.mxu0 0.0
      %3606 = vmatpush.msra.mxu0 0.0
      %3607 = vmatpush.msra.mxu0 0.0
      %3608 = vmatpush.msra.mxu0 0.0
      %3609 = vmatpush.msra.mxu0 %v3594
      %3610 = vmatpush.msra.mxu0 %v3593
      %3611 = vmatmul.f32.gmra.mxu0 %v3550
      %v3612 = vpop.f32.mrf.mxu0
      %v3613 = vadd.f32 0.0, %v3612
      %3614 = vmatmul.f32.gmra.mxu0 %v3553
      %v3615 = vpop.f32.mrf.mxu0
      %v3616 = vadd.f32 0.0, %v3615
      %3617 = vmatmul.f32.gmra.mxu0 %v3556
      %v3618 = vpop.f32.mrf.mxu0
      %v3619 = vadd.f32 0.0, %v3618
      %3620 = vmatmul.f32.gmra.mxu0 %v3559
      %v3621 = vpop.f32.mrf.mxu0
      %v3622 = vadd.f32 0.0, %v3621
      %3623 = vdwg.mxu0
      %s3624 = scalar_lea.vmem %s10, 16
      %v3625 = vld [vmem:[%s3624] sm:$0xff]
      %v3626 = vld [vmem:[%s3624 + $0x8] sm:$0xff]
      %vm3627 = vcmask 261120
      %v3629 = vsel %vm3627, %v3625, 0
      %v3632 = vsel %vm3627, %v3626, 0
      %3634 = vmatpush.msra.mxu0 0.0
      %3635 = vmatpush.msra.mxu0 0.0
      %3636 = vmatpush.msra.mxu0 0.0
      %3637 = vmatpush.msra.mxu0 0.0
      %3638 = vmatpush.msra.mxu0 0.0
      %3639 = vmatpush.msra.mxu0 0.0
      %3640 = vmatpush.msra.mxu0 0.0
      %3641 = vmatpush.msra.mxu0 0.0
      %3642 = vmatpush.msra.mxu0 0.0
      %3643 = vmatpush.msra.mxu0 0.0
      %3644 = vmatpush.msra.mxu0 0.0
      %3645 = vmatpush.msra.mxu0 0.0
      %3646 = vmatpush.msra.mxu0 %v3622
      %3647 = vmatpush.msra.mxu0 %v3619
      %3648 = vmatpush.msra.mxu0 %v3616
      %3649 = vmatpush.msra.mxu0 %v3613
      %3650 = vmatmul.f32.gmra.mxu0 %v3629
      %v3651 = vpop.f32.mrf.mxu0
      %v3652 = vadd.f32 0.0, %v3651
      %3653 = vmatmul.f32.gmra.mxu0 %v3632
      %v3654 = vpop.f32.mrf.mxu0
      %v3655 = vadd.f32 0.0, %v3654
      %3656 = vdwg.mxu0
      %v3658 = vsel %vm3627, %v3590, 0
      %v3661 = vsel %vm3627, %v3591, 0
      %3663 = vmatpush.msra.mxu0 0.0
      %3664 = vmatpush.msra.mxu0 0.0
      %3665 = vmatpush.msra.mxu0 0.0
      %3666 = vmatpush.msra.mxu0 0.0
      %3667 = vmatpush.msra.mxu0 0.0
      %3668 = vmatpush.msra.mxu0 0.0
      %3669 = vmatpush.msra.mxu0 0.0
      %3670 = vmatpush.msra.mxu0 0.0
      %3671 = vmatpush.msra.mxu0 0.0
      %3672 = vmatpush.msra.mxu0 0.0
      %3673 = vmatpush.msra.mxu0 0.0
      %3674 = vmatpush.msra.mxu0 0.0
      %3675 = vmatpush.msra.mxu0 %v3588
      %3676 = vmatpush.msra.mxu0 %v3585
      %3677 = vmatpush.msra.mxu0 %v3582
      %3678 = vmatpush.msra.mxu0 %v3579
      %3679 = vmatmul.f32.gmra.mxu0 %v3658
      %v3680 = vpop.f32.mrf.mxu0
      %v3681 = vadd.f32 %v3652, %v3680
      %3682 = vmatmul.f32.gmra.mxu0 %v3661
      %v3683 = vpop.f32.mrf.mxu0
      %v3684 = vadd.f32 %v3655, %v3683
      %3685 = vdwg.mxu0
      %s3686 = scalar_lea.vmem %s9, 32
      %v3687 = vld [vmem:[%s3686] sm:$0xff]
      %v3688 = vld [vmem:[%s3686 + $0x8] sm:$0xff]
      %3689 = vmatpush.msra.mxu0 0.0
      %3690 = vmatpush.msra.mxu0 0.0
      %3691 = vmatpush.msra.mxu0 0.0
      %3692 = vmatpush.msra.mxu0 0.0
      %3693 = vmatpush.msra.mxu0 0.0
      %3694 = vmatpush.msra.mxu0 0.0
      %3695 = vmatpush.msra.mxu0 0.0
      %3696 = vmatpush.msra.mxu0 0.0
      %3697 = vmatpush.msra.mxu0 0.0
      %3698 = vmatpush.msra.mxu0 0.0
      %3699 = vmatpush.msra.mxu0 0.0
      %3700 = vmatpush.msra.mxu0 0.0
      %3701 = vmatpush.msra.mxu0 0.0
      %3702 = vmatpush.msra.mxu0 0.0
      %3703 = vmatpush.msra.mxu0 %v3688
      %3704 = vmatpush.msra.mxu0 %v3687
      %3705 = vmatmul.f32.gmra.mxu0 %v3550
      %v3706 = vpop.f32.mrf.mxu0
      %v3707 = vadd.f32 0.0, %v3706
      %3708 = vmatmul.f32.gmra.mxu0 %v3553
      %v3709 = vpop.f32.mrf.mxu0
      %v3710 = vadd.f32 0.0, %v3709
      %3711 = vmatmul.f32.gmra.mxu0 %v3556
      %v3712 = vpop.f32.mrf.mxu0
      %v3713 = vadd.f32 0.0, %v3712
      %3714 = vmatmul.f32.gmra.mxu0 %v3559
      %v3715 = vpop.f32.mrf.mxu0
      %v3716 = vadd.f32 0.0, %v3715
      %3717 = vdwg.mxu0
      %s3718 = scalar_lea.vmem %s10, 32
      %v3719 = vld [vmem:[%s3718] sm:$0xff]
      %v3720 = vld [vmem:[%s3718 + $0x8] sm:$0xff]
      %v3722 = vsel %vm3627, %v3719, 0
      %v3725 = vsel %vm3627, %v3720, 0
      %3727 = vmatpush.msra.mxu0 0.0
      %3728 = vmatpush.msra.mxu0 0.0
      %3729 = vmatpush.msra.mxu0 0.0
      %3730 = vmatpush.msra.mxu0 0.0
      %3731 = vmatpush.msra.mxu0 0.0
      %3732 = vmatpush.msra.mxu0 0.0
      %3733 = vmatpush.msra.mxu0 0.0
      %3734 = vmatpush.msra.mxu0 0.0
      %3735 = vmatpush.msra.mxu0 0.0
      %3736 = vmatpush.msra.mxu0 0.0
      %3737 = vmatpush.msra.mxu0 0.0
      %3738 = vmatpush.msra.mxu0 0.0
      %3739 = vmatpush.msra.mxu0 %v3716
      %3740 = vmatpush.msra.mxu0 %v3713
      %3741 = vmatpush.msra.mxu0 %v3710
      %3742 = vmatpush.msra.mxu0 %v3707
      %3743 = vmatmul.f32.gmra.mxu0 %v3722
      %v3744 = vpop.f32.mrf.mxu0
      %v3745 = vadd.f32 0.0, %v3744
      %3746 = vmatmul.f32.gmra.mxu0 %v3725
      %v3747 = vpop.f32.mrf.mxu0
      %v3748 = vadd.f32 0.0, %v3747
      %3749 = vdwg.mxu0
      %v3750 = vadd.f32 %v3681, %v3745
      %v3751 = vadd.f32 %v3684, %v3748
      %s3752 = scalar_lea.vmem %s9, 48
      %v3753 = vld [vmem:[%s3752] sm:$0xff]
      %v3754 = vld [vmem:[%s3752 + $0x8] sm:$0xff]
      %3755 = vmatpush.msra.mxu0 0.0
      %3756 = vmatpush.msra.mxu0 0.0
      %3757 = vmatpush.msra.mxu0 0.0
      %3758 = vmatpush.msra.mxu0 0.0
      %3759 = vmatpush.msra.mxu0 0.0
      %3760 = vmatpush.msra.mxu0 0.0
      %3761 = vmatpush.msra.mxu0 0.0
      %3762 = vmatpush.msra.mxu0 0.0
      %3763 = vmatpush.msra.mxu0 0.0
      %3764 = vmatpush.msra.mxu0 0.0
      %3765 = vmatpush.msra.mxu0 0.0
      %3766 = vmatpush.msra.mxu0 0.0
      %3767 = vmatpush.msra.mxu0 0.0
      %3768 = vmatpush.msra.mxu0 0.0
      %3769 = vmatpush.msra.mxu0 %v3754
      %3770 = vmatpush.msra.mxu0 %v3753
      %3771 = vmatmul.f32.gmra.mxu0 %v3550
      %v3772 = vpop.f32.mrf.mxu0
      %v3773 = vadd.f32 0.0, %v3772
      %3774 = vmatmul.f32.gmra.mxu0 %v3553
      %v3775 = vpop.f32.mrf.mxu0
      %v3776 = vadd.f32 0.0, %v3775
      %3777 = vmatmul.f32.gmra.mxu0 %v3556
      %v3778 = vpop.f32.mrf.mxu0
      %v3779 = vadd.f32 0.0, %v3778
      %3780 = vmatmul.f32.gmra.mxu0 %v3559
      %v3781 = vpop.f32.mrf.mxu0
      %v3782 = vadd.f32 0.0, %v3781
      %3783 = vdwg.mxu0
      %s3784 = scalar_lea.vmem %s10, 48
      %v3785 = vld [vmem:[%s3784] sm:$0xff]
      %v3786 = vld [vmem:[%s3784 + $0x8] sm:$0xff]
      %v3788 = vsel %vm3627, %v3785, 0
      %v3791 = vsel %vm3627, %v3786, 0
      %3793 = vmatpush.msra.mxu0 0.0
      %3794 = vmatpush.msra.mxu0 0.0
      %3795 = vmatpush.msra.mxu0 0.0
      %3796 = vmatpush.msra.mxu0 0.0
      %3797 = vmatpush.msra.mxu0 0.0
      %3798 = vmatpush.msra.mxu0 0.0
      %3799 = vmatpush.msra.mxu0 0.0
      %3800 = vmatpush.msra.mxu0 0.0
      %3801 = vmatpush.msra.mxu0 0.0
      %3802 = vmatpush.msra.mxu0 0.0
      %3803 = vmatpush.msra.mxu0 0.0
      %3804 = vmatpush.msra.mxu0 0.0
      %3805 = vmatpush.msra.mxu0 %v3782
      %3806 = vmatpush.msra.mxu0 %v3779
      %3807 = vmatpush.msra.mxu0 %v3776
      %3808 = vmatpush.msra.mxu0 %v3773
      %3809 = vmatmul.f32.gmra.mxu0 %v3788
      %v3810 = vpop.f32.mrf.mxu0
      %v3811 = vadd.f32 0.0, %v3810
      %3812 = vmatmul.f32.gmra.mxu0 %v3791
      %v3813 = vpop.f32.mrf.mxu0
      %v3814 = vadd.f32 0.0, %v3813
      %3815 = vdwg.mxu0
      %v3816 = vadd.f32 %v3750, %v3811
      %v3817 = vadd.f32 %v3751, %v3814
      %s3818 = scalar_lea.vmem %s9, 64
      %v3819 = vld [vmem:[%s3818] sm:$0xff]
      %v3820 = vld [vmem:[%s3818 + $0x8] sm:$0xff]
      %3821 = vmatpush.msra.mxu0 0.0
      %3822 = vmatpush.msra.mxu0 0.0
      %3823 = vmatpush.msra.mxu0 0.0
      %3824 = vmatpush.msra.mxu0 0.0
      %3825 = vmatpush.msra.mxu0 0.0
      %3826 = vmatpush.msra.mxu0 0.0
      %3827 = vmatpush.msra.mxu0 0.0
      %3828 = vmatpush.msra.mxu0 0.0
      %3829 = vmatpush.msra.mxu0 0.0
      %3830 = vmatpush.msra.mxu0 0.0
      %3831 = vmatpush.msra.mxu0 0.0
      %3832 = vmatpush.msra.mxu0 0.0
      %3833 = vmatpush.msra.mxu0 0.0
      %3834 = vmatpush.msra.mxu0 0.0
      %3835 = vmatpush.msra.mxu0 %v3820
      %3836 = vmatpush.msra.mxu0 %v3819
      %3837 = vmatmul.f32.gmra.mxu0 %v3550
      %v3838 = vpop.f32.mrf.mxu0
      %v3839 = vadd.f32 0.0, %v3838
      %3840 = vmatmul.f32.gmra.mxu0 %v3553
      %v3841 = vpop.f32.mrf.mxu0
      %v3842 = vadd.f32 0.0, %v3841
      %3843 = vmatmul.f32.gmra.mxu0 %v3556
      %v3844 = vpop.f32.mrf.mxu0
      %v3845 = vadd.f32 0.0, %v3844
      %3846 = vmatmul.f32.gmra.mxu0 %v3559
      %v3847 = vpop.f32.mrf.mxu0
      %v3848 = vadd.f32 0.0, %v3847
      %3849 = vdwg.mxu0
      %s3850 = scalar_lea.vmem %s10, 64
      %v3851 = vld [vmem:[%s3850] sm:$0xff]
      %v3852 = vld [vmem:[%s3850 + $0x8] sm:$0xff]
      %v3854 = vsel %vm3627, %v3851, 0
      %v3857 = vsel %vm3627, %v3852, 0
      %3859 = vmatpush.msra.mxu0 0.0
      %3860 = vmatpush.msra.mxu0 0.0
      %3861 = vmatpush.msra.mxu0 0.0
      %3862 = vmatpush.msra.mxu0 0.0
      %3863 = vmatpush.msra.mxu0 0.0
      %3864 = vmatpush.msra.mxu0 0.0
      %3865 = vmatpush.msra.mxu0 0.0
      %3866 = vmatpush.msra.mxu0 0.0
      %3867 = vmatpush.msra.mxu0 0.0
      %3868 = vmatpush.msra.mxu0 0.0
      %3869 = vmatpush.msra.mxu0 0.0
      %3870 = vmatpush.msra.mxu0 0.0
      %3871 = vmatpush.msra.mxu0 %v3848
      %3872 = vmatpush.msra.mxu0 %v3845
      %3873 = vmatpush.msra.mxu0 %v3842
      %3874 = vmatpush.msra.mxu0 %v3839
      %3875 = vmatmul.f32.gmra.mxu0 %v3854
      %v3876 = vpop.f32.mrf.mxu0
      %v3877 = vadd.f32 0.0, %v3876
      %3878 = vmatmul.f32.gmra.mxu0 %v3857
      %v3879 = vpop.f32.mrf.mxu0
      %v3880 = vadd.f32 0.0, %v3879
      %3881 = vdwg.mxu0
      %v3882 = vadd.f32 %v3816, %v3877
      %v3883 = vadd.f32 %v3817, %v3880
      %s3884 = scalar_lea.vmem %s9, 80
      %v3885 = vld [vmem:[%s3884] sm:$0xff]
      %v3886 = vld [vmem:[%s3884 + $0x8] sm:$0xff]
      %3887 = vmatpush.msra.mxu0 0.0
      %3888 = vmatpush.msra.mxu0 0.0
      %3889 = vmatpush.msra.mxu0 0.0
      %3890 = vmatpush.msra.mxu0 0.0
      %3891 = vmatpush.msra.mxu0 0.0
      %3892 = vmatpush.msra.mxu0 0.0
      %3893 = vmatpush.msra.mxu0 0.0
      %3894 = vmatpush.msra.mxu0 0.0
      %3895 = vmatpush.msra.mxu0 0.0
      %3896 = vmatpush.msra.mxu0 0.0
      %3897 = vmatpush.msra.mxu0 0.0
      %3898 = vmatpush.msra.mxu0 0.0
      %3899 = vmatpush.msra.mxu0 0.0
      %3900 = vmatpush.msra.mxu0 0.0
      %3901 = vmatpush.msra.mxu0 %v3886
      %3902 = vmatpush.msra.mxu0 %v3885
      %3903 = vmatmul.f32.gmra.mxu0 %v3550
      %v3904 = vpop.f32.mrf.mxu0
      %v3905 = vadd.f32 0.0, %v3904
      %3906 = vmatmul.f32.gmra.mxu0 %v3553
      %v3907 = vpop.f32.mrf.mxu0
      %v3908 = vadd.f32 0.0, %v3907
      %3909 = vmatmul.f32.gmra.mxu0 %v3556
      %v3910 = vpop.f32.mrf.mxu0
      %v3911 = vadd.f32 0.0, %v3910
      %3912 = vmatmul.f32.gmra.mxu0 %v3559
      %v3913 = vpop.f32.mrf.mxu0
      %v3914 = vadd.f32 0.0, %v3913
      %3915 = vdwg.mxu0
      %s3916 = scalar_lea.vmem %s10, 80
      %v3917 = vld [vmem:[%s3916] sm:$0xff]
      %v3918 = vld [vmem:[%s3916 + $0x8] sm:$0xff]
      %v3920 = vsel %vm3627, %v3917, 0
      %v3923 = vsel %vm3627, %v3918, 0
      %3925 = vmatpush.msra.mxu0 0.0
      %3926 = vmatpush.msra.mxu0 0.0
      %3927 = vmatpush.msra.mxu0 0.0
      %3928 = vmatpush.msra.mxu0 0.0
      %3929 = vmatpush.msra.mxu0 0.0
      %3930 = vmatpush.msra.mxu0 0.0
      %3931 = vmatpush.msra.mxu0 0.0
      %3932 = vmatpush.msra.mxu0 0.0
      %3933 = vmatpush.msra.mxu0 0.0
      %3934 = vmatpush.msra.mxu0 0.0
      %3935 = vmatpush.msra.mxu0 0.0
      %3936 = vmatpush.msra.mxu0 0.0
      %3937 = vmatpush.msra.mxu0 %v3914
      %3938 = vmatpush.msra.mxu0 %v3911
      %3939 = vmatpush.msra.mxu0 %v3908
      %3940 = vmatpush.msra.mxu0 %v3905
      %3941 = vmatmul.f32.gmra.mxu0 %v3920
      %v3942 = vpop.f32.mrf.mxu0
      %v3943 = vadd.f32 0.0, %v3942
      %3944 = vmatmul.f32.gmra.mxu0 %v3923
      %v3945 = vpop.f32.mrf.mxu0
      %v3946 = vadd.f32 0.0, %v3945
      %3947 = vdwg.mxu0
      %v3948 = vadd.f32 %v3882, %v3943
      %v3949 = vadd.f32 %v3883, %v3946
      %s3950 = scalar_lea.vmem %s9, 96
      %v3951 = vld [vmem:[%s3950] sm:$0xff]
      %v3952 = vld [vmem:[%s3950 + $0x8] sm:$0xff]
      %3953 = vmatpush.msra.mxu0 0.0
      %3954 = vmatpush.msra.mxu0 0.0
      %3955 = vmatpush.msra.mxu0 0.0
      %3956 = vmatpush.msra.mxu0 0.0
      %3957 = vmatpush.msra.mxu0 0.0
      %3958 = vmatpush.msra.mxu0 0.0
      %3959 = vmatpush.msra.mxu0 0.0
      %3960 = vmatpush.msra.mxu0 0.0
      %3961 = vmatpush.msra.mxu0 0.0
      %3962 = vmatpush.msra.mxu0 0.0
      %3963 = vmatpush.msra.mxu0 0.0
      %3964 = vmatpush.msra.mxu0 0.0
      %3965 = vmatpush.msra.mxu0 0.0
      %3966 = vmatpush.msra.mxu0 0.0
      %3967 = vmatpush.msra.mxu0 %v3952
      %3968 = vmatpush.msra.mxu0 %v3951
      %3969 = vmatmul.f32.gmra.mxu0 %v3550
      %v3970 = vpop.f32.mrf.mxu0
      %v3971 = vadd.f32 0.0, %v3970
      %3972 = vmatmul.f32.gmra.mxu0 %v3553
      %v3973 = vpop.f32.mrf.mxu0
      %v3974 = vadd.f32 0.0, %v3973
      %3975 = vmatmul.f32.gmra.mxu0 %v3556
      %v3976 = vpop.f32.mrf.mxu0
      %v3977 = vadd.f32 0.0, %v3976
      %3978 = vmatmul.f32.gmra.mxu0 %v3559
      %v3979 = vpop.f32.mrf.mxu0
      %v3980 = vadd.f32 0.0, %v3979
      %3981 = vdwg.mxu0
      %s3982 = scalar_lea.vmem %s10, 96
      %v3983 = vld [vmem:[%s3982] sm:$0xff]
      %v3984 = vld [vmem:[%s3982 + $0x8] sm:$0xff]
      %v3986 = vsel %vm3627, %v3983, 0
      %v3989 = vsel %vm3627, %v3984, 0
      %3991 = vmatpush.msra.mxu0 0.0
      %3992 = vmatpush.msra.mxu0 0.0
      %3993 = vmatpush.msra.mxu0 0.0
      %3994 = vmatpush.msra.mxu0 0.0
      %3995 = vmatpush.msra.mxu0 0.0
      %3996 = vmatpush.msra.mxu0 0.0
      %3997 = vmatpush.msra.mxu0 0.0
      %3998 = vmatpush.msra.mxu0 0.0
      %3999 = vmatpush.msra.mxu0 0.0
      %4000 = vmatpush.msra.mxu0 0.0
      %4001 = vmatpush.msra.mxu0 0.0
      %4002 = vmatpush.msra.mxu0 0.0
      %4003 = vmatpush.msra.mxu0 %v3980
      %4004 = vmatpush.msra.mxu0 %v3977
      %4005 = vmatpush.msra.mxu0 %v3974
      %4006 = vmatpush.msra.mxu0 %v3971
      %4007 = vmatmul.f32.gmra.mxu0 %v3986
      %v4008 = vpop.f32.mrf.mxu0
      %v4009 = vadd.f32 0.0, %v4008
      %4010 = vmatmul.f32.gmra.mxu0 %v3989
      %v4011 = vpop.f32.mrf.mxu0
      %v4012 = vadd.f32 0.0, %v4011
      %4013 = vdwg.mxu0
      %v4014 = vadd.f32 %v3948, %v4009
      %v4015 = vadd.f32 %v3949, %v4012
      %s4016 = scalar_lea.vmem %s9, 112
      %v4017 = vld [vmem:[%s4016] sm:$0xff]
      %v4018 = vld [vmem:[%s4016 + $0x8] sm:$0xff]
      %4019 = vmatpush.msra.mxu0 0.0
      %4020 = vmatpush.msra.mxu0 0.0
      %4021 = vmatpush.msra.mxu0 0.0
      %4022 = vmatpush.msra.mxu0 0.0
      %4023 = vmatpush.msra.mxu0 0.0
      %4024 = vmatpush.msra.mxu0 0.0
      %4025 = vmatpush.msra.mxu0 0.0
      %4026 = vmatpush.msra.mxu0 0.0
      %4027 = vmatpush.msra.mxu0 0.0
      %4028 = vmatpush.msra.mxu0 0.0
      %4029 = vmatpush.msra.mxu0 0.0
      %4030 = vmatpush.msra.mxu0 0.0
      %4031 = vmatpush.msra.mxu0 0.0
      %4032 = vmatpush.msra.mxu0 0.0
      %4033 = vmatpush.msra.mxu0 %v4018
      %4034 = vmatpush.msra.mxu0 %v4017
      %4035 = vmatmul.f32.gmra.mxu0 %v3550
      %v4036 = vpop.f32.mrf.mxu0
      %v4037 = vadd.f32 0.0, %v4036
      %4038 = vmatmul.f32.gmra.mxu0 %v3553
      %v4039 = vpop.f32.mrf.mxu0
      %v4040 = vadd.f32 0.0, %v4039
      %4041 = vmatmul.f32.gmra.mxu0 %v3556
      %v4042 = vpop.f32.mrf.mxu0
      %v4043 = vadd.f32 0.0, %v4042
      %4044 = vmatmul.f32.gmra.mxu0 %v3559
      %v4045 = vpop.f32.mrf.mxu0
      %v4046 = vadd.f32 0.0, %v4045
      %4047 = vdwg.mxu0
      %s4048 = scalar_lea.vmem %s10, 112
      %v4049 = vld [vmem:[%s4048] sm:$0xff]
      %v4050 = vld [vmem:[%s4048 + $0x8] sm:$0xff]
      %v4052 = vsel %vm3627, %v4049, 0
      %v4055 = vsel %vm3627, %v4050, 0
      %4057 = vmatpush.msra.mxu0 0.0
      %4058 = vmatpush.msra.mxu0 0.0
      %4059 = vmatpush.msra.mxu0 0.0
      %4060 = vmatpush.msra.mxu0 0.0
      %4061 = vmatpush.msra.mxu0 0.0
      %4062 = vmatpush.msra.mxu0 0.0
      %4063 = vmatpush.msra.mxu0 0.0
      %4064 = vmatpush.msra.mxu0 0.0
      %4065 = vmatpush.msra.mxu0 0.0
      %4066 = vmatpush.msra.mxu0 0.0
      %4067 = vmatpush.msra.mxu0 0.0
      %4068 = vmatpush.msra.mxu0 0.0
      %4069 = vmatpush.msra.mxu0 %v4046
      %4070 = vmatpush.msra.mxu0 %v4043
      %4071 = vmatpush.msra.mxu0 %v4040
      %4072 = vmatpush.msra.mxu0 %v4037
      %4073 = vmatmul.f32.gmra.mxu0 %v4052
      %v4074 = vpop.f32.mrf.mxu0
      %v4075 = vadd.f32 0.0, %v4074
      %4076 = vmatmul.f32.gmra.mxu0 %v4055
      %v4077 = vpop.f32.mrf.mxu0
      %v4078 = vadd.f32 0.0, %v4077
      %4079 = vdwg.mxu0
      %v4080 = vadd.f32 %v4014, %v4075
      %v4081 = vadd.f32 %v4015, %v4078
      %s4082 = scalar_lea.vmem %s9, 128
      %v4083 = vld [vmem:[%s4082] sm:$0xff]
      %v4084 = vld [vmem:[%s4082 + $0x8] sm:$0xff]
      %4085 = vmatpush.msra.mxu0 0.0
      %4086 = vmatpush.msra.mxu0 0.0
      %4087 = vmatpush.msra.mxu0 0.0
      %4088 = vmatpush.msra.mxu0 0.0
      %4089 = vmatpush.msra.mxu0 0.0
      %4090 = vmatpush.msra.mxu0 0.0
      %4091 = vmatpush.msra.mxu0 0.0
      %4092 = vmatpush.msra.mxu0 0.0
      %4093 = vmatpush.msra.mxu0 0.0
      %4094 = vmatpush.msra.mxu0 0.0
      %4095 = vmatpush.msra.mxu0 0.0
      %4096 = vmatpush.msra.mxu0 0.0
      %4097 = vmatpush.msra.mxu0 0.0
      %4098 = vmatpush.msra.mxu0 0.0
      %4099 = vmatpush.msra.mxu0 %v4084
      %4100 = vmatpush.msra.mxu0 %v4083
      %4101 = vmatmul.f32.gmra.mxu0 %v3550
      %v4102 = vpop.f32.mrf.mxu0
      %v4103 = vadd.f32 0.0, %v4102
      %4104 = vmatmul.f32.gmra.mxu0 %v3553
      %v4105 = vpop.f32.mrf.mxu0
      %v4106 = vadd.f32 0.0, %v4105
      %4107 = vmatmul.f32.gmra.mxu0 %v3556
      %v4108 = vpop.f32.mrf.mxu0
      %v4109 = vadd.f32 0.0, %v4108
      %4110 = vmatmul.f32.gmra.mxu0 %v3559
      %v4111 = vpop.f32.mrf.mxu0
      %v4112 = vadd.f32 0.0, %v4111
      %4113 = vdwg.mxu0
      %s4114 = scalar_lea.vmem %s10, 128
      %v4115 = vld [vmem:[%s4114] sm:$0xff]
      %v4116 = vld [vmem:[%s4114 + $0x8] sm:$0xff]
      %v4118 = vsel %vm3627, %v4115, 0
      %v4121 = vsel %vm3627, %v4116, 0
      %4123 = vmatpush.msra.mxu0 0.0
      %4124 = vmatpush.msra.mxu0 0.0
      %4125 = vmatpush.msra.mxu0 0.0
      %4126 = vmatpush.msra.mxu0 0.0
      %4127 = vmatpush.msra.mxu0 0.0
      %4128 = vmatpush.msra.mxu0 0.0
      %4129 = vmatpush.msra.mxu0 0.0
      %4130 = vmatpush.msra.mxu0 0.0
      %4131 = vmatpush.msra.mxu0 0.0
      %4132 = vmatpush.msra.mxu0 0.0
      %4133 = vmatpush.msra.mxu0 0.0
      %4134 = vmatpush.msra.mxu0 0.0
      %4135 = vmatpush.msra.mxu0 %v4112
      %4136 = vmatpush.msra.mxu0 %v4109
      %4137 = vmatpush.msra.mxu0 %v4106
      %4138 = vmatpush.msra.mxu0 %v4103
      %4139 = vmatmul.f32.gmra.mxu0 %v4118
      %v4140 = vpop.f32.mrf.mxu0
      %v4141 = vadd.f32 0.0, %v4140
      %4142 = vmatmul.f32.gmra.mxu0 %v4121
      %v4143 = vpop.f32.mrf.mxu0
      %v4144 = vadd.f32 0.0, %v4143
      %4145 = vdwg.mxu0
      %v4146 = vadd.f32 %v4080, %v4141
      %v4147 = vadd.f32 %v4081, %v4144
      %s4148 = scalar_lea.vmem %s9, 144
      %v4149 = vld [vmem:[%s4148] sm:$0xff]
      %v4150 = vld [vmem:[%s4148 + $0x8] sm:$0xff]
      %4151 = vmatpush.msra.mxu0 0.0
      %4152 = vmatpush.msra.mxu0 0.0
      %4153 = vmatpush.msra.mxu0 0.0
      %4154 = vmatpush.msra.mxu0 0.0
      %4155 = vmatpush.msra.mxu0 0.0
      %4156 = vmatpush.msra.mxu0 0.0
      %4157 = vmatpush.msra.mxu0 0.0
      %4158 = vmatpush.msra.mxu0 0.0
      %4159 = vmatpush.msra.mxu0 0.0
      %4160 = vmatpush.msra.mxu0 0.0
      %4161 = vmatpush.msra.mxu0 0.0
      %4162 = vmatpush.msra.mxu0 0.0
      %4163 = vmatpush.msra.mxu0 0.0
      %4164 = vmatpush.msra.mxu0 0.0
      %4165 = vmatpush.msra.mxu0 %v4150
      %4166 = vmatpush.msra.mxu0 %v4149
      %4167 = vmatmul.f32.gmra.mxu0 %v3550
      %v4168 = vpop.f32.mrf.mxu0
      %v4169 = vadd.f32 0.0, %v4168
      %4170 = vmatmul.f32.gmra.mxu0 %v3553
      %v4171 = vpop.f32.mrf.mxu0
      %v4172 = vadd.f32 0.0, %v4171
      %4173 = vmatmul.f32.gmra.mxu0 %v3556
      %v4174 = vpop.f32.mrf.mxu0
      %v4175 = vadd.f32 0.0, %v4174
      %4176 = vmatmul.f32.gmra.mxu0 %v3559
      %v4177 = vpop.f32.mrf.mxu0
      %v4178 = vadd.f32 0.0, %v4177
      %4179 = vdwg.mxu0
      %s4180 = scalar_lea.vmem %s10, 144
      %v4181 = vld [vmem:[%s4180] sm:$0xff]
      %v4182 = vld [vmem:[%s4180 + $0x8] sm:$0xff]
      %v4184 = vsel %vm3627, %v4181, 0
      %v4187 = vsel %vm3627, %v4182, 0
      %4189 = vmatpush.msra.mxu0 0.0
      %4190 = vmatpush.msra.mxu0 0.0
      %4191 = vmatpush.msra.mxu0 0.0
      %4192 = vmatpush.msra.mxu0 0.0
      %4193 = vmatpush.msra.mxu0 0.0
      %4194 = vmatpush.msra.mxu0 0.0
      %4195 = vmatpush.msra.mxu0 0.0
      %4196 = vmatpush.msra.mxu0 0.0
      %4197 = vmatpush.msra.mxu0 0.0
      %4198 = vmatpush.msra.mxu0 0.0
      %4199 = vmatpush.msra.mxu0 0.0
      %4200 = vmatpush.msra.mxu0 0.0
      %4201 = vmatpush.msra.mxu0 %v4178
      %4202 = vmatpush.msra.mxu0 %v4175
      %4203 = vmatpush.msra.mxu0 %v4172
      %4204 = vmatpush.msra.mxu0 %v4169
      %4205 = vmatmul.f32.gmra.mxu0 %v4184
      %v4206 = vpop.f32.mrf.mxu0
      %v4207 = vadd.f32 0.0, %v4206
      %4208 = vmatmul.f32.gmra.mxu0 %v4187
      %v4209 = vpop.f32.mrf.mxu0
      %v4210 = vadd.f32 0.0, %v4209
      %4211 = vdwg.mxu0
      %v4212 = vadd.f32 %v4146, %v4207
      %v4213 = vadd.f32 %v4147, %v4210
      %s4214 = scalar_lea.vmem %s9, 160
      %v4215 = vld [vmem:[%s4214] sm:$0xff]
      %v4216 = vld [vmem:[%s4214 + $0x8] sm:$0xff]
      %4217 = vmatpush.msra.mxu0 0.0
      %4218 = vmatpush.msra.mxu0 0.0
      %4219 = vmatpush.msra.mxu0 0.0
      %4220 = vmatpush.msra.mxu0 0.0
      %4221 = vmatpush.msra.mxu0 0.0
      %4222 = vmatpush.msra.mxu0 0.0
      %4223 = vmatpush.msra.mxu0 0.0
      %4224 = vmatpush.msra.mxu0 0.0
      %4225 = vmatpush.msra.mxu0 0.0
      %4226 = vmatpush.msra.mxu0 0.0
      %4227 = vmatpush.msra.mxu0 0.0
      %4228 = vmatpush.msra.mxu0 0.0
      %4229 = vmatpush.msra.mxu0 0.0
      %4230 = vmatpush.msra.mxu0 0.0
      %4231 = vmatpush.msra.mxu0 %v4216
      %4232 = vmatpush.msra.mxu0 %v4215
      %4233 = vmatmul.f32.gmra.mxu0 %v3550
      %v4234 = vpop.f32.mrf.mxu0
      %v4235 = vadd.f32 0.0, %v4234
      %4236 = vmatmul.f32.gmra.mxu0 %v3553
      %v4237 = vpop.f32.mrf.mxu0
      %v4238 = vadd.f32 0.0, %v4237
      %4239 = vmatmul.f32.gmra.mxu0 %v3556
      %v4240 = vpop.f32.mrf.mxu0
      %v4241 = vadd.f32 0.0, %v4240
      %4242 = vmatmul.f32.gmra.mxu0 %v3559
      %v4243 = vpop.f32.mrf.mxu0
      %v4244 = vadd.f32 0.0, %v4243
      %4245 = vdwg.mxu0
      %s4246 = scalar_lea.vmem %s10, 160
      %v4247 = vld [vmem:[%s4246] sm:$0xff]
      %v4248 = vld [vmem:[%s4246 + $0x8] sm:$0xff]
      %v4250 = vsel %vm3627, %v4247, 0
      %v4253 = vsel %vm3627, %v4248, 0
      %4255 = vmatpush.msra.mxu0 0.0
      %4256 = vmatpush.msra.mxu0 0.0
      %4257 = vmatpush.msra.mxu0 0.0
      %4258 = vmatpush.msra.mxu0 0.0
      %4259 = vmatpush.msra.mxu0 0.0
      %4260 = vmatpush.msra.mxu0 0.0
      %4261 = vmatpush.msra.mxu0 0.0
      %4262 = vmatpush.msra.mxu0 0.0
      %4263 = vmatpush.msra.mxu0 0.0
      %4264 = vmatpush.msra.mxu0 0.0
      %4265 = vmatpush.msra.mxu0 0.0
      %4266 = vmatpush.msra.mxu0 0.0
      %4267 = vmatpush.msra.mxu0 %v4244
      %4268 = vmatpush.msra.mxu0 %v4241
      %4269 = vmatpush.msra.mxu0 %v4238
      %4270 = vmatpush.msra.mxu0 %v4235
      %4271 = vmatmul.f32.gmra.mxu0 %v4250
      %v4272 = vpop.f32.mrf.mxu0
      %v4273 = vadd.f32 0.0, %v4272
      %4274 = vmatmul.f32.gmra.mxu0 %v4253
      %v4275 = vpop.f32.mrf.mxu0
      %v4276 = vadd.f32 0.0, %v4275
      %4277 = vdwg.mxu0
      %v4278 = vadd.f32 %v4212, %v4273
      %v4279 = vadd.f32 %v4213, %v4276
      %s4280 = scalar_lea.vmem %s9, 176
      %v4281 = vld [vmem:[%s4280] sm:$0xff]
      %v4282 = vld [vmem:[%s4280 + $0x8] sm:$0xff]
      %4283 = vmatpush.msra.mxu0 0.0
      %4284 = vmatpush.msra.mxu0 0.0
      %4285 = vmatpush.msra.mxu0 0.0
      %4286 = vmatpush.msra.mxu0 0.0
      %4287 = vmatpush.msra.mxu0 0.0
      %4288 = vmatpush.msra.mxu0 0.0
      %4289 = vmatpush.msra.mxu0 0.0
      %4290 = vmatpush.msra.mxu0 0.0
      %4291 = vmatpush.msra.mxu0 0.0
      %4292 = vmatpush.msra.mxu0 0.0
      %4293 = vmatpush.msra.mxu0 0.0
      %4294 = vmatpush.msra.mxu0 0.0
      %4295 = vmatpush.msra.mxu0 0.0
      %4296 = vmatpush.msra.mxu0 0.0
      %4297 = vmatpush.msra.mxu0 %v4282
      %4298 = vmatpush.msra.mxu0 %v4281
      %4299 = vmatmul.f32.gmra.mxu0 %v3550
      %v4300 = vpop.f32.mrf.mxu0
      %v4301 = vadd.f32 0.0, %v4300
      %4302 = vmatmul.f32.gmra.mxu0 %v3553
      %v4303 = vpop.f32.mrf.mxu0
      %v4304 = vadd.f32 0.0, %v4303
      %4305 = vmatmul.f32.gmra.mxu0 %v3556
      %v4306 = vpop.f32.mrf.mxu0
      %v4307 = vadd.f32 0.0, %v4306
      %4308 = vmatmul.f32.gmra.mxu0 %v3559
      %v4309 = vpop.f32.mrf.mxu0
      %v4310 = vadd.f32 0.0, %v4309
      %4311 = vdwg.mxu0
      %s4312 = scalar_lea.vmem %s10, 176
      %v4313 = vld [vmem:[%s4312] sm:$0xff]
      %v4314 = vld [vmem:[%s4312 + $0x8] sm:$0xff]
      %v4316 = vsel %vm3627, %v4313, 0
      %v4319 = vsel %vm3627, %v4314, 0
      %4321 = vmatpush.msra.mxu0 0.0
      %4322 = vmatpush.msra.mxu0 0.0
      %4323 = vmatpush.msra.mxu0 0.0
      %4324 = vmatpush.msra.mxu0 0.0
      %4325 = vmatpush.msra.mxu0 0.0
      %4326 = vmatpush.msra.mxu0 0.0
      %4327 = vmatpush.msra.mxu0 0.0
      %4328 = vmatpush.msra.mxu0 0.0
      %4329 = vmatpush.msra.mxu0 0.0
      %4330 = vmatpush.msra.mxu0 0.0
      %4331 = vmatpush.msra.mxu0 0.0
      %4332 = vmatpush.msra.mxu0 0.0
      %4333 = vmatpush.msra.mxu0 %v4310
      %4334 = vmatpush.msra.mxu0 %v4307
      %4335 = vmatpush.msra.mxu0 %v4304
      %4336 = vmatpush.msra.mxu0 %v4301
      %4337 = vmatmul.f32.gmra.mxu0 %v4316
      %v4338 = vpop.f32.mrf.mxu0
      %v4339 = vadd.f32 0.0, %v4338
      %4340 = vmatmul.f32.gmra.mxu0 %v4319
      %v4341 = vpop.f32.mrf.mxu0
      %v4342 = vadd.f32 0.0, %v4341
      %4343 = vdwg.mxu0
      %v4344 = vadd.f32 %v4278, %v4339
      %v4345 = vadd.f32 %v4279, %v4342
      %s4346 = scalar_lea.vmem %s9, 192
      %v4347 = vld [vmem:[%s4346] sm:$0xff]
      %v4348 = vld [vmem:[%s4346 + $0x8] sm:$0xff]
      %4349 = vmatpush.msra.mxu0 0.0
      %4350 = vmatpush.msra.mxu0 0.0
      %4351 = vmatpush.msra.mxu0 0.0
      %4352 = vmatpush.msra.mxu0 0.0
      %4353 = vmatpush.msra.mxu0 0.0
      %4354 = vmatpush.msra.mxu0 0.0
      %4355 = vmatpush.msra.mxu0 0.0
      %4356 = vmatpush.msra.mxu0 0.0
      %4357 = vmatpush.msra.mxu0 0.0
      %4358 = vmatpush.msra.mxu0 0.0
      %4359 = vmatpush.msra.mxu0 0.0
      %4360 = vmatpush.msra.mxu0 0.0
      %4361 = vmatpush.msra.mxu0 0.0
      %4362 = vmatpush.msra.mxu0 0.0
      %4363 = vmatpush.msra.mxu0 %v4348
      %4364 = vmatpush.msra.mxu0 %v4347
      %4365 = vmatmul.f32.gmra.mxu0 %v3550
      %v4366 = vpop.f32.mrf.mxu0
      %v4367 = vadd.f32 0.0, %v4366
      %4368 = vmatmul.f32.gmra.mxu0 %v3553
      %v4369 = vpop.f32.mrf.mxu0
      %v4370 = vadd.f32 0.0, %v4369
      %4371 = vmatmul.f32.gmra.mxu0 %v3556
      %v4372 = vpop.f32.mrf.mxu0
      %v4373 = vadd.f32 0.0, %v4372
      %4374 = vmatmul.f32.gmra.mxu0 %v3559
      %v4375 = vpop.f32.mrf.mxu0
      %v4376 = vadd.f32 0.0, %v4375
      %4377 = vdwg.mxu0
      %s4378 = scalar_lea.vmem %s10, 192
      %v4379 = vld [vmem:[%s4378] sm:$0xff]
      %v4380 = vld [vmem:[%s4378 + $0x8] sm:$0xff]
      %v4382 = vsel %vm3627, %v4379, 0
      %v4385 = vsel %vm3627, %v4380, 0
      %4387 = vmatpush.msra.mxu0 0.0
      %4388 = vmatpush.msra.mxu0 0.0
      %4389 = vmatpush.msra.mxu0 0.0
      %4390 = vmatpush.msra.mxu0 0.0
      %4391 = vmatpush.msra.mxu0 0.0
      %4392 = vmatpush.msra.mxu0 0.0
      %4393 = vmatpush.msra.mxu0 0.0
      %4394 = vmatpush.msra.mxu0 0.0
      %4395 = vmatpush.msra.mxu0 0.0
      %4396 = vmatpush.msra.mxu0 0.0
      %4397 = vmatpush.msra.mxu0 0.0
      %4398 = vmatpush.msra.mxu0 0.0
      %4399 = vmatpush.msra.mxu0 %v4376
      %4400 = vmatpush.msra.mxu0 %v4373
      %4401 = vmatpush.msra.mxu0 %v4370
      %4402 = vmatpush.msra.mxu0 %v4367
      %4403 = vmatmul.f32.gmra.mxu0 %v4382
      %v4404 = vpop.f32.mrf.mxu0
      %v4405 = vadd.f32 0.0, %v4404
      %4406 = vmatmul.f32.gmra.mxu0 %v4385
      %v4407 = vpop.f32.mrf.mxu0
      %v4408 = vadd.f32 0.0, %v4407
      %4409 = vdwg.mxu0
      %v4410 = vadd.f32 %v4344, %v4405
      %v4411 = vadd.f32 %v4345, %v4408
      %s4412 = scalar_lea.vmem %s9, 208
      %v4413 = vld [vmem:[%s4412] sm:$0xff]
      %v4414 = vld [vmem:[%s4412 + $0x8] sm:$0xff]
      %4415 = vmatpush.msra.mxu0 0.0
      %4416 = vmatpush.msra.mxu0 0.0
      %4417 = vmatpush.msra.mxu0 0.0
      %4418 = vmatpush.msra.mxu0 0.0
      %4419 = vmatpush.msra.mxu0 0.0
      %4420 = vmatpush.msra.mxu0 0.0
      %4421 = vmatpush.msra.mxu0 0.0
      %4422 = vmatpush.msra.mxu0 0.0
      %4423 = vmatpush.msra.mxu0 0.0
      %4424 = vmatpush.msra.mxu0 0.0
      %4425 = vmatpush.msra.mxu0 0.0
      %4426 = vmatpush.msra.mxu0 0.0
      %4427 = vmatpush.msra.mxu0 0.0
      %4428 = vmatpush.msra.mxu0 0.0
      %4429 = vmatpush.msra.mxu0 %v4414
      %4430 = vmatpush.msra.mxu0 %v4413
      %4431 = vmatmul.f32.gmra.mxu0 %v3550
      %v4432 = vpop.f32.mrf.mxu0
      %v4433 = vadd.f32 0.0, %v4432
      %4434 = vmatmul.f32.gmra.mxu0 %v3553
      %v4435 = vpop.f32.mrf.mxu0
      %v4436 = vadd.f32 0.0, %v4435
      %4437 = vmatmul.f32.gmra.mxu0 %v3556
      %v4438 = vpop.f32.mrf.mxu0
      %v4439 = vadd.f32 0.0, %v4438
      %4440 = vmatmul.f32.gmra.mxu0 %v3559
      %v4441 = vpop.f32.mrf.mxu0
      %v4442 = vadd.f32 0.0, %v4441
      %4443 = vdwg.mxu0
      %s4444 = scalar_lea.vmem %s10, 208
      %v4445 = vld [vmem:[%s4444] sm:$0xff]
      %v4446 = vld [vmem:[%s4444 + $0x8] sm:$0xff]
      %v4448 = vsel %vm3627, %v4445, 0
      %v4451 = vsel %vm3627, %v4446, 0
      %4453 = vmatpush.msra.mxu0 0.0
      %4454 = vmatpush.msra.mxu0 0.0
      %4455 = vmatpush.msra.mxu0 0.0
      %4456 = vmatpush.msra.mxu0 0.0
      %4457 = vmatpush.msra.mxu0 0.0
      %4458 = vmatpush.msra.mxu0 0.0
      %4459 = vmatpush.msra.mxu0 0.0
      %4460 = vmatpush.msra.mxu0 0.0
      %4461 = vmatpush.msra.mxu0 0.0
      %4462 = vmatpush.msra.mxu0 0.0
      %4463 = vmatpush.msra.mxu0 0.0
      %4464 = vmatpush.msra.mxu0 0.0
      %4465 = vmatpush.msra.mxu0 %v4442
      %4466 = vmatpush.msra.mxu0 %v4439
      %4467 = vmatpush.msra.mxu0 %v4436
      %4468 = vmatpush.msra.mxu0 %v4433
      %4469 = vmatmul.f32.gmra.mxu0 %v4448
      %v4470 = vpop.f32.mrf.mxu0
      %v4471 = vadd.f32 0.0, %v4470
      %4472 = vmatmul.f32.gmra.mxu0 %v4451
      %v4473 = vpop.f32.mrf.mxu0
      %v4474 = vadd.f32 0.0, %v4473
      %4475 = vdwg.mxu0
      %v4476 = vadd.f32 %v4410, %v4471
      %v4477 = vadd.f32 %v4411, %v4474
      %s4478 = scalar_lea.vmem %s9, 224
      %v4479 = vld [vmem:[%s4478] sm:$0xff]
      %v4480 = vld [vmem:[%s4478 + $0x8] sm:$0xff]
      %4481 = vmatpush.msra.mxu0 0.0
      %4482 = vmatpush.msra.mxu0 0.0
      %4483 = vmatpush.msra.mxu0 0.0
      %4484 = vmatpush.msra.mxu0 0.0
      %4485 = vmatpush.msra.mxu0 0.0
      %4486 = vmatpush.msra.mxu0 0.0
      %4487 = vmatpush.msra.mxu0 0.0
      %4488 = vmatpush.msra.mxu0 0.0
      %4489 = vmatpush.msra.mxu0 0.0
      %4490 = vmatpush.msra.mxu0 0.0
      %4491 = vmatpush.msra.mxu0 0.0
      %4492 = vmatpush.msra.mxu0 0.0
      %4493 = vmatpush.msra.mxu0 0.0
      %4494 = vmatpush.msra.mxu0 0.0
      %4495 = vmatpush.msra.mxu0 %v4480
      %4496 = vmatpush.msra.mxu0 %v4479
      %4497 = vmatmul.f32.gmra.mxu0 %v3550
      %v4498 = vpop.f32.mrf.mxu0
      %v4499 = vadd.f32 0.0, %v4498
      %4500 = vmatmul.f32.gmra.mxu0 %v3553
      %v4501 = vpop.f32.mrf.mxu0
      %v4502 = vadd.f32 0.0, %v4501
      %4503 = vmatmul.f32.gmra.mxu0 %v3556
      %v4504 = vpop.f32.mrf.mxu0
      %v4505 = vadd.f32 0.0, %v4504
      %4506 = vmatmul.f32.gmra.mxu0 %v3559
      %v4507 = vpop.f32.mrf.mxu0
      %v4508 = vadd.f32 0.0, %v4507
      %4509 = vdwg.mxu0
      %s4510 = scalar_lea.vmem %s10, 224
      %v4511 = vld [vmem:[%s4510] sm:$0xff]
      %v4512 = vld [vmem:[%s4510 + $0x8] sm:$0xff]
      %v4514 = vsel %vm3627, %v4511, 0
      %v4517 = vsel %vm3627, %v4512, 0
      %4519 = vmatpush.msra.mxu0 0.0
      %4520 = vmatpush.msra.mxu0 0.0
      %4521 = vmatpush.msra.mxu0 0.0
      %4522 = vmatpush.msra.mxu0 0.0
      %4523 = vmatpush.msra.mxu0 0.0
      %4524 = vmatpush.msra.mxu0 0.0
      %4525 = vmatpush.msra.mxu0 0.0
      %4526 = vmatpush.msra.mxu0 0.0
      %4527 = vmatpush.msra.mxu0 0.0
      %4528 = vmatpush.msra.mxu0 0.0
      %4529 = vmatpush.msra.mxu0 0.0
      %4530 = vmatpush.msra.mxu0 0.0
      %4531 = vmatpush.msra.mxu0 %v4508
      %4532 = vmatpush.msra.mxu0 %v4505
      %4533 = vmatpush.msra.mxu0 %v4502
      %4534 = vmatpush.msra.mxu0 %v4499
      %4535 = vmatmul.f32.gmra.mxu0 %v4514
      %v4536 = vpop.f32.mrf.mxu0
      %v4537 = vadd.f32 0.0, %v4536
      %4538 = vmatmul.f32.gmra.mxu0 %v4517
      %v4539 = vpop.f32.mrf.mxu0
      %v4540 = vadd.f32 0.0, %v4539
      %4541 = vdwg.mxu0
      %v4542 = vadd.f32 %v4476, %v4537
      %v4543 = vadd.f32 %v4477, %v4540
      %s4544 = scalar_lea.vmem %s9, 240
      %v4545 = vld [vmem:[%s4544] sm:$0xff]
      %v4546 = vld [vmem:[%s4544 + $0x8] sm:$0xff]
      %4547 = vmatpush.msra.mxu0 0.0
      %4548 = vmatpush.msra.mxu0 0.0
      %4549 = vmatpush.msra.mxu0 0.0
      %4550 = vmatpush.msra.mxu0 0.0
      %4551 = vmatpush.msra.mxu0 0.0
      %4552 = vmatpush.msra.mxu0 0.0
      %4553 = vmatpush.msra.mxu0 0.0
      %4554 = vmatpush.msra.mxu0 0.0
      %4555 = vmatpush.msra.mxu0 0.0
      %4556 = vmatpush.msra.mxu0 0.0
      %4557 = vmatpush.msra.mxu0 0.0
      %4558 = vmatpush.msra.mxu0 0.0
      %4559 = vmatpush.msra.mxu0 0.0
      %4560 = vmatpush.msra.mxu0 0.0
      %4561 = vmatpush.msra.mxu0 %v4546
      %4562 = vmatpush.msra.mxu0 %v4545
      %4563 = vmatmul.f32.gmra.mxu0 %v3550
      %v4564 = vpop.f32.mrf.mxu0
      %v4565 = vadd.f32 0.0, %v4564
      %4566 = vmatmul.f32.gmra.mxu0 %v3553
      %v4567 = vpop.f32.mrf.mxu0
      %v4568 = vadd.f32 0.0, %v4567
      %4569 = vmatmul.f32.gmra.mxu0 %v3556
      %v4570 = vpop.f32.mrf.mxu0
      %v4571 = vadd.f32 0.0, %v4570
      %4572 = vmatmul.f32.gmra.mxu0 %v3559
      %v4573 = vpop.f32.mrf.mxu0
      %v4574 = vadd.f32 0.0, %v4573
      %4575 = vdwg.mxu0
      %s4576 = scalar_lea.vmem %s10, 240
      %v4577 = vld [vmem:[%s4576] sm:$0xff]
      %v4578 = vld [vmem:[%s4576 + $0x8] sm:$0xff]
      %v4580 = vsel %vm3627, %v4577, 0
      %v4583 = vsel %vm3627, %v4578, 0
      %4585 = vmatpush.msra.mxu0 0.0
      %4586 = vmatpush.msra.mxu0 0.0
      %4587 = vmatpush.msra.mxu0 0.0
      %4588 = vmatpush.msra.mxu0 0.0
      %4589 = vmatpush.msra.mxu0 0.0
      %4590 = vmatpush.msra.mxu0 0.0
      %4591 = vmatpush.msra.mxu0 0.0
      %4592 = vmatpush.msra.mxu0 0.0
      %4593 = vmatpush.msra.mxu0 0.0
      %4594 = vmatpush.msra.mxu0 0.0
      %4595 = vmatpush.msra.mxu0 0.0
      %4596 = vmatpush.msra.mxu0 0.0
      %4597 = vmatpush.msra.mxu0 %v4574
      %4598 = vmatpush.msra.mxu0 %v4571
      %4599 = vmatpush.msra.mxu0 %v4568
      %4600 = vmatpush.msra.mxu0 %v4565
      %4601 = vmatmul.f32.gmra.mxu0 %v4580
      %v4602 = vpop.f32.mrf.mxu0
      %v4603 = vadd.f32 0.0, %v4602
      %4604 = vmatmul.f32.gmra.mxu0 %v4583
      %v4605 = vpop.f32.mrf.mxu0
      %v4606 = vadd.f32 0.0, %v4605
      %4607 = vdwg.mxu0
      %v4608 = vadd.f32 %v4542, %v4603
      %v4609 = vadd.f32 %v4543, %v4606
      %v4610 = vld [vmem:[%s11] sm:$0xff]
      %v4611 = vld [vmem:[%s11 + $0x8] sm:$0xff]
      %v4612 = vadd.f32 %v4608, %v4610
      %v4613 = vadd.f32 %v4609, %v4611
      %vm4614 = vcmask 7168
      %4615 = vst.msk [vmem:[%s413] sm:$0xff] %vm4614, %v4612
      %4616 = vst.msk [vmem:[%s413 + $0x8] sm:$0xff] %vm4614, %v4613
      %p4617 = scmp.lt.s32.totalorder %s23, 1
      %s4618 = scalar_select %p4617, %s23, 1
      %s4619 = smul.addr %s4618, 2
      %s4620 = smul.addr %s4619, 8
      %s4621 = scalar_lea.vmem %s12, %s4620
      // Predicated region
      $region69: #{_lambda_.1} parent=67 // pred_check
        %p4622 = pneg %p298
      $region70: #{_lambda_.1} parent=67 // pred_check_branch
        %4624 = sbr.rel (%p4622) target = $region72
      $region71: #{_lambda_.1} parent=67 // pred_region
        _
      $region72: #{_lambda_.1} parent=67 // pred_fallthru
        _
    $region68: #{_lambda_.1} parent=5 // pred_fallthru
      _
    %p4625 = scmp.le.s32.totalorder 2, %s18
    // Predicated region
    $region73: #{_lambda_.1} parent=5 // pred_check
      %p4626 = pneg %p4625
    $region74: #{_lambda_.1} parent=5 // pred_check_branch
      %4628 = sbr.rel (%p4626) target = $region76
    $region75: #{_lambda_.1} parent=5 // pred_region
      %s4629 = ssub.s32 %s18, 2
      // Predicated region
      $region77: #{_lambda_.1} parent=75 // pred_check
        %p4630 = pneg %p304
      $region78: #{_lambda_.1} parent=75 // pred_check_branch
        %4632 = sbr.rel (%p4630) target = $region80
      $region79: #{_lambda_.1} parent=75 // pred_region
        %p4633 = scmp.lt.s32.totalorder %s24, 1
        %s4634 = scalar_select %p4633, %s24, 1
        %s4635 = smul.addr %s4634, 2
        %s4636 = smul.addr %s4635, 8
        %s4637 = scalar_lea.vmem %s12, %s4636
      $region80: #{_lambda_.1} parent=75 // pred_fallthru
        _
    $region76: #{_lambda_.1} parent=5 // pred_fallthru
      _
  $region6: #{_lambda_.1} parent=0 // loop_footer
    %s22 = sadd.s32 1, %s18
  $region7: #{_lambda_.1} parent=0 // loop_footer_branch
    %17 = sbr.rel target = $region3
  $region8: #{_lambda_.1} parent=0 // loop_exit
    _

</llo_original>
